<compile_context>
chip_gen: v7x
topology: tpu7x:2x2x1
jax: 0.10.0
libtpu: 0.0.40
codegen_flags: <defaults>
</compile_context>

<pallas_src>
import functools
import math

import jax
import jax.numpy as jnp
from jax.experimental import pallas as pl
from jax.experimental.pallas import tpu as pltpu


# -----------------------------------------------------------------------------
# Tile-size helpers
# -----------------------------------------------------------------------------
def _pick_tile(dim, target, align):
    """Largest tile <= target that is a multiple of `align` and divides `dim`.
    Falls back to the full dim (a single full-extent block is always legal)."""
    if dim <= target:
        return dim
    t = (target // align) * align
    while t >= align:
        if dim % t == 0:
            return t
        t -= align
    return dim


def _pick_group(n, target):
    """Largest divisor of n that is <= target (for batching heads per step)."""
    g = min(n, target)
    while n % g:
        g -= 1
    return g


# -----------------------------------------------------------------------------
# Tiled linear kernel (P1 + P3): y = act(x @ w + b), w stored (Din, Dout)
# -----------------------------------------------------------------------------
def _linear_kernel(x_ref, w_ref, b_ref, o_ref, acc_ref, *, activation):
    k = pl.program_id(2)

    @pl.when(k == 0)
    def _():
        acc_ref[...] = jnp.zeros_like(acc_ref)

    acc_ref[...] += jnp.dot(x_ref[...], w_ref[...],
                            preferred_element_type=jnp.float32)

    @pl.when(k == pl.num_programs(2) - 1)
    def _():
        y = acc_ref[...] + b_ref[...].astype(jnp.float32)
        if activation == "relu":
            y = jnp.maximum(y, 0.0)
        o_ref[...] = y.astype(o_ref.dtype)


def linear_pallas(x, w, b, activation=None):
    """x: (N, Din); w: (Din, Dout) pre-transposed; b: (Dout,) -> (N, Dout)."""
    N, Din = x.shape
    Dout = w.shape[1]
    tm = _pick_tile(N, 256, 8)
    tn = _pick_tile(Dout, 256, 128)
    tk = _pick_tile(Din, 512, 128)
    grid = (N // tm, Dout // tn, Din // tk)
    kernel = functools.partial(_linear_kernel, activation=activation)
    return pl.pallas_call(
        kernel,
        out_shape=jax.ShapeDtypeStruct((N, Dout), x.dtype),
        grid=grid,
        in_specs=[
            pl.BlockSpec((tm, tk), lambda i, j, k: (i, k)),
            pl.BlockSpec((tk, tn), lambda i, j, k: (k, j)),
            pl.BlockSpec((1, tn), lambda i, j, k: (0, j)),
        ],
        out_specs=pl.BlockSpec((tm, tn), lambda i, j, k: (i, j)),
        scratch_shapes=[pltpu.VMEM((tm, tn), jnp.float32)],
        compiler_params=pltpu.CompilerParams(
            dimension_semantics=("parallel", "parallel", "arbitrary")),
    )(x, w, b.reshape(1, Dout))


# -----------------------------------------------------------------------------
# Fused FFN kernel: out = relu(x @ w1 + b1) @ w2 + b2  (intermediate in VMEM)
# -----------------------------------------------------------------------------
def _ffn_kernel(x_ref, w1_ref, b1_ref, w2_ref, b2_ref, o_ref, h_ref):
    h = jnp.dot(x_ref[...], w1_ref[...], preferred_element_type=jnp.float32)
    h = h + b1_ref[...].astype(jnp.float32)
    h_ref[...] = jnp.maximum(h, 0.0)
    y = jnp.dot(h_ref[...], w2_ref[...], preferred_element_type=jnp.float32)
    o_ref[...] = (y + b2_ref[...].astype(jnp.float32)).astype(o_ref.dtype)


def ffn_pallas(x, w1, b1, w2, b2):
    """x: (N, Din); w1: (Din, FF); w2: (FF, Dout) -> (N, Dout)."""
    N, Din = x.shape
    FF = w1.shape[1]
    Dout = w2.shape[1]
    tm = _pick_tile(N, 256, 8)
    return pl.pallas_call(
        _ffn_kernel,
        out_shape=jax.ShapeDtypeStruct((N, Dout), x.dtype),
        grid=(N // tm,),
        in_specs=[
            pl.BlockSpec((tm, Din), lambda i: (i, 0)),
            pl.BlockSpec((Din, FF), lambda i: (0, 0)),
            pl.BlockSpec((1, FF), lambda i: (0, 0)),
            pl.BlockSpec((FF, Dout), lambda i: (0, 0)),
            pl.BlockSpec((1, Dout), lambda i: (0, 0)),
        ],
        out_specs=pl.BlockSpec((tm, Dout), lambda i: (i, 0)),
        scratch_shapes=[pltpu.VMEM((tm, FF), jnp.float32)],
        compiler_params=pltpu.CompilerParams(dimension_semantics=("parallel",)),
    )(x, w1, b1.reshape(1, FF), w2, b2.reshape(1, Dout))


# -----------------------------------------------------------------------------
# Fused residual-add + LayerNorm, tiled over rows
# -----------------------------------------------------------------------------
def _add_layernorm_kernel(x_ref, y_ref, g_ref, b_ref, o_ref):
    x = x_ref[...].astype(jnp.float32) + y_ref[...].astype(jnp.float32)
    mu = jnp.mean(x, axis=-1, keepdims=True)
    var = jnp.mean((x - mu) ** 2, axis=-1, keepdims=True)
    y = (x - mu) * jax.lax.rsqrt(var + 1e-5)
    o_ref[...] = (y * g_ref[...] + b_ref[...]).astype(o_ref.dtype)


def add_layernorm_pallas(x_sbd, y_sbd, gamma, beta):
    """LayerNorm(x + y) over the last dim.  x, y: (S, B, D)."""
    S, B, D = x_sbd.shape
    N = S * B
    tm = _pick_tile(N, 512, 8)
    out = pl.pallas_call(
        _add_layernorm_kernel,
        out_shape=jax.ShapeDtypeStruct((N, D), x_sbd.dtype),
        grid=(N // tm,),
        in_specs=[
            pl.BlockSpec((tm, D), lambda i: (i, 0)),
            pl.BlockSpec((tm, D), lambda i: (i, 0)),
            pl.BlockSpec((1, D), lambda i: (0, 0)),
            pl.BlockSpec((1, D), lambda i: (0, 0)),
        ],
        out_specs=pl.BlockSpec((tm, D), lambda i: (i, 0)),
        compiler_params=pltpu.CompilerParams(dimension_semantics=("parallel",)),
    )(x_sbd.reshape(N, D), y_sbd.reshape(N, D),
      gamma.reshape(1, D), beta.reshape(1, D))
    return out.reshape(S, B, D)


# -----------------------------------------------------------------------------
# Flash-style attention with optional causal local-window sparsity
# -----------------------------------------------------------------------------
def _attn_kernel(q_ref, k_ref, v_ref, o_ref, m_ref, l_ref, acc_ref,
                 *, scale, window):
    qi = pl.program_id(1)
    ki = pl.program_id(2)

    @pl.when(ki == 0)
    def _():
        m_ref[...] = jnp.full_like(m_ref, -jnp.inf)
        l_ref[...] = jnp.zeros_like(l_ref)
        acc_ref[...] = jnp.zeros_like(acc_ref)

    tq = q_ref.shape[1]
    tk = k_ref.shape[1]

    def compute():
        q = q_ref[...].astype(jnp.float32) * scale       # (G, tq, Dh)
        k = k_ref[...].astype(jnp.float32)               # (G, tk, Dh)
        v = v_ref[...].astype(jnp.float32)               # (G, tk, Dh)
        s = jnp.einsum("gqd,gkd->gqk", q, k,
                       preferred_element_type=jnp.float32)  # (G, tq, tk)

        if window is not None:
            # causal local-window mask built in-kernel (no dense HBM mask)
            q_pos = qi * tq + jax.lax.broadcasted_iota(jnp.int32, (tq, tk), 0)
            k_pos = ki * tk + jax.lax.broadcasted_iota(jnp.int32, (tq, tk), 1)
            allowed = (k_pos <= q_pos) & ((q_pos - k_pos) < window)
            s = jnp.where(allowed[None, :, :], s, jnp.float32(-1e30))

        m_prev = m_ref[...]
        m_new = jnp.maximum(m_prev, s.max(axis=-1, keepdims=True))
        alpha = jnp.exp(m_prev - m_new)
        p = jnp.exp(s - m_new)
        if window is not None:
            p = jnp.where(allowed[None, :, :], p, 0.0)
        l_ref[...] = alpha * l_ref[...] + p.sum(axis=-1, keepdims=True)
        acc_ref[...] = alpha * acc_ref[...] + jnp.einsum(
            "gqk,gkd->gqd", p, v, preferred_element_type=jnp.float32)
        m_ref[...] = m_new

    if window is None:
        compute()
    else:
        # runtime skip of k-blocks fully outside the causal window
        q_lo, q_hi = qi * tq, qi * tq + tq - 1
        k_lo, k_hi = ki * tk, ki * tk + tk - 1
        has_work = (k_lo <= q_hi) & ((q_lo - k_hi) < window)
        pl.when(has_work)(compute)

    @pl.when(ki == pl.num_programs(2) - 1)
    def _():
        inv_l = pl.reciprocal(l_ref[...], approx=True)
        o_ref[...] = (acc_ref[...] * inv_l).astype(o_ref.dtype)


def attention_pallas(q, k, v, *, scale, window=None):
    """q: (BH, Sq, Dh), k/v: (BH, Sk, Dh) -> (BH, Sq, Dh)."""
    BH, Sq, Dh = q.shape
    Sk = k.shape[1]
    G = _pick_group(BH, max(1, 128 // max(Dh, 1)))   # batch heads per step
    tq = _pick_tile(Sq, 128, 8)
    tk = _pick_tile(Sk, 128, 8)
    grid = (BH // G, Sq // tq, Sk // tk)
    kernel = functools.partial(_attn_kernel, scale=scale, window=window)
    return pl.pallas_call(
        kernel,
        out_shape=jax.ShapeDtypeStruct((BH, Sq, Dh), q.dtype),
        grid=grid,
        in_specs=[
            pl.BlockSpec((G, tq, Dh), lambda g, i, j: (g, i, 0)),
            pl.BlockSpec((G, tk, Dh), lambda g, i, j: (g, j, 0)),
            pl.BlockSpec((G, tk, Dh), lambda g, i, j: (g, j, 0)),
        ],
        out_specs=pl.BlockSpec((G, tq, Dh), lambda g, i, j: (g, i, 0)),
        scratch_shapes=[
            pltpu.VMEM((G, tq, 1), jnp.float32),
            pltpu.VMEM((G, tq, 1), jnp.float32),
            pltpu.VMEM((G, tq, Dh), jnp.float32),
        ],
        compiler_params=pltpu.CompilerParams(
            dimension_semantics=("parallel", "parallel", "arbitrary")),
    )(q, k, v)


# -----------------------------------------------------------------------------
# Module building blocks (glue in plain JAX, hot paths in Pallas)
# -----------------------------------------------------------------------------
def multi_head_attention_self(x, p, num_heads, window=None):
    """Self-attention with fused QKV projection.  x: (S, B, D)."""
    S, B, D = x.shape
    H = num_heads
    Dh = D // H
    qkv = linear_pallas(x.reshape(S * B, D), p["w_qkv"], p["b_qkv"])  # (S*B, 3D)
    qkv = qkv.reshape(S, B, 3, H, Dh).transpose(2, 1, 3, 0, 4)        # (3,B,H,S,Dh)
    q = qkv[0].reshape(B * H, S, Dh)
    k = qkv[1].reshape(B * H, S, Dh)
    v = qkv[2].reshape(B * H, S, Dh)
    o = attention_pallas(q, k, v, scale=1.0 / math.sqrt(Dh), window=window)
    o = o.reshape(B, H, S, Dh).transpose(2, 0, 1, 3).reshape(S * B, D)
    return linear_pallas(o, p["w_out"], p["b_out"]).reshape(S, B, D)


def multi_head_attention_cross(x_q, x_kv, p, num_heads):
    """Cross-attention with fused KV projection.  x_q: (Sq,B,D); x_kv: (Sk,B,D)."""
    Sq, B, D = x_q.shape
    Sk = x_kv.shape[0]
    H = num_heads
    Dh = D // H
    q = linear_pallas(x_q.reshape(Sq * B, D), p["w_q"], p["b_q"])
    kv = linear_pallas(x_kv.reshape(Sk * B, D), p["w_kv"], p["b_kv"])  # (Sk*B, 2D)
    q = q.reshape(Sq, B, H, Dh).transpose(1, 2, 0, 3).reshape(B * H, Sq, Dh)
    kv = kv.reshape(Sk, B, 2, H, Dh).transpose(2, 1, 3, 0, 4)          # (2,B,H,Sk,Dh)
    k = kv[0].reshape(B * H, Sk, Dh)
    v = kv[1].reshape(B * H, Sk, Dh)
    o = attention_pallas(q, k, v, scale=1.0 / math.sqrt(Dh))
    o = o.reshape(B, H, Sq, Dh).transpose(2, 0, 1, 3).reshape(Sq * B, D)
    return linear_pallas(o, p["w_out"], p["b_out"]).reshape(Sq, B, D)


def encoder_layer(x, p, num_heads):
    # Post-norm TransformerEncoderLayer (relu activation), dropout = identity.
    a = multi_head_attention_self(x, p["self_attn"], num_heads)
    x = add_layernorm_pallas(x, a, p["ln1_g"], p["ln1_b"])
    S, B, D = x.shape
    h = ffn_pallas(x.reshape(S * B, D), p["w1"], p["b1"], p["w2"], p["b2"])
    x = add_layernorm_pallas(x, h.reshape(S, B, D), p["ln2_g"], p["ln2_b"])
    return x


def sparse_decoder_layer(x, mem, p, num_heads, window):
    a = multi_head_attention_self(x, p["self_attn"], num_heads, window=window)
    x = add_layernorm_pallas(x, a, p["ln1_g"], p["ln1_b"])
    a = multi_head_attention_cross(x, mem, p["cross_attn"], num_heads)
    x = add_layernorm_pallas(x, a, p["ln2_g"], p["ln2_b"])
    S, B, D = x.shape
    h = ffn_pallas(x.reshape(S * B, D), p["w1"], p["b1"], p["w2"], p["b2"])
    x = add_layernorm_pallas(x, h.reshape(S, B, D), p["ln3_g"], p["ln3_b"])
    return x


def sparse_transformer_forward(params, src_ids, tgt_ids, num_heads, window=4):
    emb = params["embedding"]                    # (vocab, D)
    src = jnp.take(emb, src_ids, axis=0)         # (S, B, D)  (XLA gather)
    tgt = jnp.take(emb, tgt_ids, axis=0)         # (T, B, D)

    for p in params["encoder_layers"]:
        src = encoder_layer(src, p, num_heads)

    for p in params["decoder_layers"]:
        tgt = sparse_decoder_layer(tgt, src, p, num_heads, window)

    S, B, D = tgt.shape
    # output_projection + relu + output_embedding fused in one kernel; dropout = identity
    out = ffn_pallas(tgt.reshape(S * B, D),
                     params["out_proj_w"], params["out_proj_b"],
                     params["out_emb_w"], params["out_emb_b"])
    return out.reshape(S, B, params["out_emb_w"].shape[1])


# -----------------------------------------------------------------------------
# Deterministic parameter init (weights stored pre-transposed / pre-fused)
# -----------------------------------------------------------------------------
def _init_self_mha(key, d):
    k1, k2 = jax.random.split(key)
    return dict(
        w_qkv=0.05 * jax.random.normal(k1, (d, 3 * d), jnp.float32),
        b_qkv=jnp.zeros((3 * d,), jnp.float32),
        w_out=0.05 * jax.random.normal(k2, (d, d), jnp.float32),
        b_out=jnp.zeros((d,), jnp.float32),
    )


def _init_cross_mha(key, d):
    k1, k2, k3 = jax.random.split(key, 3)
    return dict(
        w_q=0.05 * jax.random.normal(k1, (d, d), jnp.float32),
        b_q=jnp.zeros((d,), jnp.float32),
        w_kv=0.05 * jax.random.normal(k2, (d, 2 * d), jnp.float32),
        b_kv=jnp.zeros((2 * d,), jnp.float32),
        w_out=0.05 * jax.random.normal(k3, (d, d), jnp.float32),
        b_out=jnp.zeros((d,), jnp.float32),
    )


def _init_encoder_layer(key, d, ff):
    k1, k2, k3 = jax.random.split(key, 3)
    return dict(
        self_attn=_init_self_mha(k1, d),
        w1=0.05 * jax.random.normal(k2, (d, ff), jnp.float32),
        b1=jnp.zeros((ff,), jnp.float32),
        w2=0.05 * jax.random.normal(k3, (ff, d), jnp.float32),
        b2=jnp.zeros((d,), jnp.float32),
        ln1_g=jnp.ones((d,), jnp.float32), ln1_b=jnp.zeros((d,), jnp.float32),
        ln2_g=jnp.ones((d,), jnp.float32), ln2_b=jnp.zeros((d,), jnp.float32),
    )


def _init_decoder_layer(key, d, ff):
    k1, k2, k3, k4 = jax.random.split(key, 4)
    return dict(
        self_attn=_init_self_mha(k1, d),
        cross_attn=_init_cross_mha(k2, d),
        w1=0.05 * jax.random.normal(k3, (d, ff), jnp.float32),
        b1=jnp.zeros((ff,), jnp.float32),
        w2=0.05 * jax.random.normal(k4, (ff, d), jnp.float32),
        b2=jnp.zeros((d,), jnp.float32),
        ln1_g=jnp.ones((d,), jnp.float32), ln1_b=jnp.zeros((d,), jnp.float32),
        ln2_g=jnp.ones((d,), jnp.float32), ln2_b=jnp.zeros((d,), jnp.float32),
        ln3_g=jnp.ones((d,), jnp.float32), ln3_b=jnp.zeros((d,), jnp.float32),
    )


def init_params(key, vocab_size, emb_dim, hidden_dim, output_dim, num_layers, ff_dim):
    assert emb_dim == hidden_dim == output_dim, \
        "forward only type-checks when embedding_dim == hidden_dim == output_dim"
    keys = jax.random.split(key, 2 * num_layers + 3)
    return dict(
        embedding=0.1 * jax.random.normal(keys[0], (vocab_size, emb_dim), jnp.float32),
        encoder_layers=[_init_encoder_layer(keys[1 + i], hidden_dim, ff_dim)
                        for i in range(num_layers)],
        decoder_layers=[_init_decoder_layer(keys[1 + num_layers + i], hidden_dim, ff_dim)
                        for i in range(num_layers)],
        # nn.Linear(output_dim, hidden_dim), stored as (Din=output_dim, Dout=hidden_dim)
        out_proj_w=0.05 * jax.random.normal(keys[-2], (output_dim, hidden_dim), jnp.float32),
        out_proj_b=jnp.zeros((hidden_dim,), jnp.float32),
        # nn.Linear(hidden_dim, output_dim), stored as (Din=hidden_dim, Dout=output_dim)
        out_emb_w=0.05 * jax.random.normal(keys[-1], (hidden_dim, output_dim), jnp.float32),
        out_emb_b=jnp.zeros((output_dim,), jnp.float32),
    )


# -----------------------------------------------------------------------------
# Demo
# -----------------------------------------------------------------------------
if __name__ == "__main__":
    vocab_size = 50
    embedding_dim = 32       # reference hardcodes 300; small here (must equal hidden_dim)
    hidden_dim = 32
    output_dim = 32
    num_layers = 2
    num_heads = 4
    feedforward_dim = 64
    seq_len = 8
    batch = 2

    root = jax.random.PRNGKey(0)
    kp, ks, kt = jax.random.split(root, 3)
    params = init_params(kp, vocab_size, embedding_dim, hidden_dim,
                         output_dim, num_layers, feedforward_dim)

    # token ids, layout (seq, batch) to match batch_first=False convention
    src_ids = jax.random.randint(ks, (seq_len, batch), 0, vocab_size)
    tgt_ids = jax.random.randint(kt, (seq_len, batch), 0, vocab_size)

    fwd = jax.jit(functools.partial(sparse_transformer_forward, num_heads=num_heads))
    out = fwd(params, src_ids, tgt_ids)
    out = jax.block_until_ready(out)
    assert out.shape == (seq_len, batch, output_dim)
    assert bool(jnp.all(jnp.isfinite(out)))
    print("KERNEL_OK")
</pallas_src>

<mosaic_0001>
module attributes {stable_mosaic.version = 11 : i64} {
  func.func @_linear_kernel(%arg0: i32, %arg1: i32, %arg2: i32, %arg3: memref<16x32xf32, #tpu.memory_space<vmem>>, %arg4: memref<32x96xf32, #tpu.memory_space<vmem>>, %arg5: memref<1x96xf32, #tpu.memory_space<vmem>>, %arg6: memref<16x96xf32, #tpu.memory_space<vmem>>, %arg7: memref<16x96xf32, #tpu.memory_space<vmem>>) attributes {dimension_semantics = [#tpu.dimension_semantics<parallel>, #tpu.dimension_semantics<parallel>, #tpu.dimension_semantics<arbitrary>], iteration_bounds = array<i64: 1, 1, 1>, scalar_prefetch = 0 : i64, scratch_operands = 1 : i64, tpu.core_type = #tpu.core_type<tc>, window_params = [{transform_indices = @transform_0, window_bounds = array<i64: 16, 32>}, {transform_indices = @transform_1, window_bounds = array<i64: 32, 96>}, {transform_indices = @transform_2, window_bounds = array<i64: 1, 96>}, {transform_indices = @transform_3, window_bounds = array<i64: 16, 96>}]} {
    %c0_i32 = arith.constant 0 : i32
    %0 = arith.cmpi eq, %arg2, %c0_i32 : i32
    %1 = arith.extui %0 : i1 to i32
    %c0_i32_0 = arith.constant 0 : i32
    %2 = arith.cmpi ne, %1, %c0_i32_0 : i32
    scf.if %2 {
      %cst_10 = arith.constant 0.000000e+00 : f32
      %12 = vector.broadcast %cst_10 : f32 to vector<16x96xf32>
      %c0_11 = arith.constant 0 : index
      %c0_12 = arith.constant 0 : index
      %13 = vector.load %arg7[%c0_11, %c0_12] : memref<16x96xf32, #tpu.memory_space<vmem>>, vector<16x96xf32>
      tpu.vector_store %arg7[%c0_11, %c0_12], %12 {strides = array<i32>} : memref<16x96xf32, #tpu.memory_space<vmem>>, vector<16x96xf32>,
    } else {
    }
    %c0 = arith.constant 0 : index
    %c0_1 = arith.constant 0 : index
    %3 = vector.load %arg7[%c0, %c0_1] : memref<16x96xf32, #tpu.memory_space<vmem>>, vector<16x96xf32>
    %c0_2 = arith.constant 0 : index
    %c0_3 = arith.constant 0 : index
    %4 = vector.load %arg3[%c0_2, %c0_3] : memref<16x32xf32, #tpu.memory_space<vmem>>, vector<16x32xf32>
    %c0_4 = arith.constant 0 : index
    %c0_5 = arith.constant 0 : index
    %5 = vector.load %arg4[%c0_4, %c0_5] : memref<32x96xf32, #tpu.memory_space<vmem>>, vector<32x96xf32>
    %cst = arith.constant dense<0.000000e+00> : vector<16x96xf32>
    %6 = tpu.matmul %4, %5, %cst {dimension_numbers = #tpu.dot_dimension_numbers<[1], [0], [0], [1], [0, 0, 1, 1], [], []>} : vector<16x32xf32>, vector<32x96xf32>, vector<16x96xf32> -> vector<16x96xf32>
    %7 = arith.addf %3, %6 : vector<16x96xf32>
    %c0_6 = arith.constant 0 : index
    %c0_7 = arith.constant 0 : index
    %8 = vector.load %arg7[%c0_6, %c0_7] : memref<16x96xf32, #tpu.memory_space<vmem>>, vector<16x96xf32>
    tpu.vector_store %arg7[%c0_6, %c0_7], %7 {strides = array<i32>} : memref<16x96xf32, #tpu.memory_space<vmem>>, vector<16x96xf32>,
    %c0_i32_8 = arith.constant 0 : i32
    %9 = arith.cmpi eq, %arg2, %c0_i32_8 : i32
    %10 = arith.extui %9 : i1 to i32
    %c0_i32_9 = arith.constant 0 : i32
    %11 = arith.cmpi ne, %10, %c0_i32_9 : i32
    scf.if %11 {
      %c0_10 = arith.constant 0 : index
      %c0_11 = arith.constant 0 : index
      %12 = vector.load %arg7[%c0_10, %c0_11] : memref<16x96xf32, #tpu.memory_space<vmem>>, vector<16x96xf32>
      %c0_12 = arith.constant 0 : index
      %c0_13 = arith.constant 0 : index
      %13 = vector.load %arg5[%c0_12, %c0_13] : memref<1x96xf32, #tpu.memory_space<vmem>>, vector<1x96xf32>
      %14 = vector.broadcast %13 : vector<1x96xf32> to vector<16x96xf32>
      %15 = arith.addf %12, %14 : vector<16x96xf32>
      %c0_14 = arith.constant 0 : index
      %c0_15 = arith.constant 0 : index
      %16 = vector.load %arg6[%c0_14, %c0_15] : memref<16x96xf32, #tpu.memory_space<vmem>>, vector<16x96xf32>
      tpu.vector_store %arg6[%c0_14, %c0_15], %15 {strides = array<i32>} : memref<16x96xf32, #tpu.memory_space<vmem>>, vector<16x96xf32>,
    } else {
    }
    return
  }
  func.func @transform_0(%arg0: i32, %arg1: i32, %arg2: i32) -> (i32, i32) {
    %c0_i32 = arith.constant 0 : i32
    return %arg0, %arg2 : i32, i32
  }
  func.func @transform_1(%arg0: i32, %arg1: i32, %arg2: i32) -> (i32, i32) {
    %c0_i32 = arith.constant 0 : i32
    return %arg2, %arg1 : i32, i32
  }
  func.func @transform_2(%arg0: i32, %arg1: i32, %arg2: i32) -> (i32, i32) {
    %c0_i32 = arith.constant 0 : i32
    %c0_i32_0 = arith.constant 0 : i32
    return %c0_i32, %arg1 : i32, i32
  }
  func.func @transform_3(%arg0: i32, %arg1: i32, %arg2: i32) -> (i32, i32) {
    %c0_i32 = arith.constant 0 : i32
    return %arg0, %arg1 : i32, i32
  }
}

module attributes {stable_mosaic.version = 11 : i64} {
  func.func @_attn_kernel(%arg0: i32, %arg1: i32, %arg2: i32, %arg3: memref<8x8x8xf32, #tpu.memory_space<vmem>>, %arg4: memref<8x8x8xf32, #tpu.memory_space<vmem>>, %arg5: memref<8x8x8xf32, #tpu.memory_space<vmem>>, %arg6: memref<8x8x8xf32, #tpu.memory_space<vmem>>, %arg7: memref<8x8x1xf32, #tpu.memory_space<vmem>>, %arg8: memref<8x8x1xf32, #tpu.memory_space<vmem>>, %arg9: memref<8x8x8xf32, #tpu.memory_space<vmem>>) attributes {dimension_semantics = [#tpu.dimension_semantics<parallel>, #tpu.dimension_semantics<parallel>, #tpu.dimension_semantics<arbitrary>], iteration_bounds = array<i64: 1, 1, 1>, scalar_prefetch = 0 : i64, scratch_operands = 3 : i64, tpu.core_type = #tpu.core_type<tc>, window_params = [{transform_indices = @transform_0, window_bounds = array<i64: 8, 8, 8>}, {transform_indices = @transform_1, window_bounds = array<i64: 8, 8, 8>}, {transform_indices = @transform_2, window_bounds = array<i64: 8, 8, 8>}, {transform_indices = @transform_3, window_bounds = array<i64: 8, 8, 8>}]} {
    %c0_i32 = arith.constant 0 : i32
    %0 = arith.cmpi eq, %arg2, %c0_i32 : i32
    %1 = arith.extui %0 : i1 to i32
    %c0_i32_0 = arith.constant 0 : i32
    %2 = arith.cmpi ne, %1, %c0_i32_0 : i32
    scf.if %2 {
      %cst = arith.constant 0xFF800000 : f32
      %20 = vector.broadcast %cst : f32 to vector<8x8x1xf32>
      %c0 = arith.constant 0 : index
      %c0_10 = arith.constant 0 : index
      %c0_11 = arith.constant 0 : index
      %21 = vector.load %arg7[%c0, %c0_10, %c0_11] : memref<8x8x1xf32, #tpu.memory_space<vmem>>, vector<8x8x1xf32>
      tpu.vector_store %arg7[%c0, %c0_10, %c0_11], %20 {strides = array<i32>} : memref<8x8x1xf32, #tpu.memory_space<vmem>>, vector<8x8x1xf32>,
      %cst_12 = arith.constant 0.000000e+00 : f32
      %22 = vector.broadcast %cst_12 : f32 to vector<8x8x1xf32>
      %c0_13 = arith.constant 0 : index
      %c0_14 = arith.constant 0 : index
      %c0_15 = arith.constant 0 : index
      %23 = vector.load %arg8[%c0_13, %c0_14, %c0_15] : memref<8x8x1xf32, #tpu.memory_space<vmem>>, vector<8x8x1xf32>
      tpu.vector_store %arg8[%c0_13, %c0_14, %c0_15], %22 {strides = array<i32>} : memref<8x8x1xf32, #tpu.memory_space<vmem>>, vector<8x8x1xf32>,
      %cst_16 = arith.constant 0.000000e+00 : f32
      %24 = vector.broadcast %cst_16 : f32 to vector<8x8x8xf32>
      %c0_17 = arith.constant 0 : index
      %c0_18 = arith.constant 0 : index
      %c0_19 = arith.constant 0 : index
      %25 = vector.load %arg9[%c0_17, %c0_18, %c0_19] : memref<8x8x8xf32, #tpu.memory_space<vmem>>, vector<8x8x8xf32>
      tpu.vector_store %arg9[%c0_17, %c0_18, %c0_19], %24 {strides = array<i32>} : memref<8x8x8xf32, #tpu.memory_space<vmem>>, vector<8x8x8xf32>,
    } else {
    }
    %c8_i32 = arith.constant 8 : i32
    %3 = arith.muli %arg1, %c8_i32 : i32
    %c8_i32_1 = arith.constant 8 : i32
    %4 = arith.muli %arg1, %c8_i32_1 : i32
    %c8_i32_2 = arith.constant 8 : i32
    %5 = arith.addi %4, %c8_i32_2 : i32
    %c1_i32 = arith.constant 1 : i32
    %6 = arith.subi %5, %c1_i32 : i32
    %c8_i32_3 = arith.constant 8 : i32
    %7 = arith.muli %arg2, %c8_i32_3 : i32
    %c8_i32_4 = arith.constant 8 : i32
    %8 = arith.muli %arg2, %c8_i32_4 : i32
    %c8_i32_5 = arith.constant 8 : i32
    %9 = arith.addi %8, %c8_i32_5 : i32
    %c1_i32_6 = arith.constant 1 : i32
    %10 = arith.subi %9, %c1_i32_6 : i32
    %11 = arith.cmpi sle, %7, %6 : i32
    %12 = arith.subi %3, %10 : i32
    %c4_i32 = arith.constant 4 : i32
    %13 = arith.cmpi slt, %12, %c4_i32 : i32
    %14 = arith.andi %11, %13 : i1
    %15 = arith.extui %14 : i1 to i32
    %c0_i32_7 = arith.constant 0 : i32
    %16 = arith.cmpi ne, %15, %c0_i32_7 : i32
    scf.if %16 {
      %c0 = arith.constant 0 : index
      %c0_10 = arith.constant 0 : index
      %c0_11 = arith.constant 0 : index
      %20 = vector.load %arg3[%c0, %c0_10, %c0_11] : memref<8x8x8xf32, #tpu.memory_space<vmem>>, vector<8x8x8xf32>
      %cst = arith.constant 0.353553385 : f32
      %21 = vector.broadcast %cst : f32 to vector<8x8x8xf32>
      %22 = arith.mulf %20, %21 : vector<8x8x8xf32>
      %c0_12 = arith.constant 0 : index
      %c0_13 = arith.constant 0 : index
      %c0_14 = arith.constant 0 : index
      %23 = vector.load %arg4[%c0_12, %c0_13, %c0_14] : memref<8x8x8xf32, #tpu.memory_space<vmem>>, vector<8x8x8xf32>
      %c0_15 = arith.constant 0 : index
      %c0_16 = arith.constant 0 : index
      %c0_17 = arith.constant 0 : index
      %24 = vector.load %arg5[%c0_15, %c0_16, %c0_17] : memref<8x8x8xf32, #tpu.memory_space<vmem>>, vector<8x8x8xf32>
      "tpu.trace_start"() <{level = 10 : i32, message = "gqd,gkd->gqk"}> : () -> ()
      %cst_18 = arith.constant dense<0.000000e+00> : vector<8x8x8xf32>
      %25 = tpu.matmul %22, %23, %cst_18 {dimension_numbers = #tpu.dot_dimension_numbers<[2], [2], [1], [1], [0, 0, 0, 1, 1, 1], [0], [0]>} : vector<8x8x8xf32>, vector<8x8x8xf32>, vector<8x8x8xf32> -> vector<8x8x8xf32>
      "tpu.trace_stop"() : () -> ()
      %c8_i32_19 = arith.constant 8 : i32
      %26 = arith.muli %arg1, %c8_i32_19 : i32
      %27 = tpu.iota {dimensions = array<i32: 0>} : vector<8x8xi32>
      %28 = vector.broadcast %26 : i32 to vector<8x8xi32>
      %29 = arith.addi %28, %27 : vector<8x8xi32>
      %c8_i32_20 = arith.constant 8 : i32
      %30 = arith.muli %arg2, %c8_i32_20 : i32
      %31 = tpu.iota {dimensions = array<i32: 1>} : vector<8x8xi32>
      %32 = vector.broadcast %30 : i32 to vector<8x8xi32>
      %33 = arith.addi %32, %31 : vector<8x8xi32>
      %34 = arith.cmpi sle, %33, %29 : vector<8x8xi32>
      %35 = arith.subi %29, %33 : vector<8x8xi32>
      %c4_i32_21 = arith.constant 4 : i32
      %36 = vector.broadcast %c4_i32_21 : i32 to vector<8x8xi32>
      %37 = arith.cmpi slt, %35, %36 : vector<8x8xi32>
      %38 = arith.andi %34, %37 : vector<8x8xi1>
      %39 = vector.shape_cast %38 : vector<8x8xi1> to vector<1x8x8xi1>
      %cst_22 = arith.constant -1.000000e+30 : f32
      %40 = vector.shape_cast %39 : vector<1x8x8xi1> to vector<1x8x8xi1>
      %41 = vector.broadcast %40 : vector<1x8x8xi1> to vector<8x8x8xi1>
      %42 = vector.broadcast %cst_22 : f32 to vector<8x8x8xf32>
      %43 = arith.select %41, %25, %42 : vector<8x8x8xi1>, vector<8x8x8xf32>
      %c0_23 = arith.constant 0 : index
      %c0_24 = arith.constant 0 : index
      %c0_25 = arith.constant 0 : index
      %44 = vector.load %arg7[%c0_23, %c0_24, %c0_25] : memref<8x8x1xf32, #tpu.memory_space<vmem>>, vector<8x8x1xf32>
      %cst_26 = arith.constant dense<0xFF800000> : vector<8x8xf32>
      %45 = vector.multi_reduction <maximumf>, %43, %cst_26 [2] : vector<8x8x8xf32> to vector<8x8xf32>
      %46 = vector.shape_cast %45 : vector<8x8xf32> to vector<8x8x1xf32>
      %47 = arith.maximumf %44, %46 : vector<8x8x1xf32>
      %48 = arith.subf %44, %47 : vector<8x8x1xf32>
      %49 = math.exp %48 : vector<8x8x1xf32>
      %50 = vector.broadcast %47 : vector<8x8x1xf32> to vector<8x8x8xf32>
      %51 = arith.subf %43, %50 : vector<8x8x8xf32>
      %52 = math.exp %51 : vector<8x8x8xf32>
      %53 = vector.shape_cast %38 : vector<8x8xi1> to vector<1x8x8xi1>
      %cst_27 = arith.constant 0.000000e+00 : f32
      %54 = vector.shape_cast %53 : vector<1x8x8xi1> to vector<1x8x8xi1>
      %55 = vector.broadcast %54 : vector<1x8x8xi1> to vector<8x8x8xi1>
      %56 = vector.broadcast %cst_27 : f32 to vector<8x8x8xf32>
      %57 = arith.select %55, %52, %56 : vector<8x8x8xi1>, vector<8x8x8xf32>
      %c0_28 = arith.constant 0 : index
      %c0_29 = arith.constant 0 : index
      %c0_30 = arith.constant 0 : index
      %58 = vector.load %arg8[%c0_28, %c0_29, %c0_30] : memref<8x8x1xf32, #tpu.memory_space<vmem>>, vector<8x8x1xf32>
      %59 = arith.mulf %49, %58 : vector<8x8x1xf32>
      %cst_31 = arith.constant dense<0.000000e+00> : vector<8x8xf32>
      %60 = vector.multi_reduction <add>, %57, %cst_31 [2] : vector<8x8x8xf32> to vector<8x8xf32>
      %61 = vector.shape_cast %60 : vector<8x8xf32> to vector<8x8x1xf32>
      %62 = arith.addf %59, %61 : vector<8x8x1xf32>
      %c0_32 = arith.constant 0 : index
      %c0_33 = arith.constant 0 : index
      %c0_34 = arith.constant 0 : index
      %63 = vector.load %arg8[%c0_32, %c0_33, %c0_34] : memref<8x8x1xf32, #tpu.memory_space<vmem>>, vector<8x8x1xf32>
      tpu.vector_store %arg8[%c0_32, %c0_33, %c0_34], %62 {strides = array<i32>} : memref<8x8x1xf32, #tpu.memory_space<vmem>>, vector<8x8x1xf32>,
      %c0_35 = arith.constant 0 : index
      %c0_36 = arith.constant 0 : index
      %c0_37 = arith.constant 0 : index
      %64 = vector.load %arg9[%c0_35, %c0_36, %c0_37] : memref<8x8x8xf32, #tpu.memory_space<vmem>>, vector<8x8x8xf32>
      %65 = vector.broadcast %49 : vector<8x8x1xf32> to vector<8x8x8xf32>
      %66 = arith.mulf %65, %64 : vector<8x8x8xf32>
      "tpu.trace_start"() <{level = 10 : i32, message = "gqk,gkd->gqd"}> : () -> ()
      %cst_38 = arith.constant dense<0.000000e+00> : vector<8x8x8xf32>
      %67 = tpu.matmul %57, %24, %cst_38 {dimension_numbers = #tpu.dot_dimension_numbers<[2], [1], [1], [2], [0, 0, 0, 1, 1, 2], [0], [0]>} : vector<8x8x8xf32>, vector<8x8x8xf32>, vector<8x8x8xf32> -> vector<8x8x8xf32>
      "tpu.trace_stop"() : () -> ()
      %68 = arith.addf %66, %67 : vector<8x8x8xf32>
      %c0_39 = arith.constant 0 : index
      %c0_40 = arith.constant 0 : index
      %c0_41 = arith.constant 0 : index
      %69 = vector.load %arg9[%c0_39, %c0_40, %c0_41] : memref<8x8x8xf32, #tpu.memory_space<vmem>>, vector<8x8x8xf32>
      tpu.vector_store %arg9[%c0_39, %c0_40, %c0_41], %68 {strides = array<i32>} : memref<8x8x8xf32, #tpu.memory_space<vmem>>, vector<8x8x8xf32>,
      %c0_42 = arith.constant 0 : index
      %c0_43 = arith.constant 0 : index
      %c0_44 = arith.constant 0 : index
      %70 = vector.load %arg7[%c0_42, %c0_43, %c0_44] : memref<8x8x1xf32, #tpu.memory_space<vmem>>, vector<8x8x1xf32>
      tpu.vector_store %arg7[%c0_42, %c0_43, %c0_44], %47 {strides = array<i32>} : memref<8x8x1xf32, #tpu.memory_space<vmem>>, vector<8x8x1xf32>,
    } else {
    }
    %c0_i32_8 = arith.constant 0 : i32
    %17 = arith.cmpi eq, %arg2, %c0_i32_8 : i32
    %18 = arith.extui %17 : i1 to i32
    %c0_i32_9 = arith.constant 0 : i32
    %19 = arith.cmpi ne, %18, %c0_i32_9 : i32
    scf.if %19 {
      %c0 = arith.constant 0 : index
      %c0_10 = arith.constant 0 : index
      %c0_11 = arith.constant 0 : index
      %20 = vector.load %arg8[%c0, %c0_10, %c0_11] : memref<8x8x1xf32, #tpu.memory_space<vmem>>, vector<8x8x1xf32>
      %21 = tpu.reciprocal %20 {approx = true} : vector<8x8x1xf32> -> vector<8x8x1xf32>
      %c0_12 = arith.constant 0 : index
      %c0_13 = arith.constant 0 : index
      %c0_14 = arith.constant 0 : index
      %22 = vector.load %arg9[%c0_12, %c0_13, %c0_14] : memref<8x8x8xf32, #tpu.memory_space<vmem>>, vector<8x8x8xf32>
      %23 = vector.broadcast %21 : vector<8x8x1xf32> to vector<8x8x8xf32>
      %24 = arith.mulf %22, %23 : vector<8x8x8xf32>
      %c0_15 = arith.constant 0 : index
      %c0_16 = arith.constant 0 : index
      %c0_17 = arith.constant 0 : index
      %25 = vector.load %arg6[%c0_15, %c0_16, %c0_17] : memref<8x8x8xf32, #tpu.memory_space<vmem>>, vector<8x8x8xf32>
      tpu.vector_store %arg6[%c0_15, %c0_16, %c0_17], %24 {strides = array<i32>} : memref<8x8x8xf32, #tpu.memory_space<vmem>>, vector<8x8x8xf32>,
    } else {
    }
    return
  }
  func.func @transform_0(%arg0: i32, %arg1: i32, %arg2: i32) -> (i32, i32, i32) {
    %c0_i32 = arith.constant 0 : i32
    %c0_i32_0 = arith.constant 0 : i32
    return %arg0, %arg1, %c0_i32 : i32, i32, i32
  }
  func.func @transform_1(%arg0: i32, %arg1: i32, %arg2: i32) -> (i32, i32, i32) {
    %c0_i32 = arith.constant 0 : i32
    %c0_i32_0 = arith.constant 0 : i32
    return %arg0, %arg2, %c0_i32 : i32, i32, i32
  }
  func.func @transform_2(%arg0: i32, %arg1: i32, %arg2: i32) -> (i32, i32, i32) {
    %c0_i32 = arith.constant 0 : i32
    %c0_i32_0 = arith.constant 0 : i32
    return %arg0, %arg2, %c0_i32 : i32, i32, i32
  }
  func.func @transform_3(%arg0: i32, %arg1: i32, %arg2: i32) -> (i32, i32, i32) {
    %c0_i32 = arith.constant 0 : i32
    %c0_i32_0 = arith.constant 0 : i32
    return %arg0, %arg1, %c0_i32 : i32, i32, i32
  }
}

module attributes {stable_mosaic.version = 11 : i64} {
  func.func @_add_layernorm_kernel(%arg0: i32, %arg1: memref<16x32xf32, #tpu.memory_space<vmem>>, %arg2: memref<16x32xf32, #tpu.memory_space<vmem>>, %arg3: memref<1x32xf32, #tpu.memory_space<vmem>>, %arg4: memref<1x32xf32, #tpu.memory_space<vmem>>, %arg5: memref<16x32xf32, #tpu.memory_space<vmem>>) attributes {dimension_semantics = [#tpu.dimension_semantics<parallel>], iteration_bounds = array<i64: 1>, scalar_prefetch = 0 : i64, scratch_operands = 0 : i64, tpu.core_type = #tpu.core_type<tc>, window_params = [{transform_indices = @transform_0, window_bounds = array<i64: 16, 32>}, {transform_indices = @transform_1, window_bounds = array<i64: 16, 32>}, {pipeline_mode = #tpu.pipeline_mode<synchronous>, transform_indices = @transform_2, window_bounds = array<i64: 1, 32>}, {pipeline_mode = #tpu.pipeline_mode<synchronous>, transform_indices = @transform_3, window_bounds = array<i64: 1, 32>}, {transform_indices = @transform_4, window_bounds = array<i64: 16, 32>}]} {
    %c0 = arith.constant 0 : index
    %c0_0 = arith.constant 0 : index
    %0 = vector.load %arg1[%c0, %c0_0] : memref<16x32xf32, #tpu.memory_space<vmem>>, vector<16x32xf32>
    %c0_1 = arith.constant 0 : index
    %c0_2 = arith.constant 0 : index
    %1 = vector.load %arg2[%c0_1, %c0_2] : memref<16x32xf32, #tpu.memory_space<vmem>>, vector<16x32xf32>
    %2 = arith.addf %0, %1 : vector<16x32xf32>
    %cst = arith.constant dense<0.000000e+00> : vector<16xf32>
    %3 = vector.multi_reduction <add>, %2, %cst [1] : vector<16x32xf32> to vector<16xf32>
    %4 = vector.shape_cast %3 : vector<16xf32> to vector<16x1xf32>
    %cst_3 = arith.constant 3.200000e+01 : f32
    %5 = vector.broadcast %cst_3 : f32 to vector<16x1xf32>
    %6 = arith.divf %4, %5 : vector<16x1xf32>
    %7 = vector.broadcast %6 : vector<16x1xf32> to vector<16x32xf32>
    %8 = arith.subf %2, %7 : vector<16x32xf32>
    %9 = arith.mulf %8, %8 : vector<16x32xf32>
    %cst_4 = arith.constant dense<0.000000e+00> : vector<16xf32>
    %10 = vector.multi_reduction <add>, %9, %cst_4 [1] : vector<16x32xf32> to vector<16xf32>
    %11 = vector.shape_cast %10 : vector<16xf32> to vector<16x1xf32>
    %cst_5 = arith.constant 3.200000e+01 : f32
    %12 = vector.broadcast %cst_5 : f32 to vector<16x1xf32>
    %13 = arith.divf %11, %12 : vector<16x1xf32>
    %14 = vector.broadcast %6 : vector<16x1xf32> to vector<16x32xf32>
    %15 = arith.subf %2, %14 : vector<16x32xf32>
    %cst_6 = arith.constant 9.99999974E-6 : f32
    %16 = vector.broadcast %cst_6 : f32 to vector<16x1xf32>
    %17 = arith.addf %13, %16 : vector<16x1xf32>
    %18 = math.rsqrt %17 : vector<16x1xf32>
    %19 = vector.broadcast %18 : vector<16x1xf32> to vector<16x32xf32>
    %20 = arith.mulf %15, %19 : vector<16x32xf32>
    %c0_7 = arith.constant 0 : index
    %c0_8 = arith.constant 0 : index
    %21 = vector.load %arg3[%c0_7, %c0_8] : memref<1x32xf32, #tpu.memory_space<vmem>>, vector<1x32xf32>
    %22 = vector.broadcast %21 : vector<1x32xf32> to vector<16x32xf32>
    %23 = arith.mulf %20, %22 : vector<16x32xf32>
    %c0_9 = arith.constant 0 : index
    %c0_10 = arith.constant 0 : index
    %24 = vector.load %arg4[%c0_9, %c0_10] : memref<1x32xf32, #tpu.memory_space<vmem>>, vector<1x32xf32>
    %25 = vector.broadcast %24 : vector<1x32xf32> to vector<16x32xf32>
    %26 = arith.addf %23, %25 : vector<16x32xf32>
    %c0_11 = arith.constant 0 : index
    %c0_12 = arith.constant 0 : index
    %27 = vector.load %arg5[%c0_11, %c0_12] : memref<16x32xf32, #tpu.memory_space<vmem>>, vector<16x32xf32>
    tpu.vector_store %arg5[%c0_11, %c0_12], %26 {strides = array<i32>} : memref<16x32xf32, #tpu.memory_space<vmem>>, vector<16x32xf32>,
    return
  }
  func.func @transform_0(%arg0: i32) -> (i32, i32) {
    %c0_i32 = arith.constant 0 : i32
    %c0_i32_0 = arith.constant 0 : i32
    return %arg0, %c0_i32 : i32, i32
  }
  func.func @transform_1(%arg0: i32) -> (i32, i32) {
    %c0_i32 = arith.constant 0 : i32
    %c0_i32_0 = arith.constant 0 : i32
    return %arg0, %c0_i32 : i32, i32
  }
  func.func @transform_2(%arg0: i32) -> (i32, i32) {
    %c0_i32 = arith.constant 0 : i32
    %c0_i32_0 = arith.constant 0 : i32
    %c0_i32_1 = arith.constant 0 : i32
    return %c0_i32, %c0_i32_0 : i32, i32
  }
  func.func @transform_3(%arg0: i32) -> (i32, i32) {
    %c0_i32 = arith.constant 0 : i32
    %c0_i32_0 = arith.constant 0 : i32
    %c0_i32_1 = arith.constant 0 : i32
    return %c0_i32, %c0_i32_0 : i32, i32
  }
  func.func @transform_4(%arg0: i32) -> (i32, i32) {
    %c0_i32 = arith.constant 0 : i32
    %c0_i32_0 = arith.constant 0 : i32
    return %arg0, %c0_i32 : i32, i32
  }
}

module attributes {stable_mosaic.version = 11 : i64} {
  func.func @_linear_kernel(%arg0: i32, %arg1: i32, %arg2: i32, %arg3: memref<16x32xf32, #tpu.memory_space<vmem>>, %arg4: memref<32x32xf32, #tpu.memory_space<vmem>>, %arg5: memref<1x32xf32, #tpu.memory_space<vmem>>, %arg6: memref<16x32xf32, #tpu.memory_space<vmem>>, %arg7: memref<16x32xf32, #tpu.memory_space<vmem>>) attributes {dimension_semantics = [#tpu.dimension_semantics<parallel>, #tpu.dimension_semantics<parallel>, #tpu.dimension_semantics<arbitrary>], iteration_bounds = array<i64: 1, 1, 1>, scalar_prefetch = 0 : i64, scratch_operands = 1 : i64, tpu.core_type = #tpu.core_type<tc>, window_params = [{transform_indices = @transform_0, window_bounds = array<i64: 16, 32>}, {transform_indices = @transform_1, window_bounds = array<i64: 32, 32>}, {transform_indices = @transform_2, window_bounds = array<i64: 1, 32>}, {transform_indices = @transform_3, window_bounds = array<i64: 16, 32>}]} {
    %c0_i32 = arith.constant 0 : i32
    %0 = arith.cmpi eq, %arg2, %c0_i32 : i32
    %1 = arith.extui %0 : i1 to i32
    %c0_i32_0 = arith.constant 0 : i32
    %2 = arith.cmpi ne, %1, %c0_i32_0 : i32
    scf.if %2 {
      %cst_10 = arith.constant 0.000000e+00 : f32
      %12 = vector.broadcast %cst_10 : f32 to vector<16x32xf32>
      %c0_11 = arith.constant 0 : index
      %c0_12 = arith.constant 0 : index
      %13 = vector.load %arg7[%c0_11, %c0_12] : memref<16x32xf32, #tpu.memory_space<vmem>>, vector<16x32xf32>
      tpu.vector_store %arg7[%c0_11, %c0_12], %12 {strides = array<i32>} : memref<16x32xf32, #tpu.memory_space<vmem>>, vector<16x32xf32>,
    } else {
    }
    %c0 = arith.constant 0 : index
    %c0_1 = arith.constant 0 : index
    %3 = vector.load %arg7[%c0, %c0_1] : memref<16x32xf32, #tpu.memory_space<vmem>>, vector<16x32xf32>
    %c0_2 = arith.constant 0 : index
    %c0_3 = arith.constant 0 : index
    %4 = vector.load %arg3[%c0_2, %c0_3] : memref<16x32xf32, #tpu.memory_space<vmem>>, vector<16x32xf32>
    %c0_4 = arith.constant 0 : index
    %c0_5 = arith.constant 0 : index
    %5 = vector.load %arg4[%c0_4, %c0_5] : memref<32x32xf32, #tpu.memory_space<vmem>>, vector<32x32xf32>
    %cst = arith.constant dense<0.000000e+00> : vector<16x32xf32>
    %6 = tpu.matmul %4, %5, %cst {dimension_numbers = #tpu.dot_dimension_numbers<[1], [0], [0], [1], [0, 0, 1, 1], [], []>} : vector<16x32xf32>, vector<32x32xf32>, vector<16x32xf32> -> vector<16x32xf32>
    %7 = arith.addf %3, %6 : vector<16x32xf32>
    %c0_6 = arith.constant 0 : index
    %c0_7 = arith.constant 0 : index
    %8 = vector.load %arg7[%c0_6, %c0_7] : memref<16x32xf32, #tpu.memory_space<vmem>>, vector<16x32xf32>
    tpu.vector_store %arg7[%c0_6, %c0_7], %7 {strides = array<i32>} : memref<16x32xf32, #tpu.memory_space<vmem>>, vector<16x32xf32>,
    %c0_i32_8 = arith.constant 0 : i32
    %9 = arith.cmpi eq, %arg2, %c0_i32_8 : i32
    %10 = arith.extui %9 : i1 to i32
    %c0_i32_9 = arith.constant 0 : i32
    %11 = arith.cmpi ne, %10, %c0_i32_9 : i32
    scf.if %11 {
      %c0_10 = arith.constant 0 : index
      %c0_11 = arith.constant 0 : index
      %12 = vector.load %arg7[%c0_10, %c0_11] : memref<16x32xf32, #tpu.memory_space<vmem>>, vector<16x32xf32>
      %c0_12 = arith.constant 0 : index
      %c0_13 = arith.constant 0 : index
      %13 = vector.load %arg5[%c0_12, %c0_13] : memref<1x32xf32, #tpu.memory_space<vmem>>, vector<1x32xf32>
      %14 = vector.broadcast %13 : vector<1x32xf32> to vector<16x32xf32>
      %15 = arith.addf %12, %14 : vector<16x32xf32>
      %c0_14 = arith.constant 0 : index
      %c0_15 = arith.constant 0 : index
      %16 = vector.load %arg6[%c0_14, %c0_15] : memref<16x32xf32, #tpu.memory_space<vmem>>, vector<16x32xf32>
      tpu.vector_store %arg6[%c0_14, %c0_15], %15 {strides = array<i32>} : memref<16x32xf32, #tpu.memory_space<vmem>>, vector<16x32xf32>,
    } else {
    }
    return
  }
  func.func @transform_0(%arg0: i32, %arg1: i32, %arg2: i32) -> (i32, i32) {
    %c0_i32 = arith.constant 0 : i32
    return %arg0, %arg2 : i32, i32
  }
  func.func @transform_1(%arg0: i32, %arg1: i32, %arg2: i32) -> (i32, i32) {
    %c0_i32 = arith.constant 0 : i32
    return %arg2, %arg1 : i32, i32
  }
  func.func @transform_2(%arg0: i32, %arg1: i32, %arg2: i32) -> (i32, i32) {
    %c0_i32 = arith.constant 0 : i32
    %c0_i32_0 = arith.constant 0 : i32
    return %c0_i32, %arg1 : i32, i32
  }
  func.func @transform_3(%arg0: i32, %arg1: i32, %arg2: i32) -> (i32, i32) {
    %c0_i32 = arith.constant 0 : i32
    return %arg0, %arg1 : i32, i32
  }
}

module attributes {stable_mosaic.version = 11 : i64} {
  func.func @_attn_kernel(%arg0: i32, %arg1: i32, %arg2: i32, %arg3: memref<8x8x8xf32, #tpu.memory_space<vmem>>, %arg4: memref<8x8x8xf32, #tpu.memory_space<vmem>>, %arg5: memref<8x8x8xf32, #tpu.memory_space<vmem>>, %arg6: memref<8x8x8xf32, #tpu.memory_space<vmem>>, %arg7: memref<8x8x1xf32, #tpu.memory_space<vmem>>, %arg8: memref<8x8x1xf32, #tpu.memory_space<vmem>>, %arg9: memref<8x8x8xf32, #tpu.memory_space<vmem>>) attributes {dimension_semantics = [#tpu.dimension_semantics<parallel>, #tpu.dimension_semantics<parallel>, #tpu.dimension_semantics<arbitrary>], iteration_bounds = array<i64: 1, 1, 1>, scalar_prefetch = 0 : i64, scratch_operands = 3 : i64, tpu.core_type = #tpu.core_type<tc>, window_params = [{transform_indices = @transform_0, window_bounds = array<i64: 8, 8, 8>}, {transform_indices = @transform_1, window_bounds = array<i64: 8, 8, 8>}, {transform_indices = @transform_2, window_bounds = array<i64: 8, 8, 8>}, {transform_indices = @transform_3, window_bounds = array<i64: 8, 8, 8>}]} {
    %c0_i32 = arith.constant 0 : i32
    %0 = arith.cmpi eq, %arg2, %c0_i32 : i32
    %1 = arith.extui %0 : i1 to i32
    %c0_i32_0 = arith.constant 0 : i32
    %2 = arith.cmpi ne, %1, %c0_i32_0 : i32
    scf.if %2 {
      %cst_33 = arith.constant 0xFF800000 : f32
      %34 = vector.broadcast %cst_33 : f32 to vector<8x8x1xf32>
      %c0_34 = arith.constant 0 : index
      %c0_35 = arith.constant 0 : index
      %c0_36 = arith.constant 0 : index
      %35 = vector.load %arg7[%c0_34, %c0_35, %c0_36] : memref<8x8x1xf32, #tpu.memory_space<vmem>>, vector<8x8x1xf32>
      tpu.vector_store %arg7[%c0_34, %c0_35, %c0_36], %34 {strides = array<i32>} : memref<8x8x1xf32, #tpu.memory_space<vmem>>, vector<8x8x1xf32>,
      %cst_37 = arith.constant 0.000000e+00 : f32
      %36 = vector.broadcast %cst_37 : f32 to vector<8x8x1xf32>
      %c0_38 = arith.constant 0 : index
      %c0_39 = arith.constant 0 : index
      %c0_40 = arith.constant 0 : index
      %37 = vector.load %arg8[%c0_38, %c0_39, %c0_40] : memref<8x8x1xf32, #tpu.memory_space<vmem>>, vector<8x8x1xf32>
      tpu.vector_store %arg8[%c0_38, %c0_39, %c0_40], %36 {strides = array<i32>} : memref<8x8x1xf32, #tpu.memory_space<vmem>>, vector<8x8x1xf32>,
      %cst_41 = arith.constant 0.000000e+00 : f32
      %38 = vector.broadcast %cst_41 : f32 to vector<8x8x8xf32>
      %c0_42 = arith.constant 0 : index
      %c0_43 = arith.constant 0 : index
      %c0_44 = arith.constant 0 : index
      %39 = vector.load %arg9[%c0_42, %c0_43, %c0_44] : memref<8x8x8xf32, #tpu.memory_space<vmem>>, vector<8x8x8xf32>
      tpu.vector_store %arg9[%c0_42, %c0_43, %c0_44], %38 {strides = array<i32>} : memref<8x8x8xf32, #tpu.memory_space<vmem>>, vector<8x8x8xf32>,
    } else {
    }
    %c0 = arith.constant 0 : index
    %c0_1 = arith.constant 0 : index
    %c0_2 = arith.constant 0 : index
    %3 = vector.load %arg3[%c0, %c0_1, %c0_2] : memref<8x8x8xf32, #tpu.memory_space<vmem>>, vector<8x8x8xf32>
    %cst = arith.constant 0.353553385 : f32
    %4 = vector.broadcast %cst : f32 to vector<8x8x8xf32>
    %5 = arith.mulf %3, %4 : vector<8x8x8xf32>
    %c0_3 = arith.constant 0 : index
    %c0_4 = arith.constant 0 : index
    %c0_5 = arith.constant 0 : index
    %6 = vector.load %arg4[%c0_3, %c0_4, %c0_5] : memref<8x8x8xf32, #tpu.memory_space<vmem>>, vector<8x8x8xf32>
    %c0_6 = arith.constant 0 : index
    %c0_7 = arith.constant 0 : index
    %c0_8 = arith.constant 0 : index
    %7 = vector.load %arg5[%c0_6, %c0_7, %c0_8] : memref<8x8x8xf32, #tpu.memory_space<vmem>>, vector<8x8x8xf32>
    "tpu.trace_start"() <{level = 10 : i32, message = "gqd,gkd->gqk"}> : () -> ()
    %cst_9 = arith.constant dense<0.000000e+00> : vector<8x8x8xf32>
    %8 = tpu.matmul %5, %6, %cst_9 {dimension_numbers = #tpu.dot_dimension_numbers<[2], [2], [1], [1], [0, 0, 0, 1, 1, 1], [0], [0]>} : vector<8x8x8xf32>, vector<8x8x8xf32>, vector<8x8x8xf32> -> vector<8x8x8xf32>
    "tpu.trace_stop"() : () -> ()
    %c0_10 = arith.constant 0 : index
    %c0_11 = arith.constant 0 : index
    %c0_12 = arith.constant 0 : index
    %9 = vector.load %arg7[%c0_10, %c0_11, %c0_12] : memref<8x8x1xf32, #tpu.memory_space<vmem>>, vector<8x8x1xf32>
    %cst_13 = arith.constant dense<0xFF800000> : vector<8x8xf32>
    %10 = vector.multi_reduction <maximumf>, %8, %cst_13 [2] : vector<8x8x8xf32> to vector<8x8xf32>
    %11 = vector.shape_cast %10 : vector<8x8xf32> to vector<8x8x1xf32>
    %12 = arith.maximumf %9, %11 : vector<8x8x1xf32>
    %13 = arith.subf %9, %12 : vector<8x8x1xf32>
    %14 = math.exp %13 : vector<8x8x1xf32>
    %15 = vector.broadcast %12 : vector<8x8x1xf32> to vector<8x8x8xf32>
    %16 = arith.subf %8, %15 : vector<8x8x8xf32>
    %17 = math.exp %16 : vector<8x8x8xf32>
    %c0_14 = arith.constant 0 : index
    %c0_15 = arith.constant 0 : index
    %c0_16 = arith.constant 0 : index
    %18 = vector.load %arg8[%c0_14, %c0_15, %c0_16] : memref<8x8x1xf32, #tpu.memory_space<vmem>>, vector<8x8x1xf32>
    %19 = arith.mulf %14, %18 : vector<8x8x1xf32>
    %cst_17 = arith.constant dense<0.000000e+00> : vector<8x8xf32>
    %20 = vector.multi_reduction <add>, %17, %cst_17 [2] : vector<8x8x8xf32> to vector<8x8xf32>
    %21 = vector.shape_cast %20 : vector<8x8xf32> to vector<8x8x1xf32>
    %22 = arith.addf %19, %21 : vector<8x8x1xf32>
    %c0_18 = arith.constant 0 : index
    %c0_19 = arith.constant 0 : index
    %c0_20 = arith.constant 0 : index
    %23 = vector.load %arg8[%c0_18, %c0_19, %c0_20] : memref<8x8x1xf32, #tpu.memory_space<vmem>>, vector<8x8x1xf32>
    tpu.vector_store %arg8[%c0_18, %c0_19, %c0_20], %22 {strides = array<i32>} : memref<8x8x1xf32, #tpu.memory_space<vmem>>, vector<8x8x1xf32>,
    %c0_21 = arith.constant 0 : index
    %c0_22 = arith.constant 0 : index
    %c0_23 = arith.constant 0 : index
    %24 = vector.load %arg9[%c0_21, %c0_22, %c0_23] : memref<8x8x8xf32, #tpu.memory_space<vmem>>, vector<8x8x8xf32>
    %25 = vector.broadcast %14 : vector<8x8x1xf32> to vector<8x8x8xf32>
    %26 = arith.mulf %25, %24 : vector<8x8x8xf32>
    "tpu.trace_start"() <{level = 10 : i32, message = "gqk,gkd->gqd"}> : () -> ()
    %cst_24 = arith.constant dense<0.000000e+00> : vector<8x8x8xf32>
    %27 = tpu.matmul %17, %7, %cst_24 {dimension_numbers = #tpu.dot_dimension_numbers<[2], [1], [1], [2], [0, 0, 0, 1, 1, 2], [0], [0]>} : vector<8x8x8xf32>, vector<8x8x8xf32>, vector<8x8x8xf32> -> vector<8x8x8xf32>
    "tpu.trace_stop"() : () -> ()
    %28 = arith.addf %26, %27 : vector<8x8x8xf32>
    %c0_25 = arith.constant 0 : index
    %c0_26 = arith.constant 0 : index
    %c0_27 = arith.constant 0 : index
    %29 = vector.load %arg9[%c0_25, %c0_26, %c0_27] : memref<8x8x8xf32, #tpu.memory_space<vmem>>, vector<8x8x8xf32>
    tpu.vector_store %arg9[%c0_25, %c0_26, %c0_27], %28 {strides = array<i32>} : memref<8x8x8xf32, #tpu.memory_space<vmem>>, vector<8x8x8xf32>,
    %c0_28 = arith.constant 0 : index
    %c0_29 = arith.constant 0 : index
    %c0_30 = arith.constant 0 : index
    %30 = vector.load %arg7[%c0_28, %c0_29, %c0_30] : memref<8x8x1xf32, #tpu.memory_space<vmem>>, vector<8x8x1xf32>
    tpu.vector_store %arg7[%c0_28, %c0_29, %c0_30], %12 {strides = array<i32>} : memref<8x8x1xf32, #tpu.memory_space<vmem>>, vector<8x8x1xf32>,
    %c0_i32_31 = arith.constant 0 : i32
    %31 = arith.cmpi eq, %arg2, %c0_i32_31 : i32
    %32 = arith.extui %31 : i1 to i32
    %c0_i32_32 = arith.constant 0 : i32
    %33 = arith.cmpi ne, %32, %c0_i32_32 : i32
    scf.if %33 {
      %c0_33 = arith.constant 0 : index
      %c0_34 = arith.constant 0 : index
      %c0_35 = arith.constant 0 : index
      %34 = vector.load %arg8[%c0_33, %c0_34, %c0_35] : memref<8x8x1xf32, #tpu.memory_space<vmem>>, vector<8x8x1xf32>
      %35 = tpu.reciprocal %34 {approx = true} : vector<8x8x1xf32> -> vector<8x8x1xf32>
      %c0_36 = arith.constant 0 : index
      %c0_37 = arith.constant 0 : index
      %c0_38 = arith.constant 0 : index
      %36 = vector.load %arg9[%c0_36, %c0_37, %c0_38] : memref<8x8x8xf32, #tpu.memory_space<vmem>>, vector<8x8x8xf32>
      %37 = vector.broadcast %35 : vector<8x8x1xf32> to vector<8x8x8xf32>
      %38 = arith.mulf %36, %37 : vector<8x8x8xf32>
      %c0_39 = arith.constant 0 : index
      %c0_40 = arith.constant 0 : index
      %c0_41 = arith.constant 0 : index
      %39 = vector.load %arg6[%c0_39, %c0_40, %c0_41] : memref<8x8x8xf32, #tpu.memory_space<vmem>>, vector<8x8x8xf32>
      tpu.vector_store %arg6[%c0_39, %c0_40, %c0_41], %38 {strides = array<i32>} : memref<8x8x8xf32, #tpu.memory_space<vmem>>, vector<8x8x8xf32>,
    } else {
    }
    return
  }
  func.func @transform_0(%arg0: i32, %arg1: i32, %arg2: i32) -> (i32, i32, i32) {
    %c0_i32 = arith.constant 0 : i32
    %c0_i32_0 = arith.constant 0 : i32
    return %arg0, %arg1, %c0_i32 : i32, i32, i32
  }
  func.func @transform_1(%arg0: i32, %arg1: i32, %arg2: i32) -> (i32, i32, i32) {
    %c0_i32 = arith.constant 0 : i32
    %c0_i32_0 = arith.constant 0 : i32
    return %arg0, %arg2, %c0_i32 : i32, i32, i32
  }
  func.func @transform_2(%arg0: i32, %arg1: i32, %arg2: i32) -> (i32, i32, i32) {
    %c0_i32 = arith.constant 0 : i32
    %c0_i32_0 = arith.constant 0 : i32
    return %arg0, %arg2, %c0_i32 : i32, i32, i32
  }
  func.func @transform_3(%arg0: i32, %arg1: i32, %arg2: i32) -> (i32, i32, i32) {
    %c0_i32 = arith.constant 0 : i32
    %c0_i32_0 = arith.constant 0 : i32
    return %arg0, %arg1, %c0_i32 : i32, i32, i32
  }
}

module attributes {stable_mosaic.version = 11 : i64} {
  func.func @_linear_kernel(%arg0: i32, %arg1: i32, %arg2: i32, %arg3: memref<16x32xf32, #tpu.memory_space<vmem>>, %arg4: memref<32x64xf32, #tpu.memory_space<vmem>>, %arg5: memref<1x64xf32, #tpu.memory_space<vmem>>, %arg6: memref<16x64xf32, #tpu.memory_space<vmem>>, %arg7: memref<16x64xf32, #tpu.memory_space<vmem>>) attributes {dimension_semantics = [#tpu.dimension_semantics<parallel>, #tpu.dimension_semantics<parallel>, #tpu.dimension_semantics<arbitrary>], iteration_bounds = array<i64: 1, 1, 1>, scalar_prefetch = 0 : i64, scratch_operands = 1 : i64, tpu.core_type = #tpu.core_type<tc>, window_params = [{transform_indices = @transform_0, window_bounds = array<i64: 16, 32>}, {transform_indices = @transform_1, window_bounds = array<i64: 32, 64>}, {transform_indices = @transform_2, window_bounds = array<i64: 1, 64>}, {transform_indices = @transform_3, window_bounds = array<i64: 16, 64>}]} {
    %c0_i32 = arith.constant 0 : i32
    %0 = arith.cmpi eq, %arg2, %c0_i32 : i32
    %1 = arith.extui %0 : i1 to i32
    %c0_i32_0 = arith.constant 0 : i32
    %2 = arith.cmpi ne, %1, %c0_i32_0 : i32
    scf.if %2 {
      %cst_10 = arith.constant 0.000000e+00 : f32
      %12 = vector.broadcast %cst_10 : f32 to vector<16x64xf32>
      %c0_11 = arith.constant 0 : index
      %c0_12 = arith.constant 0 : index
      %13 = vector.load %arg7[%c0_11, %c0_12] : memref<16x64xf32, #tpu.memory_space<vmem>>, vector<16x64xf32>
      tpu.vector_store %arg7[%c0_11, %c0_12], %12 {strides = array<i32>} : memref<16x64xf32, #tpu.memory_space<vmem>>, vector<16x64xf32>,
    } else {
    }
    %c0 = arith.constant 0 : index
    %c0_1 = arith.constant 0 : index
    %3 = vector.load %arg7[%c0, %c0_1] : memref<16x64xf32, #tpu.memory_space<vmem>>, vector<16x64xf32>
    %c0_2 = arith.constant 0 : index
    %c0_3 = arith.constant 0 : index
    %4 = vector.load %arg3[%c0_2, %c0_3] : memref<16x32xf32, #tpu.memory_space<vmem>>, vector<16x32xf32>
    %c0_4 = arith.constant 0 : index
    %c0_5 = arith.constant 0 : index
    %5 = vector.load %arg4[%c0_4, %c0_5] : memref<32x64xf32, #tpu.memory_space<vmem>>, vector<32x64xf32>
    %cst = arith.constant dense<0.000000e+00> : vector<16x64xf32>
    %6 = tpu.matmul %4, %5, %cst {dimension_numbers = #tpu.dot_dimension_numbers<[1], [0], [0], [1], [0, 0, 1, 1], [], []>} : vector<16x32xf32>, vector<32x64xf32>, vector<16x64xf32> -> vector<16x64xf32>
    %7 = arith.addf %3, %6 : vector<16x64xf32>
    %c0_6 = arith.constant 0 : index
    %c0_7 = arith.constant 0 : index
    %8 = vector.load %arg7[%c0_6, %c0_7] : memref<16x64xf32, #tpu.memory_space<vmem>>, vector<16x64xf32>
    tpu.vector_store %arg7[%c0_6, %c0_7], %7 {strides = array<i32>} : memref<16x64xf32, #tpu.memory_space<vmem>>, vector<16x64xf32>,
    %c0_i32_8 = arith.constant 0 : i32
    %9 = arith.cmpi eq, %arg2, %c0_i32_8 : i32
    %10 = arith.extui %9 : i1 to i32
    %c0_i32_9 = arith.constant 0 : i32
    %11 = arith.cmpi ne, %10, %c0_i32_9 : i32
    scf.if %11 {
      %c0_10 = arith.constant 0 : index
      %c0_11 = arith.constant 0 : index
      %12 = vector.load %arg7[%c0_10, %c0_11] : memref<16x64xf32, #tpu.memory_space<vmem>>, vector<16x64xf32>
      %c0_12 = arith.constant 0 : index
      %c0_13 = arith.constant 0 : index
      %13 = vector.load %arg5[%c0_12, %c0_13] : memref<1x64xf32, #tpu.memory_space<vmem>>, vector<1x64xf32>
      %14 = vector.broadcast %13 : vector<1x64xf32> to vector<16x64xf32>
      %15 = arith.addf %12, %14 : vector<16x64xf32>
      %c0_14 = arith.constant 0 : index
      %c0_15 = arith.constant 0 : index
      %16 = vector.load %arg6[%c0_14, %c0_15] : memref<16x64xf32, #tpu.memory_space<vmem>>, vector<16x64xf32>
      tpu.vector_store %arg6[%c0_14, %c0_15], %15 {strides = array<i32>} : memref<16x64xf32, #tpu.memory_space<vmem>>, vector<16x64xf32>,
    } else {
    }
    return
  }
  func.func @transform_0(%arg0: i32, %arg1: i32, %arg2: i32) -> (i32, i32) {
    %c0_i32 = arith.constant 0 : i32
    return %arg0, %arg2 : i32, i32
  }
  func.func @transform_1(%arg0: i32, %arg1: i32, %arg2: i32) -> (i32, i32) {
    %c0_i32 = arith.constant 0 : i32
    return %arg2, %arg1 : i32, i32
  }
  func.func @transform_2(%arg0: i32, %arg1: i32, %arg2: i32) -> (i32, i32) {
    %c0_i32 = arith.constant 0 : i32
    %c0_i32_0 = arith.constant 0 : i32
    return %c0_i32, %arg1 : i32, i32
  }
  func.func @transform_3(%arg0: i32, %arg1: i32, %arg2: i32) -> (i32, i32) {
    %c0_i32 = arith.constant 0 : i32
    return %arg0, %arg1 : i32, i32
  }
}

module attributes {stable_mosaic.version = 11 : i64} {
  func.func @_ffn_kernel(%arg0: i32, %arg1: memref<16x32xf32, #tpu.memory_space<vmem>>, %arg2: memref<32x64xf32, #tpu.memory_space<vmem>>, %arg3: memref<1x64xf32, #tpu.memory_space<vmem>>, %arg4: memref<64x32xf32, #tpu.memory_space<vmem>>, %arg5: memref<1x32xf32, #tpu.memory_space<vmem>>, %arg6: memref<16x32xf32, #tpu.memory_space<vmem>>, %arg7: memref<16x64xf32, #tpu.memory_space<vmem>>) attributes {dimension_semantics = [#tpu.dimension_semantics<parallel>], iteration_bounds = array<i64: 1>, scalar_prefetch = 0 : i64, scratch_operands = 1 : i64, tpu.core_type = #tpu.core_type<tc>, window_params = [{transform_indices = @transform_0, window_bounds = array<i64: 16, 32>}, {pipeline_mode = #tpu.pipeline_mode<synchronous>, transform_indices = @transform_1, window_bounds = array<i64: 32, 64>}, {pipeline_mode = #tpu.pipeline_mode<synchronous>, transform_indices = @transform_2, window_bounds = array<i64: 1, 64>}, {pipeline_mode = #tpu.pipeline_mode<synchronous>, transform_indices = @transform_3, window_bounds = array<i64: 64, 32>}, {pipeline_mode = #tpu.pipeline_mode<synchronous>, transform_indices = @transform_4, window_bounds = array<i64: 1, 32>}, {transform_indices = @transform_5, window_bounds = array<i64: 16, 32>}]} {
    %c0 = arith.constant 0 : index
    %c0_0 = arith.constant 0 : index
    %0 = vector.load %arg1[%c0, %c0_0] : memref<16x32xf32, #tpu.memory_space<vmem>>, vector<16x32xf32>
    %c0_1 = arith.constant 0 : index
    %c0_2 = arith.constant 0 : index
    %1 = vector.load %arg2[%c0_1, %c0_2] : memref<32x64xf32, #tpu.memory_space<vmem>>, vector<32x64xf32>
    %cst = arith.constant dense<0.000000e+00> : vector<16x64xf32>
    %2 = tpu.matmul %0, %1, %cst {dimension_numbers = #tpu.dot_dimension_numbers<[1], [0], [0], [1], [0, 0, 1, 1], [], []>} : vector<16x32xf32>, vector<32x64xf32>, vector<16x64xf32> -> vector<16x64xf32>
    %c0_3 = arith.constant 0 : index
    %c0_4 = arith.constant 0 : index
    %3 = vector.load %arg3[%c0_3, %c0_4] : memref<1x64xf32, #tpu.memory_space<vmem>>, vector<1x64xf32>
    %4 = vector.broadcast %3 : vector<1x64xf32> to vector<16x64xf32>
    %5 = arith.addf %2, %4 : vector<16x64xf32>
    %cst_5 = arith.constant 0.000000e+00 : f32
    %6 = vector.broadcast %cst_5 : f32 to vector<16x64xf32>
    %7 = arith.maximumf %5, %6 : vector<16x64xf32>
    %c0_6 = arith.constant 0 : index
    %c0_7 = arith.constant 0 : index
    %8 = vector.load %arg7[%c0_6, %c0_7] : memref<16x64xf32, #tpu.memory_space<vmem>>, vector<16x64xf32>
    tpu.vector_store %arg7[%c0_6, %c0_7], %7 {strides = array<i32>} : memref<16x64xf32, #tpu.memory_space<vmem>>, vector<16x64xf32>,
    %c0_8 = arith.constant 0 : index
    %c0_9 = arith.constant 0 : index
    %9 = vector.load %arg7[%c0_8, %c0_9] : memref<16x64xf32, #tpu.memory_space<vmem>>, vector<16x64xf32>
    %c0_10 = arith.constant 0 : index
    %c0_11 = arith.constant 0 : index
    %10 = vector.load %arg4[%c0_10, %c0_11] : memref<64x32xf32, #tpu.memory_space<vmem>>, vector<64x32xf32>
    %cst_12 = arith.constant dense<0.000000e+00> : vector<16x32xf32>
    %11 = tpu.matmul %9, %10, %cst_12 {dimension_numbers = #tpu.dot_dimension_numbers<[1], [0], [0], [1], [0, 0, 1, 1], [], []>} : vector<16x64xf32>, vector<64x32xf32>, vector<16x32xf32> -> vector<16x32xf32>
    %c0_13 = arith.constant 0 : index
    %c0_14 = arith.constant 0 : index
    %12 = vector.load %arg5[%c0_13, %c0_14] : memref<1x32xf32, #tpu.memory_space<vmem>>, vector<1x32xf32>
    %13 = vector.broadcast %12 : vector<1x32xf32> to vector<16x32xf32>
    %14 = arith.addf %11, %13 : vector<16x32xf32>
    %c0_15 = arith.constant 0 : index
    %c0_16 = arith.constant 0 : index
    %15 = vector.load %arg6[%c0_15, %c0_16] : memref<16x32xf32, #tpu.memory_space<vmem>>, vector<16x32xf32>
    tpu.vector_store %arg6[%c0_15, %c0_16], %14 {strides = array<i32>} : memref<16x32xf32, #tpu.memory_space<vmem>>, vector<16x32xf32>,
    return
  }
  func.func @transform_0(%arg0: i32) -> (i32, i32) {
    %c0_i32 = arith.constant 0 : i32
    %c0_i32_0 = arith.constant 0 : i32
    return %arg0, %c0_i32 : i32, i32
  }
  func.func @transform_1(%arg0: i32) -> (i32, i32) {
    %c0_i32 = arith.constant 0 : i32
    %c0_i32_0 = arith.constant 0 : i32
    %c0_i32_1 = arith.constant 0 : i32
    return %c0_i32, %c0_i32_0 : i32, i32
  }
  func.func @transform_2(%arg0: i32) -> (i32, i32) {
    %c0_i32 = arith.constant 0 : i32
    %c0_i32_0 = arith.constant 0 : i32
    %c0_i32_1 = arith.constant 0 : i32
    return %c0_i32, %c0_i32_0 : i32, i32
  }
  func.func @transform_3(%arg0: i32) -> (i32, i32) {
    %c0_i32 = arith.constant 0 : i32
    %c0_i32_0 = arith.constant 0 : i32
    %c0_i32_1 = arith.constant 0 : i32
    return %c0_i32, %c0_i32_0 : i32, i32
  }
  func.func @transform_4(%arg0: i32) -> (i32, i32) {
    %c0_i32 = arith.constant 0 : i32
    %c0_i32_0 = arith.constant 0 : i32
    %c0_i32_1 = arith.constant 0 : i32
    return %c0_i32, %c0_i32_0 : i32, i32
  }
  func.func @transform_5(%arg0: i32) -> (i32, i32) {
    %c0_i32 = arith.constant 0 : i32
    %c0_i32_0 = arith.constant 0 : i32
    return %arg0, %c0_i32 : i32, i32
  }
}

module attributes {stable_mosaic.version = 11 : i64} {
  func.func @_ffn_kernel(%arg0: i32, %arg1: memref<16x32xf32, #tpu.memory_space<vmem>>, %arg2: memref<32x32xf32, #tpu.memory_space<vmem>>, %arg3: memref<1x32xf32, #tpu.memory_space<vmem>>, %arg4: memref<32x32xf32, #tpu.memory_space<vmem>>, %arg5: memref<1x32xf32, #tpu.memory_space<vmem>>, %arg6: memref<16x32xf32, #tpu.memory_space<vmem>>, %arg7: memref<16x32xf32, #tpu.memory_space<vmem>>) attributes {dimension_semantics = [#tpu.dimension_semantics<parallel>], iteration_bounds = array<i64: 1>, scalar_prefetch = 0 : i64, scratch_operands = 1 : i64, tpu.core_type = #tpu.core_type<tc>, window_params = [{transform_indices = @transform_0, window_bounds = array<i64: 16, 32>}, {pipeline_mode = #tpu.pipeline_mode<synchronous>, transform_indices = @transform_1, window_bounds = array<i64: 32, 32>}, {pipeline_mode = #tpu.pipeline_mode<synchronous>, transform_indices = @transform_2, window_bounds = array<i64: 1, 32>}, {pipeline_mode = #tpu.pipeline_mode<synchronous>, transform_indices = @transform_3, window_bounds = array<i64: 32, 32>}, {pipeline_mode = #tpu.pipeline_mode<synchronous>, transform_indices = @transform_4, window_bounds = array<i64: 1, 32>}, {transform_indices = @transform_5, window_bounds = array<i64: 16, 32>}]} {
    %c0 = arith.constant 0 : index
    %c0_0 = arith.constant 0 : index
    %0 = vector.load %arg1[%c0, %c0_0] : memref<16x32xf32, #tpu.memory_space<vmem>>, vector<16x32xf32>
    %c0_1 = arith.constant 0 : index
    %c0_2 = arith.constant 0 : index
    %1 = vector.load %arg2[%c0_1, %c0_2] : memref<32x32xf32, #tpu.memory_space<vmem>>, vector<32x32xf32>
    %cst = arith.constant dense<0.000000e+00> : vector<16x32xf32>
    %2 = tpu.matmul %0, %1, %cst {dimension_numbers = #tpu.dot_dimension_numbers<[1], [0], [0], [1], [0, 0, 1, 1], [], []>} : vector<16x32xf32>, vector<32x32xf32>, vector<16x32xf32> -> vector<16x32xf32>
    %c0_3 = arith.constant 0 : index
    %c0_4 = arith.constant 0 : index
    %3 = vector.load %arg3[%c0_3, %c0_4] : memref<1x32xf32, #tpu.memory_space<vmem>>, vector<1x32xf32>
    %4 = vector.broadcast %3 : vector<1x32xf32> to vector<16x32xf32>
    %5 = arith.addf %2, %4 : vector<16x32xf32>
    %cst_5 = arith.constant 0.000000e+00 : f32
    %6 = vector.broadcast %cst_5 : f32 to vector<16x32xf32>
    %7 = arith.maximumf %5, %6 : vector<16x32xf32>
    %c0_6 = arith.constant 0 : index
    %c0_7 = arith.constant 0 : index
    %8 = vector.load %arg7[%c0_6, %c0_7] : memref<16x32xf32, #tpu.memory_space<vmem>>, vector<16x32xf32>
    tpu.vector_store %arg7[%c0_6, %c0_7], %7 {strides = array<i32>} : memref<16x32xf32, #tpu.memory_space<vmem>>, vector<16x32xf32>,
    %c0_8 = arith.constant 0 : index
    %c0_9 = arith.constant 0 : index
    %9 = vector.load %arg7[%c0_8, %c0_9] : memref<16x32xf32, #tpu.memory_space<vmem>>, vector<16x32xf32>
    %c0_10 = arith.constant 0 : index
    %c0_11 = arith.constant 0 : index
    %10 = vector.load %arg4[%c0_10, %c0_11] : memref<32x32xf32, #tpu.memory_space<vmem>>, vector<32x32xf32>
    %cst_12 = arith.constant dense<0.000000e+00> : vector<16x32xf32>
    %11 = tpu.matmul %9, %10, %cst_12 {dimension_numbers = #tpu.dot_dimension_numbers<[1], [0], [0], [1], [0, 0, 1, 1], [], []>} : vector<16x32xf32>, vector<32x32xf32>, vector<16x32xf32> -> vector<16x32xf32>
    %c0_13 = arith.constant 0 : index
    %c0_14 = arith.constant 0 : index
    %12 = vector.load %arg5[%c0_13, %c0_14] : memref<1x32xf32, #tpu.memory_space<vmem>>, vector<1x32xf32>
    %13 = vector.broadcast %12 : vector<1x32xf32> to vector<16x32xf32>
    %14 = arith.addf %11, %13 : vector<16x32xf32>
    %c0_15 = arith.constant 0 : index
    %c0_16 = arith.constant 0 : index
    %15 = vector.load %arg6[%c0_15, %c0_16] : memref<16x32xf32, #tpu.memory_space<vmem>>, vector<16x32xf32>
    tpu.vector_store %arg6[%c0_15, %c0_16], %14 {strides = array<i32>} : memref<16x32xf32, #tpu.memory_space<vmem>>, vector<16x32xf32>,
    return
  }
  func.func @transform_0(%arg0: i32) -> (i32, i32) {
    %c0_i32 = arith.constant 0 : i32
    %c0_i32_0 = arith.constant 0 : i32
    return %arg0, %c0_i32 : i32, i32
  }
  func.func @transform_1(%arg0: i32) -> (i32, i32) {
    %c0_i32 = arith.constant 0 : i32
    %c0_i32_0 = arith.constant 0 : i32
    %c0_i32_1 = arith.constant 0 : i32
    return %c0_i32, %c0_i32_0 : i32, i32
  }
  func.func @transform_2(%arg0: i32) -> (i32, i32) {
    %c0_i32 = arith.constant 0 : i32
    %c0_i32_0 = arith.constant 0 : i32
    %c0_i32_1 = arith.constant 0 : i32
    return %c0_i32, %c0_i32_0 : i32, i32
  }
  func.func @transform_3(%arg0: i32) -> (i32, i32) {
    %c0_i32 = arith.constant 0 : i32
    %c0_i32_0 = arith.constant 0 : i32
    %c0_i32_1 = arith.constant 0 : i32
    return %c0_i32, %c0_i32_0 : i32, i32
  }
  func.func @transform_4(%arg0: i32) -> (i32, i32) {
    %c0_i32 = arith.constant 0 : i32
    %c0_i32_0 = arith.constant 0 : i32
    %c0_i32_1 = arith.constant 0 : i32
    return %c0_i32, %c0_i32_0 : i32, i32
  }
  func.func @transform_5(%arg0: i32) -> (i32, i32) {
    %c0_i32 = arith.constant 0 : i32
    %c0_i32_0 = arith.constant 0 : i32
    return %arg0, %c0_i32 : i32, i32
  }
}

</mosaic_0001>

<llo_original>
// kernel: sparse_transformer_forward.50
$region0: #{sparse_transformer_forward.50}
  #allocation0 [shape = 'u32[]', space=smem, size = 0x4, offset = 0x4, fixed_abs, tag = 'smem constant byte address 0x4 - core index']
  #allocation1 [shape = 'u32[144,128]{1,0:T(1,128)}', space=vmem, size = 0x12000, scoped, tag = 'internal scratch']
  %s0 = inlined_call_operand.vmem [shape: f32[16,32], index: 0, kind: input, shape index: {}]
  %s1 = inlined_call_operand.vmem [shape: f32[16,32], index: 1, kind: input, shape index: {}]
  %s2 = inlined_call_operand.vmem [shape: f32[1,32], index: 2, kind: input, shape index: {}]
  %s3 = inlined_call_operand.vmem [shape: f32[1,32], index: 3, kind: input, shape index: {}]
  %s4 = inlined_call_operand.vmem [shape: f32[16,32], index: 4, kind: output, shape index: {}]
  %s5 = sld [smem:[#allocation0]]
  $region26: #{sparse_transformer_forward.50} parent=0
    _
  %s7 = ssub.s32 1, %s5
  %s8 = scalar_select 0, %s7, %s5
  // Predicated region
  $region2: #{sparse_transformer_forward.50} parent=0 // pred_check
    _
  $region3: #{sparse_transformer_forward.50} parent=0 // pred_check_branch
    %10 = sbr.rel (0) target = $region5
  $region4: #{sparse_transformer_forward.50} parent=0 // pred_region
    _
  $region5: #{sparse_transformer_forward.50} parent=0 // pred_fallthru
    _
  // Predicated region
  $region6: #{sparse_transformer_forward.50} parent=0 // pred_check
    _
  $region7: #{sparse_transformer_forward.50} parent=0 // pred_check_branch
    %12 = sbr.rel (0) target = $region9
  $region8: #{sparse_transformer_forward.50} parent=0 // pred_region
    _
  $region9: #{sparse_transformer_forward.50} parent=0 // pred_fallthru
    _
  // Predicated region
  $region10: #{sparse_transformer_forward.50} parent=0 // pred_check
    _
  $region11: #{sparse_transformer_forward.50} parent=0 // pred_check_branch
    %14 = sbr.rel (0) target = $region13
  $region12: #{sparse_transformer_forward.50} parent=0 // pred_region
    _
  $region13: #{sparse_transformer_forward.50} parent=0 // pred_fallthru
    _
  // Predicated region
  $region14: #{sparse_transformer_forward.50} parent=0 // pred_check
    _
  $region15: #{sparse_transformer_forward.50} parent=0 // pred_check_branch
    %16 = sbr.rel (0) target = $region17
  $region16: #{sparse_transformer_forward.50} parent=0 // pred_region
    _
  $region17: #{sparse_transformer_forward.50} parent=0 // pred_fallthru
    _
  %v17 = vld [vmem:[%s0] sm:$0xff]
  %v18 = vld [vmem:[%s0 + $0x8] sm:$0xff]
  %v19 = vld [vmem:[%s1] sm:$0xff]
  %v20 = vld [vmem:[%s1 + $0x8] sm:$0xff]
  %v21 = vadd.f32 %v17, %v19
  %v22 = vadd.f32 %v18, %v20
  %vm23 = vcmask 261120
  %v24 = vsel %vm23, %v21, 0.0
  %25 = vadd.xlane.f32.xlu0 %v24
  %v26 = vpop.xlane.xlu0 %25
  %v27 = vsel %vm23, %v22, 0.0
  %28 = vadd.xlane.f32.xlu0 %v27
  %v29 = vpop.xlane.xlu0 %28
  %v30 = vrcp.pop 32.0
  %v31 = vmul.f32 %v26, %v30
  %v32 = vmul.f32 %v29, %v30
  %v33 = vsub.f32 %v21, %v31
  %v34 = vsub.f32 %v22, %v32
  %v35 = vmul.f32 %v33, %v33
  %v36 = vmul.f32 %v34, %v34
  %v37 = vsel %vm23, %v35, 0.0
  %38 = vadd.xlane.f32.xlu0 %v37
  %v39 = vpop.xlane.xlu0 %38
  %v40 = vsel %vm23, %v36, 0.0
  %41 = vadd.xlane.f32.xlu0 %v40
  %v42 = vpop.xlane.xlu0 %41
  %v43 = vmul.f32 %v39, %v30
  %v44 = vmul.f32 %v42, %v30
  %v45 = vadd.f32 %v43, 1e-05
  %v46 = vadd.f32 %v44, 1e-05
  %v47 = vrsqrt.pop %v45
  %v48 = vrsqrt.pop %v46
  %v49 = vmul.f32 %v33, %v47
  %v50 = vmul.f32 %v34, %v48
  %v51 = vld [vmem:[%s2] sm:$0x1]
  %v53 = vlaneseq
  %v54 = vshrl.u32 %v53, 7
  %v55 = vsub.s32 0, %v54
  %v56 = vrot.slane %v51, %v55
  %v58 = vmul.f32 %v49, %v56
  %v59 = vmul.f32 %v50, %v56
  %v60 = vld [vmem:[%s3] sm:$0x1]
  %v62 = vlaneseq
  %v63 = vshrl.u32 %v62, 7
  %v64 = vsub.s32 0, %v63
  %v65 = vrot.slane %v60, %v64
  %v67 = vadd.f32 %v58, %v65
  %v68 = vadd.f32 %v59, %v65
  %69 = vst.msk [vmem:[%s4] sm:$0xff] %vm23, %v67
  %70 = vst.msk [vmem:[%s4 + $0x8] sm:$0xff] %vm23, %v68
  // Predicated region
  $region18: #{sparse_transformer_forward.50} parent=0 // pred_check
    _
  $region19: #{sparse_transformer_forward.50} parent=0 // pred_check_branch
    %72 = sbr.rel (0) target = $region21
  $region20: #{sparse_transformer_forward.50} parent=0 // pred_region
    _
  $region21: #{sparse_transformer_forward.50} parent=0 // pred_fallthru
    _
  // Predicated region
  $region22: #{sparse_transformer_forward.50} parent=0 // pred_check
    _
  $region23: #{sparse_transformer_forward.50} parent=0 // pred_check_branch
    %74 = sbr.rel (0) target = $region25
  $region24: #{sparse_transformer_forward.50} parent=0 // pred_region
    _
  $region25: #{sparse_transformer_forward.50} parent=0 // pred_fallthru
    _

// kernel: sparse_transformer_forward.47
$region0: #{sparse_transformer_forward.47}
  #allocation0 [shape = 'u32[]', space=smem, size = 0x4, offset = 0x4, fixed_abs, tag = 'smem constant byte address 0x4 - core index']
  #allocation1 [shape = 'u32[144,128]{1,0:T(1,128)}', space=vmem, size = 0x12000, scoped, tag = 'internal scratch']
  #allocation2 [shape = 'f32[16,96]{1,0:T(8,128)}', space=vmem, size = 0x2000, scoped, tag = 'scratch operand']
  %s0 = inlined_call_operand.vmem [shape: f32[16,32], index: 0, kind: input, shape index: {}]
  %s1 = inlined_call_operand.vmem [shape: f32[32,96], index: 1, kind: input, shape index: {}]
  %s2 = inlined_call_operand.vmem [shape: f32[1,96], index: 2, kind: input, shape index: {}]
  %s3 = inlined_call_operand.vmem [shape: f32[16,96], index: 3, kind: output, shape index: {}]
  %s4 = sld [smem:[#allocation0]]
  $region30: #{sparse_transformer_forward.47} parent=0
    _
  %s6 = ssub.s32 1, %s4
  %s7 = scalar_select 0, %s6, %s4
  // Predicated region
  $region2: #{sparse_transformer_forward.47} parent=0 // pred_check
    _
  $region3: #{sparse_transformer_forward.47} parent=0 // pred_check_branch
    %9 = sbr.rel (0) target = $region5
  $region4: #{sparse_transformer_forward.47} parent=0 // pred_region
    _
  $region5: #{sparse_transformer_forward.47} parent=0 // pred_fallthru
    _
  // Predicated region
  $region6: #{sparse_transformer_forward.47} parent=0 // pred_check
    _
  $region7: #{sparse_transformer_forward.47} parent=0 // pred_check_branch
    %11 = sbr.rel (0) target = $region9
  $region8: #{sparse_transformer_forward.47} parent=0 // pred_region
    _
  $region9: #{sparse_transformer_forward.47} parent=0 // pred_fallthru
    _
  // Predicated region
  $region10: #{sparse_transformer_forward.47} parent=0 // pred_check
    _
  $region11: #{sparse_transformer_forward.47} parent=0 // pred_check_branch
    %13 = sbr.rel (0) target = $region13
  $region12: #{sparse_transformer_forward.47} parent=0 // pred_region
    _
  $region13: #{sparse_transformer_forward.47} parent=0 // pred_fallthru
    _
  %p14 = scmp.eq.s32.totalorder 0, 0
  // Predicated region
  $region14: #{sparse_transformer_forward.47} parent=0 // pred_check
    %p15 = pneg %p14
  $region15: #{sparse_transformer_forward.47} parent=0 // pred_check_branch
    %17 = sbr.rel (%p15) target = $region17
  $region16: #{sparse_transformer_forward.47} parent=0 // pred_region
    %vm18 = vcmask 785408
    %19 = vst.msk [vmem:[#allocation2] sm:$0xff] %vm18, 0.0
    %20 = vst.msk [vmem:[#allocation2 + $0x8] sm:$0xff] %vm18, 0.0
  $region17: #{sparse_transformer_forward.47} parent=0 // pred_fallthru
    _
  %v21 = vld [vmem:[#allocation2] sm:$0xff]
  %v22 = vld [vmem:[#allocation2 + $0x8] sm:$0xff]
  %v23 = vld [vmem:[%s0] sm:$0xff]
  %v24 = vld [vmem:[%s0 + $0x8] sm:$0xff]
  %v25 = vld [vmem:[%s1] sm:$0xff]
  %v26 = vld [vmem:[%s1 + $0x8] sm:$0xff]
  %v27 = vld [vmem:[%s1 + $0x10] sm:$0xff]
  %v28 = vld [vmem:[%s1 + $0x18] sm:$0xff]
  %vm29 = vcmask 261120
  %v31 = vsel %vm29, %v23, 0
  %v34 = vsel %vm29, %v24, 0
  %36 = vmatprep.subr.mxu0 0.0
  %37 = vmatpush1.msra.mxu0 %v25
  %38 = vmatprep.subr.mxu0 0.0
  %39 = vmatpush1.msra.mxu0 %v26
  %40 = vmatprep.subr.mxu0 0.0
  %41 = vmatpush1.msra.mxu0 %v27
  %42 = vmatprep.subr.mxu0 0.0
  %43 = vmatpush1.msra.mxu0 %v28
  %44 = vmatprep.subr.mxu0 0.0
  %45 = vmatpush1.msra.mxu0 0.0
  %46 = vmatprep.subr.mxu0 0.0
  %47 = vmatpush1.msra.mxu0 0.0
  %48 = vmatprep.subr.mxu0 0.0
  %49 = vmatpush1.msra.mxu0 0.0
  %50 = vmatprep.subr.mxu0 0.0
  %51 = vmatpush1.msra.mxu0 0.0
  %52 = vmatprep.subr.mxu0 0.0
  %53 = vmatpush1.msra.mxu0 0.0
  %54 = vmatprep.subr.mxu0 0.0
  %55 = vmatpush1.msra.mxu0 0.0
  %56 = vmatprep.subr.mxu0 0.0
  %57 = vmatpush1.msra.mxu0 0.0
  %58 = vmatprep.subr.mxu0 0.0
  %59 = vmatpush1.msra.mxu0 0.0
  %60 = vmatprep.subr.mxu0 0.0
  %61 = vmatpush1.msra.mxu0 0.0
  %62 = vmatprep.subr.mxu0 0.0
  %63 = vmatpush1.msra.mxu0 0.0
  %64 = vmatprep.subr.mxu0 0.0
  %65 = vmatpush1.msra.mxu0 0.0
  %66 = vmatprep.subr.mxu0 0.0
  %67 = vmatpush1.msra.mxu0 0.0
  %68 = vmatprep.subr.mxu0 0.0
  %69 = vmatpush1.msra.mxu0 0.0
  %70 = vmatprep.subr.mxu0 0.0
  %71 = vmatpush1.msra.mxu0 0.0
  %72 = vmatprep.subr.mxu0 0.0
  %73 = vmatpush1.msra.mxu0 0.0
  %74 = vmatprep.subr.mxu0 0.0
  %75 = vmatpush1.msra.mxu0 0.0
  %76 = vmatprep.subr.mxu0 0.0
  %77 = vmatpush1.msra.mxu0 0.0
  %78 = vmatprep.subr.mxu0 0.0
  %79 = vmatpush1.msra.mxu0 0.0
  %80 = vmatprep.subr.mxu0 0.0
  %81 = vmatpush1.msra.mxu0 0.0
  %82 = vmatprep.subr.mxu0 0.0
  %83 = vmatpush1.msra.mxu0 0.0
  %84 = vmatprep.subr.mxu0 0.0
  %85 = vmatpush1.msra.mxu0 0.0
  %86 = vmatprep.subr.mxu0 0.0
  %87 = vmatpush1.msra.mxu0 0.0
  %88 = vmatprep.subr.mxu0 0.0
  %89 = vmatpush1.msra.mxu0 0.0
  %90 = vmatprep.subr.mxu0 0.0
  %91 = vmatpush1.msra.mxu0 0.0
  %92 = vmatprep.subr.mxu0 0.0
  %93 = vmatpush1.msra.mxu0 0.0
  %94 = vmatprep.subr.mxu0 0.0
  %95 = vmatpush1.msra.mxu0 0.0
  %96 = vmatprep.subr.mxu0 0.0
  %97 = vmatpush1.msra.mxu0 0.0
  %98 = vmatprep.subr.mxu0 0.0
  %99 = vmatpush1.msra.mxu0 0.0
  %100 = vmatprep.mubr.f32.mxu0 0.0
  %101 = vmatmul.mubr.f32.gmra.mrb[0].mxu0 %v31
  %v102 = vpop.f32.mrb[0].mxu0
  %v103 = vadd.f32 0.0, %v102
  %v104 = vpop.f32.mrb[0].mxu0
  %105 = vmatprep.mubr.f32.mxu0 0.0
  %106 = vmatmul.mubr.f32.gmra.mrb[0].mxu0 %v34
  %v107 = vpop.f32.mrb[0].mxu0
  %v108 = vadd.f32 0.0, %v107
  %v109 = vpop.f32.mrb[0].mxu0
  %110 = vdwg.mxu0
  %v111 = vadd.f32 %v21, %v103
  %v112 = vadd.f32 %v22, %v108
  %vm113 = vcmask 785408
  %114 = vst.msk [vmem:[#allocation2] sm:$0xff] %vm113, %v111
  %115 = vst.msk [vmem:[#allocation2 + $0x8] sm:$0xff] %vm113, %v112
  // Predicated region
  $region18: #{sparse_transformer_forward.47} parent=0 // pred_check
    %p116 = pneg %p14
  $region19: #{sparse_transformer_forward.47} parent=0 // pred_check_branch
    %118 = sbr.rel (%p116) target = $region21
  $region20: #{sparse_transformer_forward.47} parent=0 // pred_region
    %v119 = vld [vmem:[#allocation2] sm:$0xff]
    %v120 = vld [vmem:[#allocation2 + $0x8] sm:$0xff]
    %v121 = vld [vmem:[%s2] sm:$0x1]
    %v123 = vlaneseq
    %v124 = vshrl.u32 %v123, 7
    %v125 = vsub.s32 0, %v124
    %v126 = vrot.slane %v121, %v125
    %v128 = vadd.f32 %v119, %v126
    %v129 = vadd.f32 %v120, %v126
    %130 = vst.msk [vmem:[%s3] sm:$0xff] %vm113, %v128
    %131 = vst.msk [vmem:[%s3 + $0x8] sm:$0xff] %vm113, %v129
  $region21: #{sparse_transformer_forward.47} parent=0 // pred_fallthru
    _
  // Predicated region
  $region22: #{sparse_transformer_forward.47} parent=0 // pred_check
    _
  $region23: #{sparse_transformer_forward.47} parent=0 // pred_check_branch
    %133 = sbr.rel (0) target = $region25
  $region24: #{sparse_transformer_forward.47} parent=0 // pred_region
    _
  $region25: #{sparse_transformer_forward.47} parent=0 // pred_fallthru
    _
  // Predicated region
  $region26: #{sparse_transformer_forward.47} parent=0 // pred_check
    _
  $region27: #{sparse_transformer_forward.47} parent=0 // pred_check_branch
    %135 = sbr.rel (0) target = $region29
  $region28: #{sparse_transformer_forward.47} parent=0 // pred_region
    _
  $region29: #{sparse_transformer_forward.47} parent=0 // pred_fallthru
    _

// kernel: sparse_transformer_forward.49
$region0: #{sparse_transformer_forward.49}
  #allocation0 [shape = 'u32[]', space=smem, size = 0x4, offset = 0x4, fixed_abs, tag = 'smem constant byte address 0x4 - core index']
  #allocation1 [shape = 'u32[144,128]{1,0:T(1,128)}', space=vmem, size = 0x12000, scoped, tag = 'internal scratch']
  #allocation2 [shape = 'f32[16,32]{1,0:T(8,128)}', space=vmem, size = 0x2000, scoped, tag = 'scratch operand']
  %s0 = inlined_call_operand.vmem [shape: f32[16,32], index: 0, kind: input, shape index: {}]
  %s1 = inlined_call_operand.vmem [shape: f32[32,32], index: 1, kind: input, shape index: {}]
  %s2 = inlined_call_operand.vmem [shape: f32[1,32], index: 2, kind: input, shape index: {}]
  %s3 = inlined_call_operand.vmem [shape: f32[16,32], index: 3, kind: output, shape index: {}]
  %s4 = sld [smem:[#allocation0]]
  $region30: #{sparse_transformer_forward.49} parent=0
    _
  %s6 = ssub.s32 1, %s4
  %s7 = scalar_select 0, %s6, %s4
  // Predicated region
  $region2: #{sparse_transformer_forward.49} parent=0 // pred_check
    _
  $region3: #{sparse_transformer_forward.49} parent=0 // pred_check_branch
    %9 = sbr.rel (0) target = $region5
  $region4: #{sparse_transformer_forward.49} parent=0 // pred_region
    _
  $region5: #{sparse_transformer_forward.49} parent=0 // pred_fallthru
    _
  // Predicated region
  $region6: #{sparse_transformer_forward.49} parent=0 // pred_check
    _
  $region7: #{sparse_transformer_forward.49} parent=0 // pred_check_branch
    %11 = sbr.rel (0) target = $region9
  $region8: #{sparse_transformer_forward.49} parent=0 // pred_region
    _
  $region9: #{sparse_transformer_forward.49} parent=0 // pred_fallthru
    _
  // Predicated region
  $region10: #{sparse_transformer_forward.49} parent=0 // pred_check
    _
  $region11: #{sparse_transformer_forward.49} parent=0 // pred_check_branch
    %13 = sbr.rel (0) target = $region13
  $region12: #{sparse_transformer_forward.49} parent=0 // pred_region
    _
  $region13: #{sparse_transformer_forward.49} parent=0 // pred_fallthru
    _
  %p14 = scmp.eq.s32.totalorder 0, 0
  // Predicated region
  $region14: #{sparse_transformer_forward.49} parent=0 // pred_check
    %p15 = pneg %p14
  $region15: #{sparse_transformer_forward.49} parent=0 // pred_check_branch
    %17 = sbr.rel (%p15) target = $region17
  $region16: #{sparse_transformer_forward.49} parent=0 // pred_region
    %vm18 = vcmask 261120
    %19 = vst.msk [vmem:[#allocation2] sm:$0xff] %vm18, 0.0
    %20 = vst.msk [vmem:[#allocation2 + $0x8] sm:$0xff] %vm18, 0.0
  $region17: #{sparse_transformer_forward.49} parent=0 // pred_fallthru
    _
  %v21 = vld [vmem:[#allocation2] sm:$0xff]
  %v22 = vld [vmem:[#allocation2 + $0x8] sm:$0xff]
  %v23 = vld [vmem:[%s0] sm:$0xff]
  %v24 = vld [vmem:[%s0 + $0x8] sm:$0xff]
  %v25 = vld [vmem:[%s1] sm:$0xff]
  %v26 = vld [vmem:[%s1 + $0x8] sm:$0xff]
  %v27 = vld [vmem:[%s1 + $0x10] sm:$0xff]
  %v28 = vld [vmem:[%s1 + $0x18] sm:$0xff]
  %vm29 = vcmask 261120
  %v31 = vsel %vm29, %v23, 0
  %v34 = vsel %vm29, %v24, 0
  %36 = vmatprep.subr.mxu0 0.0
  %37 = vmatpush1.msra.mxu0 %v25
  %38 = vmatprep.subr.mxu0 0.0
  %39 = vmatpush1.msra.mxu0 %v26
  %40 = vmatprep.subr.mxu0 0.0
  %41 = vmatpush1.msra.mxu0 %v27
  %42 = vmatprep.subr.mxu0 0.0
  %43 = vmatpush1.msra.mxu0 %v28
  %44 = vmatprep.subr.mxu0 0.0
  %45 = vmatpush1.msra.mxu0 0.0
  %46 = vmatprep.subr.mxu0 0.0
  %47 = vmatpush1.msra.mxu0 0.0
  %48 = vmatprep.subr.mxu0 0.0
  %49 = vmatpush1.msra.mxu0 0.0
  %50 = vmatprep.subr.mxu0 0.0
  %51 = vmatpush1.msra.mxu0 0.0
  %52 = vmatprep.subr.mxu0 0.0
  %53 = vmatpush1.msra.mxu0 0.0
  %54 = vmatprep.subr.mxu0 0.0
  %55 = vmatpush1.msra.mxu0 0.0
  %56 = vmatprep.subr.mxu0 0.0
  %57 = vmatpush1.msra.mxu0 0.0
  %58 = vmatprep.subr.mxu0 0.0
  %59 = vmatpush1.msra.mxu0 0.0
  %60 = vmatprep.subr.mxu0 0.0
  %61 = vmatpush1.msra.mxu0 0.0
  %62 = vmatprep.subr.mxu0 0.0
  %63 = vmatpush1.msra.mxu0 0.0
  %64 = vmatprep.subr.mxu0 0.0
  %65 = vmatpush1.msra.mxu0 0.0
  %66 = vmatprep.subr.mxu0 0.0
  %67 = vmatpush1.msra.mxu0 0.0
  %68 = vmatprep.subr.mxu0 0.0
  %69 = vmatpush1.msra.mxu0 0.0
  %70 = vmatprep.subr.mxu0 0.0
  %71 = vmatpush1.msra.mxu0 0.0
  %72 = vmatprep.subr.mxu0 0.0
  %73 = vmatpush1.msra.mxu0 0.0
  %74 = vmatprep.subr.mxu0 0.0
  %75 = vmatpush1.msra.mxu0 0.0
  %76 = vmatprep.subr.mxu0 0.0
  %77 = vmatpush1.msra.mxu0 0.0
  %78 = vmatprep.subr.mxu0 0.0
  %79 = vmatpush1.msra.mxu0 0.0
  %80 = vmatprep.subr.mxu0 0.0
  %81 = vmatpush1.msra.mxu0 0.0
  %82 = vmatprep.subr.mxu0 0.0
  %83 = vmatpush1.msra.mxu0 0.0
  %84 = vmatprep.subr.mxu0 0.0
  %85 = vmatpush1.msra.mxu0 0.0
  %86 = vmatprep.subr.mxu0 0.0
  %87 = vmatpush1.msra.mxu0 0.0
  %88 = vmatprep.subr.mxu0 0.0
  %89 = vmatpush1.msra.mxu0 0.0
  %90 = vmatprep.subr.mxu0 0.0
  %91 = vmatpush1.msra.mxu0 0.0
  %92 = vmatprep.subr.mxu0 0.0
  %93 = vmatpush1.msra.mxu0 0.0
  %94 = vmatprep.subr.mxu0 0.0
  %95 = vmatpush1.msra.mxu0 0.0
  %96 = vmatprep.subr.mxu0 0.0
  %97 = vmatpush1.msra.mxu0 0.0
  %98 = vmatprep.subr.mxu0 0.0
  %99 = vmatpush1.msra.mxu0 0.0
  %100 = vmatprep.mubr.f32.mxu0 0.0
  %101 = vmatmul.mubr.f32.gmra.mrb[0].mxu0 %v31
  %v102 = vpop.f32.mrb[0].mxu0
  %v103 = vadd.f32 0.0, %v102
  %v104 = vpop.f32.mrb[0].mxu0
  %105 = vmatprep.mubr.f32.mxu0 0.0
  %106 = vmatmul.mubr.f32.gmra.mrb[0].mxu0 %v34
  %v107 = vpop.f32.mrb[0].mxu0
  %v108 = vadd.f32 0.0, %v107
  %v109 = vpop.f32.mrb[0].mxu0
  %110 = vdwg.mxu0
  %v111 = vadd.f32 %v21, %v103
  %v112 = vadd.f32 %v22, %v108
  %113 = vst.msk [vmem:[#allocation2] sm:$0xff] %vm29, %v111
  %114 = vst.msk [vmem:[#allocation2 + $0x8] sm:$0xff] %vm29, %v112
  // Predicated region
  $region18: #{sparse_transformer_forward.49} parent=0 // pred_check
    %p115 = pneg %p14
  $region19: #{sparse_transformer_forward.49} parent=0 // pred_check_branch
    %117 = sbr.rel (%p115) target = $region21
  $region20: #{sparse_transformer_forward.49} parent=0 // pred_region
    %v118 = vld [vmem:[#allocation2] sm:$0xff]
    %v119 = vld [vmem:[#allocation2 + $0x8] sm:$0xff]
    %v120 = vld [vmem:[%s2] sm:$0x1]
    %v122 = vlaneseq
    %v123 = vshrl.u32 %v122, 7
    %v124 = vsub.s32 0, %v123
    %v125 = vrot.slane %v120, %v124
    %v127 = vadd.f32 %v118, %v125
    %v128 = vadd.f32 %v119, %v125
    %129 = vst.msk [vmem:[%s3] sm:$0xff] %vm29, %v127
    %130 = vst.msk [vmem:[%s3 + $0x8] sm:$0xff] %vm29, %v128
  $region21: #{sparse_transformer_forward.49} parent=0 // pred_fallthru
    _
  // Predicated region
  $region22: #{sparse_transformer_forward.49} parent=0 // pred_check
    _
  $region23: #{sparse_transformer_forward.49} parent=0 // pred_check_branch
    %132 = sbr.rel (0) target = $region25
  $region24: #{sparse_transformer_forward.49} parent=0 // pred_region
    _
  $region25: #{sparse_transformer_forward.49} parent=0 // pred_fallthru
    _
  // Predicated region
  $region26: #{sparse_transformer_forward.49} parent=0 // pred_check
    _
  $region27: #{sparse_transformer_forward.49} parent=0 // pred_check_branch
    %134 = sbr.rel (0) target = $region29
  $region28: #{sparse_transformer_forward.49} parent=0 // pred_region
    _
  $region29: #{sparse_transformer_forward.49} parent=0 // pred_fallthru
    _

// kernel: sparse_transformer_forward.48
$region0: #{sparse_transformer_forward.48}
  #allocation0 [shape = 'u32[]', space=smem, size = 0x4, offset = 0x4, fixed_abs, tag = 'smem constant byte address 0x4 - core index']
  #allocation1 [shape = 'u32[144,128]{1,0:T(1,128)}', space=vmem, size = 0x12000, scoped, tag = 'internal scratch']
  #allocation2 [shape = 'f32[8,8,1]{2,1,0:T(8,128)}', space=vmem, size = 0x8000, scoped, tag = 'scratch operand']
  #allocation3 [shape = 'f32[8,8,1]{2,1,0:T(8,128)}', space=vmem, size = 0x8000, scoped, tag = 'scratch operand']
  #allocation4 [shape = 'f32[8,8,8]{2,1,0:T(8,128)}', space=vmem, size = 0x8000, scoped, tag = 'scratch operand']
  %s0 = inlined_call_operand.vmem [shape: f32[8,8,8], index: 0, kind: input, shape index: {}]
  %s1 = inlined_call_operand.vmem [shape: f32[8,8,8], index: 1, kind: input, shape index: {}]
  %s2 = inlined_call_operand.vmem [shape: f32[8,8,8], index: 2, kind: input, shape index: {}]
  %s3 = inlined_call_operand.vmem [shape: f32[8,8,8], index: 3, kind: output, shape index: {}]
  %s4 = sld [smem:[#allocation0]]
  $region34: #{sparse_transformer_forward.48} parent=0
    _
  %s6 = ssub.s32 1, %s4
  %s7 = scalar_select 0, %s6, %s4
  // Predicated region
  $region2: #{sparse_transformer_forward.48} parent=0 // pred_check
    _
  $region3: #{sparse_transformer_forward.48} parent=0 // pred_check_branch
    %9 = sbr.rel (0) target = $region5
  $region4: #{sparse_transformer_forward.48} parent=0 // pred_region
    _
  $region5: #{sparse_transformer_forward.48} parent=0 // pred_fallthru
    _
  // Predicated region
  $region6: #{sparse_transformer_forward.48} parent=0 // pred_check
    _
  $region7: #{sparse_transformer_forward.48} parent=0 // pred_check_branch
    %11 = sbr.rel (0) target = $region9
  $region8: #{sparse_transformer_forward.48} parent=0 // pred_region
    _
  $region9: #{sparse_transformer_forward.48} parent=0 // pred_fallthru
    _
  // Predicated region
  $region10: #{sparse_transformer_forward.48} parent=0 // pred_check
    _
  $region11: #{sparse_transformer_forward.48} parent=0 // pred_check_branch
    %13 = sbr.rel (0) target = $region13
  $region12: #{sparse_transformer_forward.48} parent=0 // pred_region
    _
  $region13: #{sparse_transformer_forward.48} parent=0 // pred_fallthru
    _
  %p14 = scmp.eq.s32.totalorder 0, 0
  // Predicated region
  $region14: #{sparse_transformer_forward.48} parent=0 // pred_check
    %p15 = pneg %p14
  $region15: #{sparse_transformer_forward.48} parent=0 // pred_check_branch
    %17 = sbr.rel (%p15) target = $region17
  $region16: #{sparse_transformer_forward.48} parent=0 // pred_region
    %vm18 = vcmask 7168
    %19 = vst.msk [vmem:[#allocation2] sm:$0xff] %vm18, -inf
    %20 = vst.msk [vmem:[#allocation2 + $0x8] sm:$0xff] %vm18, -inf
    %21 = vst.msk [vmem:[#allocation2 + $0x10] sm:$0xff] %vm18, -inf
    %22 = vst.msk [vmem:[#allocation2 + $0x18] sm:$0xff] %vm18, -inf
    %23 = vst.msk [vmem:[#allocation2 + $0x20] sm:$0xff] %vm18, -inf
    %24 = vst.msk [vmem:[#allocation2 + $0x28] sm:$0xff] %vm18, -inf
    %25 = vst.msk [vmem:[#allocation2 + $0x30] sm:$0xff] %vm18, -inf
    %26 = vst.msk [vmem:[#allocation2 + $0x38] sm:$0xff] %vm18, -inf
    %27 = vst.msk [vmem:[#allocation3] sm:$0xff] %vm18, 0.0
    %28 = vst.msk [vmem:[#allocation3 + $0x8] sm:$0xff] %vm18, 0.0
    %29 = vst.msk [vmem:[#allocation3 + $0x10] sm:$0xff] %vm18, 0.0
    %30 = vst.msk [vmem:[#allocation3 + $0x18] sm:$0xff] %vm18, 0.0
    %31 = vst.msk [vmem:[#allocation3 + $0x20] sm:$0xff] %vm18, 0.0
    %32 = vst.msk [vmem:[#allocation3 + $0x28] sm:$0xff] %vm18, 0.0
    %33 = vst.msk [vmem:[#allocation3 + $0x30] sm:$0xff] %vm18, 0.0
    %34 = vst.msk [vmem:[#allocation3 + $0x38] sm:$0xff] %vm18, 0.0
    %vm35 = vcmask 64512
    %36 = vst.msk [vmem:[#allocation4] sm:$0xff] %vm35, 0.0
    %37 = vst.msk [vmem:[#allocation4 + $0x8] sm:$0xff] %vm35, 0.0
    %38 = vst.msk [vmem:[#allocation4 + $0x10] sm:$0xff] %vm35, 0.0
    %39 = vst.msk [vmem:[#allocation4 + $0x18] sm:$0xff] %vm35, 0.0
    %40 = vst.msk [vmem:[#allocation4 + $0x20] sm:$0xff] %vm35, 0.0
    %41 = vst.msk [vmem:[#allocation4 + $0x28] sm:$0xff] %vm35, 0.0
    %42 = vst.msk [vmem:[#allocation4 + $0x30] sm:$0xff] %vm35, 0.0
    %43 = vst.msk [vmem:[#allocation4 + $0x38] sm:$0xff] %vm35, 0.0
  $region17: #{sparse_transformer_forward.48} parent=0 // pred_fallthru
    _
  %s44 = smul.u32 0, 8
  %s45 = sadd.s32 %s44, 7
  %s46 = smul.u32 0, 8
  %s47 = sadd.s32 %s46, 7
  %p48 = scmp.le.s32.totalorder %s46, %s45
  %s49 = ssub.s32 %s44, %s47
  %p50 = scmp.lt.s32.totalorder %s49, 4
  %p51 = pnand %p48, %p50
  %p52 = pneg %p51
  // Predicated region
  $region18: #{sparse_transformer_forward.48} parent=0 // pred_check
    _
  $region19: #{sparse_transformer_forward.48} parent=0 // pred_check_branch
    %54 = sbr.rel (%p51) target = $region21
  $region20: #{sparse_transformer_forward.48} parent=0 // pred_region
    %v55 = vld [vmem:[%s0] sm:$0xff]
    %v56 = vld [vmem:[%s0 + $0x8] sm:$0xff]
    %v57 = vld [vmem:[%s0 + $0x10] sm:$0xff]
    %v58 = vld [vmem:[%s0 + $0x18] sm:$0xff]
    %v59 = vld [vmem:[%s0 + $0x20] sm:$0xff]
    %v60 = vld [vmem:[%s0 + $0x28] sm:$0xff]
    %v61 = vld [vmem:[%s0 + $0x30] sm:$0xff]
    %v62 = vld [vmem:[%s0 + $0x38] sm:$0xff]
    %v63 = vmul.f32 %v55, 0.35355338
    %v64 = vmul.f32 %v56, 0.35355338
    %v65 = vmul.f32 %v57, 0.35355338
    %v66 = vmul.f32 %v58, 0.35355338
    %v67 = vmul.f32 %v59, 0.35355338
    %v68 = vmul.f32 %v60, 0.35355338
    %v69 = vmul.f32 %v61, 0.35355338
    %v70 = vmul.f32 %v62, 0.35355338
    %v71 = vld [vmem:[%s1] sm:$0xff]
    %v72 = vld [vmem:[%s1 + $0x8] sm:$0xff]
    %v73 = vld [vmem:[%s1 + $0x10] sm:$0xff]
    %v74 = vld [vmem:[%s1 + $0x18] sm:$0xff]
    %v75 = vld [vmem:[%s1 + $0x20] sm:$0xff]
    %v76 = vld [vmem:[%s1 + $0x28] sm:$0xff]
    %v77 = vld [vmem:[%s1 + $0x30] sm:$0xff]
    %v78 = vld [vmem:[%s1 + $0x38] sm:$0xff]
    %v79 = vld [vmem:[%s2] sm:$0xff]
    %v80 = vld [vmem:[%s2 + $0x8] sm:$0xff]
    %v81 = vld [vmem:[%s2 + $0x10] sm:$0xff]
    %v82 = vld [vmem:[%s2 + $0x18] sm:$0xff]
    %v83 = vld [vmem:[%s2 + $0x20] sm:$0xff]
    %v84 = vld [vmem:[%s2 + $0x28] sm:$0xff]
    %v85 = vld [vmem:[%s2 + $0x30] sm:$0xff]
    %v86 = vld [vmem:[%s2 + $0x38] sm:$0xff]
    %vm87 = vcmask 64512
    %v89 = vsel %vm87, %v63, 0
    %v92 = vsel %vm87, %v71, 0
    %94 = vmatprep.subr.mxu0 0.0
    %95 = vmatpush1.xpose.msra.mxu0 %v92
    %96 = vmatprep.subr.mxu0 0.0
    %97 = vmatpush1.xpose.msra.mxu0 0.0
    %98 = vmatprep.subr.mxu0 0.0
    %99 = vmatpush1.xpose.msra.mxu0 0.0
    %100 = vmatprep.subr.mxu0 0.0
    %101 = vmatpush1.xpose.msra.mxu0 0.0
    %102 = vmatprep.subr.mxu0 0.0
    %103 = vmatpush1.xpose.msra.mxu0 0.0
    %104 = vmatprep.subr.mxu0 0.0
    %105 = vmatpush1.xpose.msra.mxu0 0.0
    %106 = vmatprep.subr.mxu0 0.0
    %107 = vmatpush1.xpose.msra.mxu0 0.0
    %108 = vmatprep.subr.mxu0 0.0
    %109 = vmatpush1.xpose.msra.mxu0 0.0
    %110 = vmatprep.subr.mxu0 0.0
    %111 = vmatpush1.xpose.msra.mxu0 0.0
    %112 = vmatprep.subr.mxu0 0.0
    %113 = vmatpush1.xpose.msra.mxu0 0.0
    %114 = vmatprep.subr.mxu0 0.0
    %115 = vmatpush1.xpose.msra.mxu0 0.0
    %116 = vmatprep.subr.mxu0 0.0
    %117 = vmatpush1.xpose.msra.mxu0 0.0
    %118 = vmatprep.subr.mxu0 0.0
    %119 = vmatpush1.xpose.msra.mxu0 0.0
    %120 = vmatprep.subr.mxu0 0.0
    %121 = vmatpush1.xpose.msra.mxu0 0.0
    %122 = vmatprep.subr.mxu0 0.0
    %123 = vmatpush1.xpose.msra.mxu0 0.0
    %124 = vmatprep.subr.mxu0 0.0
    %125 = vmatpush1.xpose.msra.mxu0 0.0
    %126 = vmatprep.subr.mxu0 0.0
    %127 = vmatpush1.xpose.msra.mxu0 0.0
    %128 = vmatprep.subr.mxu0 0.0
    %129 = vmatpush1.xpose.msra.mxu0 0.0
    %130 = vmatprep.subr.mxu0 0.0
    %131 = vmatpush1.xpose.msra.mxu0 0.0
    %132 = vmatprep.subr.mxu0 0.0
    %133 = vmatpush1.xpose.msra.mxu0 0.0
    %134 = vmatprep.subr.mxu0 0.0
    %135 = vmatpush1.xpose.msra.mxu0 0.0
    %136 = vmatprep.subr.mxu0 0.0
    %137 = vmatpush1.xpose.msra.mxu0 0.0
    %138 = vmatprep.subr.mxu0 0.0
    %139 = vmatpush1.xpose.msra.mxu0 0.0
    %140 = vmatprep.subr.mxu0 0.0
    %141 = vmatpush1.xpose.msra.mxu0 0.0
    %142 = vmatprep.subr.mxu0 0.0
    %143 = vmatpush1.xpose.msra.mxu0 0.0
    %144 = vmatprep.subr.mxu0 0.0
    %145 = vmatpush1.xpose.msra.mxu0 0.0
    %146 = vmatprep.subr.mxu0 0.0
    %147 = vmatpush1.xpose.msra.mxu0 0.0
    %148 = vmatprep.subr.mxu0 0.0
    %149 = vmatpush1.xpose.msra.mxu0 0.0
    %150 = vmatprep.subr.mxu0 0.0
    %151 = vmatpush1.xpose.msra.mxu0 0.0
    %152 = vmatprep.subr.mxu0 0.0
    %153 = vmatpush1.xpose.msra.mxu0 0.0
    %154 = vmatprep.subr.mxu0 0.0
    %155 = vmatpush1.xpose.msra.mxu0 0.0
    %156 = vmatprep.subr.mxu0 0.0
    %157 = vmatpush1.xpose.msra.mxu0 0.0
    %158 = vmatprep.mubr.f32.mxu0 0.0
    %159 = vmatmul.mubr.f32.gmra.mrb[0].mxu0 %v89
    %v160 = vpop.f32.mrb[0].mxu0
    %v161 = vadd.f32 0.0, %v160
    %v162 = vpop.f32.mrb[0].mxu0
    %163 = vdwg.mxu0
    %v165 = vsel %vm87, %v64, 0
    %v168 = vsel %vm87, %v72, 0
    %170 = vmatprep.subr.mxu0 0.0
    %171 = vmatpush1.xpose.msra.mxu0 %v168
    %172 = vmatprep.subr.mxu0 0.0
    %173 = vmatpush1.xpose.msra.mxu0 0.0
    %174 = vmatprep.subr.mxu0 0.0
    %175 = vmatpush1.xpose.msra.mxu0 0.0
    %176 = vmatprep.subr.mxu0 0.0
    %177 = vmatpush1.xpose.msra.mxu0 0.0
    %178 = vmatprep.subr.mxu0 0.0
    %179 = vmatpush1.xpose.msra.mxu0 0.0
    %180 = vmatprep.subr.mxu0 0.0
    %181 = vmatpush1.xpose.msra.mxu0 0.0
    %182 = vmatprep.subr.mxu0 0.0
    %183 = vmatpush1.xpose.msra.mxu0 0.0
    %184 = vmatprep.subr.mxu0 0.0
    %185 = vmatpush1.xpose.msra.mxu0 0.0
    %186 = vmatprep.subr.mxu0 0.0
    %187 = vmatpush1.xpose.msra.mxu0 0.0
    %188 = vmatprep.subr.mxu0 0.0
    %189 = vmatpush1.xpose.msra.mxu0 0.0
    %190 = vmatprep.subr.mxu0 0.0
    %191 = vmatpush1.xpose.msra.mxu0 0.0
    %192 = vmatprep.subr.mxu0 0.0
    %193 = vmatpush1.xpose.msra.mxu0 0.0
    %194 = vmatprep.subr.mxu0 0.0
    %195 = vmatpush1.xpose.msra.mxu0 0.0
    %196 = vmatprep.subr.mxu0 0.0
    %197 = vmatpush1.xpose.msra.mxu0 0.0
    %198 = vmatprep.subr.mxu0 0.0
    %199 = vmatpush1.xpose.msra.mxu0 0.0
    %200 = vmatprep.subr.mxu0 0.0
    %201 = vmatpush1.xpose.msra.mxu0 0.0
    %202 = vmatprep.subr.mxu0 0.0
    %203 = vmatpush1.xpose.msra.mxu0 0.0
    %204 = vmatprep.subr.mxu0 0.0
    %205 = vmatpush1.xpose.msra.mxu0 0.0
    %206 = vmatprep.subr.mxu0 0.0
    %207 = vmatpush1.xpose.msra.mxu0 0.0
    %208 = vmatprep.subr.mxu0 0.0
    %209 = vmatpush1.xpose.msra.mxu0 0.0
    %210 = vmatprep.subr.mxu0 0.0
    %211 = vmatpush1.xpose.msra.mxu0 0.0
    %212 = vmatprep.subr.mxu0 0.0
    %213 = vmatpush1.xpose.msra.mxu0 0.0
    %214 = vmatprep.subr.mxu0 0.0
    %215 = vmatpush1.xpose.msra.mxu0 0.0
    %216 = vmatprep.subr.mxu0 0.0
    %217 = vmatpush1.xpose.msra.mxu0 0.0
    %218 = vmatprep.subr.mxu0 0.0
    %219 = vmatpush1.xpose.msra.mxu0 0.0
    %220 = vmatprep.subr.mxu0 0.0
    %221 = vmatpush1.xpose.msra.mxu0 0.0
    %222 = vmatprep.subr.mxu0 0.0
    %223 = vmatpush1.xpose.msra.mxu0 0.0
    %224 = vmatprep.subr.mxu0 0.0
    %225 = vmatpush1.xpose.msra.mxu0 0.0
    %226 = vmatprep.subr.mxu0 0.0
    %227 = vmatpush1.xpose.msra.mxu0 0.0
    %228 = vmatprep.subr.mxu0 0.0
    %229 = vmatpush1.xpose.msra.mxu0 0.0
    %230 = vmatprep.subr.mxu0 0.0
    %231 = vmatpush1.xpose.msra.mxu0 0.0
    %232 = vmatprep.subr.mxu0 0.0
    %233 = vmatpush1.xpose.msra.mxu0 0.0
    %234 = vmatprep.mubr.f32.mxu0 0.0
    %235 = vmatmul.mubr.f32.gmra.mrb[0].mxu0 %v165
    %v236 = vpop.f32.mrb[0].mxu0
    %v237 = vadd.f32 0.0, %v236
    %v238 = vpop.f32.mrb[0].mxu0
    %239 = vdwg.mxu0
    %v241 = vsel %vm87, %v65, 0
    %v244 = vsel %vm87, %v73, 0
    %246 = vmatprep.subr.mxu0 0.0
    %247 = vmatpush1.xpose.msra.mxu0 %v244
    %248 = vmatprep.subr.mxu0 0.0
    %249 = vmatpush1.xpose.msra.mxu0 0.0
    %250 = vmatprep.subr.mxu0 0.0
    %251 = vmatpush1.xpose.msra.mxu0 0.0
    %252 = vmatprep.subr.mxu0 0.0
    %253 = vmatpush1.xpose.msra.mxu0 0.0
    %254 = vmatprep.subr.mxu0 0.0
    %255 = vmatpush1.xpose.msra.mxu0 0.0
    %256 = vmatprep.subr.mxu0 0.0
    %257 = vmatpush1.xpose.msra.mxu0 0.0
    %258 = vmatprep.subr.mxu0 0.0
    %259 = vmatpush1.xpose.msra.mxu0 0.0
    %260 = vmatprep.subr.mxu0 0.0
    %261 = vmatpush1.xpose.msra.mxu0 0.0
    %262 = vmatprep.subr.mxu0 0.0
    %263 = vmatpush1.xpose.msra.mxu0 0.0
    %264 = vmatprep.subr.mxu0 0.0
    %265 = vmatpush1.xpose.msra.mxu0 0.0
    %266 = vmatprep.subr.mxu0 0.0
    %267 = vmatpush1.xpose.msra.mxu0 0.0
    %268 = vmatprep.subr.mxu0 0.0
    %269 = vmatpush1.xpose.msra.mxu0 0.0
    %270 = vmatprep.subr.mxu0 0.0
    %271 = vmatpush1.xpose.msra.mxu0 0.0
    %272 = vmatprep.subr.mxu0 0.0
    %273 = vmatpush1.xpose.msra.mxu0 0.0
    %274 = vmatprep.subr.mxu0 0.0
    %275 = vmatpush1.xpose.msra.mxu0 0.0
    %276 = vmatprep.subr.mxu0 0.0
    %277 = vmatpush1.xpose.msra.mxu0 0.0
    %278 = vmatprep.subr.mxu0 0.0
    %279 = vmatpush1.xpose.msra.mxu0 0.0
    %280 = vmatprep.subr.mxu0 0.0
    %281 = vmatpush1.xpose.msra.mxu0 0.0
    %282 = vmatprep.subr.mxu0 0.0
    %283 = vmatpush1.xpose.msra.mxu0 0.0
    %284 = vmatprep.subr.mxu0 0.0
    %285 = vmatpush1.xpose.msra.mxu0 0.0
    %286 = vmatprep.subr.mxu0 0.0
    %287 = vmatpush1.xpose.msra.mxu0 0.0
    %288 = vmatprep.subr.mxu0 0.0
    %289 = vmatpush1.xpose.msra.mxu0 0.0
    %290 = vmatprep.subr.mxu0 0.0
    %291 = vmatpush1.xpose.msra.mxu0 0.0
    %292 = vmatprep.subr.mxu0 0.0
    %293 = vmatpush1.xpose.msra.mxu0 0.0
    %294 = vmatprep.subr.mxu0 0.0
    %295 = vmatpush1.xpose.msra.mxu0 0.0
    %296 = vmatprep.subr.mxu0 0.0
    %297 = vmatpush1.xpose.msra.mxu0 0.0
    %298 = vmatprep.subr.mxu0 0.0
    %299 = vmatpush1.xpose.msra.mxu0 0.0
    %300 = vmatprep.subr.mxu0 0.0
    %301 = vmatpush1.xpose.msra.mxu0 0.0
    %302 = vmatprep.subr.mxu0 0.0
    %303 = vmatpush1.xpose.msra.mxu0 0.0
    %304 = vmatprep.subr.mxu0 0.0
    %305 = vmatpush1.xpose.msra.mxu0 0.0
    %306 = vmatprep.subr.mxu0 0.0
    %307 = vmatpush1.xpose.msra.mxu0 0.0
    %308 = vmatprep.subr.mxu0 0.0
    %309 = vmatpush1.xpose.msra.mxu0 0.0
    %310 = vmatprep.mubr.f32.mxu0 0.0
    %311 = vmatmul.mubr.f32.gmra.mrb[0].mxu0 %v241
    %v312 = vpop.f32.mrb[0].mxu0
    %v313 = vadd.f32 0.0, %v312
    %v314 = vpop.f32.mrb[0].mxu0
    %315 = vdwg.mxu0
    %v317 = vsel %vm87, %v66, 0
    %v320 = vsel %vm87, %v74, 0
    %322 = vmatprep.subr.mxu0 0.0
    %323 = vmatpush1.xpose.msra.mxu0 %v320
    %324 = vmatprep.subr.mxu0 0.0
    %325 = vmatpush1.xpose.msra.mxu0 0.0
    %326 = vmatprep.subr.mxu0 0.0
    %327 = vmatpush1.xpose.msra.mxu0 0.0
    %328 = vmatprep.subr.mxu0 0.0
    %329 = vmatpush1.xpose.msra.mxu0 0.0
    %330 = vmatprep.subr.mxu0 0.0
    %331 = vmatpush1.xpose.msra.mxu0 0.0
    %332 = vmatprep.subr.mxu0 0.0
    %333 = vmatpush1.xpose.msra.mxu0 0.0
    %334 = vmatprep.subr.mxu0 0.0
    %335 = vmatpush1.xpose.msra.mxu0 0.0
    %336 = vmatprep.subr.mxu0 0.0
    %337 = vmatpush1.xpose.msra.mxu0 0.0
    %338 = vmatprep.subr.mxu0 0.0
    %339 = vmatpush1.xpose.msra.mxu0 0.0
    %340 = vmatprep.subr.mxu0 0.0
    %341 = vmatpush1.xpose.msra.mxu0 0.0
    %342 = vmatprep.subr.mxu0 0.0
    %343 = vmatpush1.xpose.msra.mxu0 0.0
    %344 = vmatprep.subr.mxu0 0.0
    %345 = vmatpush1.xpose.msra.mxu0 0.0
    %346 = vmatprep.subr.mxu0 0.0
    %347 = vmatpush1.xpose.msra.mxu0 0.0
    %348 = vmatprep.subr.mxu0 0.0
    %349 = vmatpush1.xpose.msra.mxu0 0.0
    %350 = vmatprep.subr.mxu0 0.0
    %351 = vmatpush1.xpose.msra.mxu0 0.0
    %352 = vmatprep.subr.mxu0 0.0
    %353 = vmatpush1.xpose.msra.mxu0 0.0
    %354 = vmatprep.subr.mxu0 0.0
    %355 = vmatpush1.xpose.msra.mxu0 0.0
    %356 = vmatprep.subr.mxu0 0.0
    %357 = vmatpush1.xpose.msra.mxu0 0.0
    %358 = vmatprep.subr.mxu0 0.0
    %359 = vmatpush1.xpose.msra.mxu0 0.0
    %360 = vmatprep.subr.mxu0 0.0
    %361 = vmatpush1.xpose.msra.mxu0 0.0
    %362 = vmatprep.subr.mxu0 0.0
    %363 = vmatpush1.xpose.msra.mxu0 0.0
    %364 = vmatprep.subr.mxu0 0.0
    %365 = vmatpush1.xpose.msra.mxu0 0.0
    %366 = vmatprep.subr.mxu0 0.0
    %367 = vmatpush1.xpose.msra.mxu0 0.0
    %368 = vmatprep.subr.mxu0 0.0
    %369 = vmatpush1.xpose.msra.mxu0 0.0
    %370 = vmatprep.subr.mxu0 0.0
    %371 = vmatpush1.xpose.msra.mxu0 0.0
    %372 = vmatprep.subr.mxu0 0.0
    %373 = vmatpush1.xpose.msra.mxu0 0.0
    %374 = vmatprep.subr.mxu0 0.0
    %375 = vmatpush1.xpose.msra.mxu0 0.0
    %376 = vmatprep.subr.mxu0 0.0
    %377 = vmatpush1.xpose.msra.mxu0 0.0
    %378 = vmatprep.subr.mxu0 0.0
    %379 = vmatpush1.xpose.msra.mxu0 0.0
    %380 = vmatprep.subr.mxu0 0.0
    %381 = vmatpush1.xpose.msra.mxu0 0.0
    %382 = vmatprep.subr.mxu0 0.0
    %383 = vmatpush1.xpose.msra.mxu0 0.0
    %384 = vmatprep.subr.mxu0 0.0
    %385 = vmatpush1.xpose.msra.mxu0 0.0
    %386 = vmatprep.mubr.f32.mxu0 0.0
    %387 = vmatmul.mubr.f32.gmra.mrb[0].mxu0 %v317
    %v388 = vpop.f32.mrb[0].mxu0
    %v389 = vadd.f32 0.0, %v388
    %v390 = vpop.f32.mrb[0].mxu0
    %391 = vdwg.mxu0
    %v393 = vsel %vm87, %v67, 0
    %v396 = vsel %vm87, %v75, 0
    %398 = vmatprep.subr.mxu0 0.0
    %399 = vmatpush1.xpose.msra.mxu0 %v396
    %400 = vmatprep.subr.mxu0 0.0
    %401 = vmatpush1.xpose.msra.mxu0 0.0
    %402 = vmatprep.subr.mxu0 0.0
    %403 = vmatpush1.xpose.msra.mxu0 0.0
    %404 = vmatprep.subr.mxu0 0.0
    %405 = vmatpush1.xpose.msra.mxu0 0.0
    %406 = vmatprep.subr.mxu0 0.0
    %407 = vmatpush1.xpose.msra.mxu0 0.0
    %408 = vmatprep.subr.mxu0 0.0
    %409 = vmatpush1.xpose.msra.mxu0 0.0
    %410 = vmatprep.subr.mxu0 0.0
    %411 = vmatpush1.xpose.msra.mxu0 0.0
    %412 = vmatprep.subr.mxu0 0.0
    %413 = vmatpush1.xpose.msra.mxu0 0.0
    %414 = vmatprep.subr.mxu0 0.0
    %415 = vmatpush1.xpose.msra.mxu0 0.0
    %416 = vmatprep.subr.mxu0 0.0
    %417 = vmatpush1.xpose.msra.mxu0 0.0
    %418 = vmatprep.subr.mxu0 0.0
    %419 = vmatpush1.xpose.msra.mxu0 0.0
    %420 = vmatprep.subr.mxu0 0.0
    %421 = vmatpush1.xpose.msra.mxu0 0.0
    %422 = vmatprep.subr.mxu0 0.0
    %423 = vmatpush1.xpose.msra.mxu0 0.0
    %424 = vmatprep.subr.mxu0 0.0
    %425 = vmatpush1.xpose.msra.mxu0 0.0
    %426 = vmatprep.subr.mxu0 0.0
    %427 = vmatpush1.xpose.msra.mxu0 0.0
    %428 = vmatprep.subr.mxu0 0.0
    %429 = vmatpush1.xpose.msra.mxu0 0.0
    %430 = vmatprep.subr.mxu0 0.0
    %431 = vmatpush1.xpose.msra.mxu0 0.0
    %432 = vmatprep.subr.mxu0 0.0
    %433 = vmatpush1.xpose.msra.mxu0 0.0
    %434 = vmatprep.subr.mxu0 0.0
    %435 = vmatpush1.xpose.msra.mxu0 0.0
    %436 = vmatprep.subr.mxu0 0.0
    %437 = vmatpush1.xpose.msra.mxu0 0.0
    %438 = vmatprep.subr.mxu0 0.0
    %439 = vmatpush1.xpose.msra.mxu0 0.0
    %440 = vmatprep.subr.mxu0 0.0
    %441 = vmatpush1.xpose.msra.mxu0 0.0
    %442 = vmatprep.subr.mxu0 0.0
    %443 = vmatpush1.xpose.msra.mxu0 0.0
    %444 = vmatprep.subr.mxu0 0.0
    %445 = vmatpush1.xpose.msra.mxu0 0.0
    %446 = vmatprep.subr.mxu0 0.0
    %447 = vmatpush1.xpose.msra.mxu0 0.0
    %448 = vmatprep.subr.mxu0 0.0
    %449 = vmatpush1.xpose.msra.mxu0 0.0
    %450 = vmatprep.subr.mxu0 0.0
    %451 = vmatpush1.xpose.msra.mxu0 0.0
    %452 = vmatprep.subr.mxu0 0.0
    %453 = vmatpush1.xpose.msra.mxu0 0.0
    %454 = vmatprep.subr.mxu0 0.0
    %455 = vmatpush1.xpose.msra.mxu0 0.0
    %456 = vmatprep.subr.mxu0 0.0
    %457 = vmatpush1.xpose.msra.mxu0 0.0
    %458 = vmatprep.subr.mxu0 0.0
    %459 = vmatpush1.xpose.msra.mxu0 0.0
    %460 = vmatprep.subr.mxu0 0.0
    %461 = vmatpush1.xpose.msra.mxu0 0.0
    %462 = vmatprep.mubr.f32.mxu0 0.0
    %463 = vmatmul.mubr.f32.gmra.mrb[0].mxu0 %v393
    %v464 = vpop.f32.mrb[0].mxu0
    %v465 = vadd.f32 0.0, %v464
    %v466 = vpop.f32.mrb[0].mxu0
    %467 = vdwg.mxu0
    %v469 = vsel %vm87, %v68, 0
    %v472 = vsel %vm87, %v76, 0
    %474 = vmatprep.subr.mxu0 0.0
    %475 = vmatpush1.xpose.msra.mxu0 %v472
    %476 = vmatprep.subr.mxu0 0.0
    %477 = vmatpush1.xpose.msra.mxu0 0.0
    %478 = vmatprep.subr.mxu0 0.0
    %479 = vmatpush1.xpose.msra.mxu0 0.0
    %480 = vmatprep.subr.mxu0 0.0
    %481 = vmatpush1.xpose.msra.mxu0 0.0
    %482 = vmatprep.subr.mxu0 0.0
    %483 = vmatpush1.xpose.msra.mxu0 0.0
    %484 = vmatprep.subr.mxu0 0.0
    %485 = vmatpush1.xpose.msra.mxu0 0.0
    %486 = vmatprep.subr.mxu0 0.0
    %487 = vmatpush1.xpose.msra.mxu0 0.0
    %488 = vmatprep.subr.mxu0 0.0
    %489 = vmatpush1.xpose.msra.mxu0 0.0
    %490 = vmatprep.subr.mxu0 0.0
    %491 = vmatpush1.xpose.msra.mxu0 0.0
    %492 = vmatprep.subr.mxu0 0.0
    %493 = vmatpush1.xpose.msra.mxu0 0.0
    %494 = vmatprep.subr.mxu0 0.0
    %495 = vmatpush1.xpose.msra.mxu0 0.0
    %496 = vmatprep.subr.mxu0 0.0
    %497 = vmatpush1.xpose.msra.mxu0 0.0
    %498 = vmatprep.subr.mxu0 0.0
    %499 = vmatpush1.xpose.msra.mxu0 0.0
    %500 = vmatprep.subr.mxu0 0.0
    %501 = vmatpush1.xpose.msra.mxu0 0.0
    %502 = vmatprep.subr.mxu0 0.0
    %503 = vmatpush1.xpose.msra.mxu0 0.0
    %504 = vmatprep.subr.mxu0 0.0
    %505 = vmatpush1.xpose.msra.mxu0 0.0
    %506 = vmatprep.subr.mxu0 0.0
    %507 = vmatpush1.xpose.msra.mxu0 0.0
    %508 = vmatprep.subr.mxu0 0.0
    %509 = vmatpush1.xpose.msra.mxu0 0.0
    %510 = vmatprep.subr.mxu0 0.0
    %511 = vmatpush1.xpose.msra.mxu0 0.0
    %512 = vmatprep.subr.mxu0 0.0
    %513 = vmatpush1.xpose.msra.mxu0 0.0
    %514 = vmatprep.subr.mxu0 0.0
    %515 = vmatpush1.xpose.msra.mxu0 0.0
    %516 = vmatprep.subr.mxu0 0.0
    %517 = vmatpush1.xpose.msra.mxu0 0.0
    %518 = vmatprep.subr.mxu0 0.0
    %519 = vmatpush1.xpose.msra.mxu0 0.0
    %520 = vmatprep.subr.mxu0 0.0
    %521 = vmatpush1.xpose.msra.mxu0 0.0
    %522 = vmatprep.subr.mxu0 0.0
    %523 = vmatpush1.xpose.msra.mxu0 0.0
    %524 = vmatprep.subr.mxu0 0.0
    %525 = vmatpush1.xpose.msra.mxu0 0.0
    %526 = vmatprep.subr.mxu0 0.0
    %527 = vmatpush1.xpose.msra.mxu0 0.0
    %528 = vmatprep.subr.mxu0 0.0
    %529 = vmatpush1.xpose.msra.mxu0 0.0
    %530 = vmatprep.subr.mxu0 0.0
    %531 = vmatpush1.xpose.msra.mxu0 0.0
    %532 = vmatprep.subr.mxu0 0.0
    %533 = vmatpush1.xpose.msra.mxu0 0.0
    %534 = vmatprep.subr.mxu0 0.0
    %535 = vmatpush1.xpose.msra.mxu0 0.0
    %536 = vmatprep.subr.mxu0 0.0
    %537 = vmatpush1.xpose.msra.mxu0 0.0
    %538 = vmatprep.mubr.f32.mxu0 0.0
    %539 = vmatmul.mubr.f32.gmra.mrb[0].mxu0 %v469
    %v540 = vpop.f32.mrb[0].mxu0
    %v541 = vadd.f32 0.0, %v540
    %v542 = vpop.f32.mrb[0].mxu0
    %543 = vdwg.mxu0
    %v545 = vsel %vm87, %v69, 0
    %v548 = vsel %vm87, %v77, 0
    %550 = vmatprep.subr.mxu0 0.0
    %551 = vmatpush1.xpose.msra.mxu0 %v548
    %552 = vmatprep.subr.mxu0 0.0
    %553 = vmatpush1.xpose.msra.mxu0 0.0
    %554 = vmatprep.subr.mxu0 0.0
    %555 = vmatpush1.xpose.msra.mxu0 0.0
    %556 = vmatprep.subr.mxu0 0.0
    %557 = vmatpush1.xpose.msra.mxu0 0.0
    %558 = vmatprep.subr.mxu0 0.0
    %559 = vmatpush1.xpose.msra.mxu0 0.0
    %560 = vmatprep.subr.mxu0 0.0
    %561 = vmatpush1.xpose.msra.mxu0 0.0
    %562 = vmatprep.subr.mxu0 0.0
    %563 = vmatpush1.xpose.msra.mxu0 0.0
    %564 = vmatprep.subr.mxu0 0.0
    %565 = vmatpush1.xpose.msra.mxu0 0.0
    %566 = vmatprep.subr.mxu0 0.0
    %567 = vmatpush1.xpose.msra.mxu0 0.0
    %568 = vmatprep.subr.mxu0 0.0
    %569 = vmatpush1.xpose.msra.mxu0 0.0
    %570 = vmatprep.subr.mxu0 0.0
    %571 = vmatpush1.xpose.msra.mxu0 0.0
    %572 = vmatprep.subr.mxu0 0.0
    %573 = vmatpush1.xpose.msra.mxu0 0.0
    %574 = vmatprep.subr.mxu0 0.0
    %575 = vmatpush1.xpose.msra.mxu0 0.0
    %576 = vmatprep.subr.mxu0 0.0
    %577 = vmatpush1.xpose.msra.mxu0 0.0
    %578 = vmatprep.subr.mxu0 0.0
    %579 = vmatpush1.xpose.msra.mxu0 0.0
    %580 = vmatprep.subr.mxu0 0.0
    %581 = vmatpush1.xpose.msra.mxu0 0.0
    %582 = vmatprep.subr.mxu0 0.0
    %583 = vmatpush1.xpose.msra.mxu0 0.0
    %584 = vmatprep.subr.mxu0 0.0
    %585 = vmatpush1.xpose.msra.mxu0 0.0
    %586 = vmatprep.subr.mxu0 0.0
    %587 = vmatpush1.xpose.msra.mxu0 0.0
    %588 = vmatprep.subr.mxu0 0.0
    %589 = vmatpush1.xpose.msra.mxu0 0.0
    %590 = vmatprep.subr.mxu0 0.0
    %591 = vmatpush1.xpose.msra.mxu0 0.0
    %592 = vmatprep.subr.mxu0 0.0
    %593 = vmatpush1.xpose.msra.mxu0 0.0
    %594 = vmatprep.subr.mxu0 0.0
    %595 = vmatpush1.xpose.msra.mxu0 0.0
    %596 = vmatprep.subr.mxu0 0.0
    %597 = vmatpush1.xpose.msra.mxu0 0.0
    %598 = vmatprep.subr.mxu0 0.0
    %599 = vmatpush1.xpose.msra.mxu0 0.0
    %600 = vmatprep.subr.mxu0 0.0
    %601 = vmatpush1.xpose.msra.mxu0 0.0
    %602 = vmatprep.subr.mxu0 0.0
    %603 = vmatpush1.xpose.msra.mxu0 0.0
    %604 = vmatprep.subr.mxu0 0.0
    %605 = vmatpush1.xpose.msra.mxu0 0.0
    %606 = vmatprep.subr.mxu0 0.0
    %607 = vmatpush1.xpose.msra.mxu0 0.0
    %608 = vmatprep.subr.mxu0 0.0
    %609 = vmatpush1.xpose.msra.mxu0 0.0
    %610 = vmatprep.subr.mxu0 0.0
    %611 = vmatpush1.xpose.msra.mxu0 0.0
    %612 = vmatprep.subr.mxu0 0.0
    %613 = vmatpush1.xpose.msra.mxu0 0.0
    %614 = vmatprep.mubr.f32.mxu0 0.0
    %615 = vmatmul.mubr.f32.gmra.mrb[0].mxu0 %v545
    %v616 = vpop.f32.mrb[0].mxu0
    %v617 = vadd.f32 0.0, %v616
    %v618 = vpop.f32.mrb[0].mxu0
    %619 = vdwg.mxu0
    %v621 = vsel %vm87, %v70, 0
    %v624 = vsel %vm87, %v78, 0
    %626 = vmatprep.subr.mxu0 0.0
    %627 = vmatpush1.xpose.msra.mxu0 %v624
    %628 = vmatprep.subr.mxu0 0.0
    %629 = vmatpush1.xpose.msra.mxu0 0.0
    %630 = vmatprep.subr.mxu0 0.0
    %631 = vmatpush1.xpose.msra.mxu0 0.0
    %632 = vmatprep.subr.mxu0 0.0
    %633 = vmatpush1.xpose.msra.mxu0 0.0
    %634 = vmatprep.subr.mxu0 0.0
    %635 = vmatpush1.xpose.msra.mxu0 0.0
    %636 = vmatprep.subr.mxu0 0.0
    %637 = vmatpush1.xpose.msra.mxu0 0.0
    %638 = vmatprep.subr.mxu0 0.0
    %639 = vmatpush1.xpose.msra.mxu0 0.0
    %640 = vmatprep.subr.mxu0 0.0
    %641 = vmatpush1.xpose.msra.mxu0 0.0
    %642 = vmatprep.subr.mxu0 0.0
    %643 = vmatpush1.xpose.msra.mxu0 0.0
    %644 = vmatprep.subr.mxu0 0.0
    %645 = vmatpush1.xpose.msra.mxu0 0.0
    %646 = vmatprep.subr.mxu0 0.0
    %647 = vmatpush1.xpose.msra.mxu0 0.0
    %648 = vmatprep.subr.mxu0 0.0
    %649 = vmatpush1.xpose.msra.mxu0 0.0
    %650 = vmatprep.subr.mxu0 0.0
    %651 = vmatpush1.xpose.msra.mxu0 0.0
    %652 = vmatprep.subr.mxu0 0.0
    %653 = vmatpush1.xpose.msra.mxu0 0.0
    %654 = vmatprep.subr.mxu0 0.0
    %655 = vmatpush1.xpose.msra.mxu0 0.0
    %656 = vmatprep.subr.mxu0 0.0
    %657 = vmatpush1.xpose.msra.mxu0 0.0
    %658 = vmatprep.subr.mxu0 0.0
    %659 = vmatpush1.xpose.msra.mxu0 0.0
    %660 = vmatprep.subr.mxu0 0.0
    %661 = vmatpush1.xpose.msra.mxu0 0.0
    %662 = vmatprep.subr.mxu0 0.0
    %663 = vmatpush1.xpose.msra.mxu0 0.0
    %664 = vmatprep.subr.mxu0 0.0
    %665 = vmatpush1.xpose.msra.mxu0 0.0
    %666 = vmatprep.subr.mxu0 0.0
    %667 = vmatpush1.xpose.msra.mxu0 0.0
    %668 = vmatprep.subr.mxu0 0.0
    %669 = vmatpush1.xpose.msra.mxu0 0.0
    %670 = vmatprep.subr.mxu0 0.0
    %671 = vmatpush1.xpose.msra.mxu0 0.0
    %672 = vmatprep.subr.mxu0 0.0
    %673 = vmatpush1.xpose.msra.mxu0 0.0
    %674 = vmatprep.subr.mxu0 0.0
    %675 = vmatpush1.xpose.msra.mxu0 0.0
    %676 = vmatprep.subr.mxu0 0.0
    %677 = vmatpush1.xpose.msra.mxu0 0.0
    %678 = vmatprep.subr.mxu0 0.0
    %679 = vmatpush1.xpose.msra.mxu0 0.0
    %680 = vmatprep.subr.mxu0 0.0
    %681 = vmatpush1.xpose.msra.mxu0 0.0
    %682 = vmatprep.subr.mxu0 0.0
    %683 = vmatpush1.xpose.msra.mxu0 0.0
    %684 = vmatprep.subr.mxu0 0.0
    %685 = vmatpush1.xpose.msra.mxu0 0.0
    %686 = vmatprep.subr.mxu0 0.0
    %687 = vmatpush1.xpose.msra.mxu0 0.0
    %688 = vmatprep.subr.mxu0 0.0
    %689 = vmatpush1.xpose.msra.mxu0 0.0
    %690 = vmatprep.mubr.f32.mxu0 0.0
    %691 = vmatmul.mubr.f32.gmra.mrb[0].mxu0 %v621
    %v692 = vpop.f32.mrb[0].mxu0
    %v693 = vadd.f32 0.0, %v692
    %v694 = vpop.f32.mrb[0].mxu0
    %695 = vdwg.mxu0
    %v696 = vlaneseq
    %v697 = vshrl.u32 %v696, 7
    %v698 = vstv %s44
    %v699 = vadd.s32 %v698, %v697
    %v700 = vlaneseq
    %v701 = vand.u32 %v700, 127
    %v702 = vstv %s46
    %v703 = vadd.s32 %v702, %v701
    %vm704 = vcmp.le.s32.totalorder %v703, %v699
    %v705 = vsub.s32 %v699, %v703
    %vm706 = vcmp.lt.s32.totalorder %v705, 4
    %vm707 = vmand %vm704, %vm706
    %v708 = vsel %vm707, 1, 0
    %vm709 = vcmp.eq.s32.totalorder %v708, 1
    %v710 = vsel %vm709, %v161, -1e+30
    %v711 = vsel %vm709, %v237, -1e+30
    %v712 = vsel %vm709, %v313, -1e+30
    %v713 = vsel %vm709, %v389, -1e+30
    %v714 = vsel %vm709, %v465, -1e+30
    %v715 = vsel %vm709, %v541, -1e+30
    %v716 = vsel %vm709, %v617, -1e+30
    %v717 = vsel %vm709, %v693, -1e+30
    %v718 = vld [vmem:[#allocation2] sm:$0xff]
    %v719 = vld [vmem:[#allocation2 + $0x8] sm:$0xff]
    %v720 = vld [vmem:[#allocation2 + $0x10] sm:$0xff]
    %v721 = vld [vmem:[#allocation2 + $0x18] sm:$0xff]
    %v722 = vld [vmem:[#allocation2 + $0x20] sm:$0xff]
    %v723 = vld [vmem:[#allocation2 + $0x28] sm:$0xff]
    %v724 = vld [vmem:[#allocation2 + $0x30] sm:$0xff]
    %v725 = vld [vmem:[#allocation2 + $0x38] sm:$0xff]
    %v726 = vsel %vm87, %v710, -inf
    %727 = vmax.xlane.f32.xlu0 %v726
    %v728 = vpop.xlane.xlu0 %727
    %v729 = vsel %vm87, %v711, -inf
    %730 = vmax.xlane.f32.xlu0 %v729
    %v731 = vpop.xlane.xlu0 %730
    %v732 = vsel %vm87, %v712, -inf
    %733 = vmax.xlane.f32.xlu0 %v732
    %v734 = vpop.xlane.xlu0 %733
    %v735 = vsel %vm87, %v713, -inf
    %736 = vmax.xlane.f32.xlu0 %v735
    %v737 = vpop.xlane.xlu0 %736
    %v738 = vsel %vm87, %v714, -inf
    %739 = vmax.xlane.f32.xlu0 %v738
    %v740 = vpop.xlane.xlu0 %739
    %v741 = vsel %vm87, %v715, -inf
    %742 = vmax.xlane.f32.xlu0 %v741
    %v743 = vpop.xlane.xlu0 %742
    %v744 = vsel %vm87, %v716, -inf
    %745 = vmax.xlane.f32.xlu0 %v744
    %v746 = vpop.xlane.xlu0 %745
    %v747 = vsel %vm87, %v717, -inf
    %748 = vmax.xlane.f32.xlu0 %v747
    %v749 = vpop.xlane.xlu0 %748
    %v750 = vmax.f32 %v718, %v728
    %v751 = vmax.f32 %v719, %v731
    %v752 = vmax.f32 %v720, %v734
    %v753 = vmax.f32 %v721, %v737
    %v754 = vmax.f32 %v722, %v740
    %v755 = vmax.f32 %v723, %v743
    %v756 = vmax.f32 %v724, %v746
    %v757 = vmax.f32 %v725, %v749
    %v758 = vsub.f32 %v718, %v750
    %v759 = vsub.f32 %v719, %v751
    %v760 = vsub.f32 %v720, %v752
    %v761 = vsub.f32 %v721, %v753
    %v762 = vsub.f32 %v722, %v754
    %v763 = vsub.f32 %v723, %v755
    %v764 = vsub.f32 %v724, %v756
    %v765 = vsub.f32 %v725, %v757
    %v766 = vmul.f32 %v758, 1.442695
    %v767 = vpow.pop %v766
    %v768 = vmul.f32 %v759, 1.442695
    %v769 = vpow.pop %v768
    %v770 = vmul.f32 %v760, 1.442695
    %v771 = vpow.pop %v770
    %v772 = vmul.f32 %v761, 1.442695
    %v773 = vpow.pop %v772
    %v774 = vmul.f32 %v762, 1.442695
    %v775 = vpow.pop %v774
    %v776 = vmul.f32 %v763, 1.442695
    %v777 = vpow.pop %v776
    %v778 = vmul.f32 %v764, 1.442695
    %v779 = vpow.pop %v778
    %v780 = vmul.f32 %v765, 1.442695
    %v781 = vpow.pop %v780
    %783 = vset.pattern.permute.xlu0 0
    %784 = vperm.xlu0 %783, %v750
    %v785 = vpop.permute.xlu0 %784
    %788 = vset.pattern.permute.xlu0 0
    %789 = vperm.xlu0 %788, %v751
    %v790 = vpop.permute.xlu0 %789
    %793 = vset.pattern.permute.xlu0 0
    %794 = vperm.xlu0 %793, %v752
    %v795 = vpop.permute.xlu0 %794
    %798 = vset.pattern.permute.xlu0 0
    %799 = vperm.xlu0 %798, %v753
    %v800 = vpop.permute.xlu0 %799
    %803 = vset.pattern.permute.xlu0 0
    %804 = vperm.xlu0 %803, %v754
    %v805 = vpop.permute.xlu0 %804
    %808 = vset.pattern.permute.xlu0 0
    %809 = vperm.xlu0 %808, %v755
    %v810 = vpop.permute.xlu0 %809
    %813 = vset.pattern.permute.xlu0 0
    %814 = vperm.xlu0 %813, %v756
    %v815 = vpop.permute.xlu0 %814
    %818 = vset.pattern.permute.xlu0 0
    %819 = vperm.xlu0 %818, %v757
    %v820 = vpop.permute.xlu0 %819
    %v822 = vsub.f32 %v710, %v785
    %v823 = vsub.f32 %v711, %v790
    %v824 = vsub.f32 %v712, %v795
    %v825 = vsub.f32 %v713, %v800
    %v826 = vsub.f32 %v714, %v805
    %v827 = vsub.f32 %v715, %v810
    %v828 = vsub.f32 %v716, %v815
    %v829 = vsub.f32 %v717, %v820
    %v830 = vmul.f32 %v822, 1.442695
    %v831 = vpow.pop %v830
    %v832 = vmul.f32 %v823, 1.442695
    %v833 = vpow.pop %v832
    %v834 = vmul.f32 %v824, 1.442695
    %v835 = vpow.pop %v834
    %v836 = vmul.f32 %v825, 1.442695
    %v837 = vpow.pop %v836
    %v838 = vmul.f32 %v826, 1.442695
    %v839 = vpow.pop %v838
    %v840 = vmul.f32 %v827, 1.442695
    %v841 = vpow.pop %v840
    %v842 = vmul.f32 %v828, 1.442695
    %v843 = vpow.pop %v842
    %v844 = vmul.f32 %v829, 1.442695
    %v845 = vpow.pop %v844
    %v846 = vsel %vm709, %v831, 0.0
    %v847 = vsel %vm709, %v833, 0.0
    %v848 = vsel %vm709, %v835, 0.0
    %v849 = vsel %vm709, %v837, 0.0
    %v850 = vsel %vm709, %v839, 0.0
    %v851 = vsel %vm709, %v841, 0.0
    %v852 = vsel %vm709, %v843, 0.0
    %v853 = vsel %vm709, %v845, 0.0
    %v854 = vld [vmem:[#allocation3] sm:$0xff]
    %v855 = vld [vmem:[#allocation3 + $0x8] sm:$0xff]
    %v856 = vld [vmem:[#allocation3 + $0x10] sm:$0xff]
    %v857 = vld [vmem:[#allocation3 + $0x18] sm:$0xff]
    %v858 = vld [vmem:[#allocation3 + $0x20] sm:$0xff]
    %v859 = vld [vmem:[#allocation3 + $0x28] sm:$0xff]
    %v860 = vld [vmem:[#allocation3 + $0x30] sm:$0xff]
    %v861 = vld [vmem:[#allocation3 + $0x38] sm:$0xff]
    %v862 = vmul.f32 %v767, %v854
    %v863 = vmul.f32 %v769, %v855
    %v864 = vmul.f32 %v771, %v856
    %v865 = vmul.f32 %v773, %v857
    %v866 = vmul.f32 %v775, %v858
    %v867 = vmul.f32 %v777, %v859
    %v868 = vmul.f32 %v779, %v860
    %v869 = vmul.f32 %v781, %v861
    %v870 = vsel %vm87, %v846, 0.0
    %871 = vadd.xlane.f32.xlu0 %v870
    %v872 = vpop.xlane.xlu0 %871
    %v873 = vsel %vm87, %v847, 0.0
    %874 = vadd.xlane.f32.xlu0 %v873
    %v875 = vpop.xlane.xlu0 %874
    %v876 = vsel %vm87, %v848, 0.0
    %877 = vadd.xlane.f32.xlu0 %v876
    %v878 = vpop.xlane.xlu0 %877
    %v879 = vsel %vm87, %v849, 0.0
    %880 = vadd.xlane.f32.xlu0 %v879
    %v881 = vpop.xlane.xlu0 %880
    %v882 = vsel %vm87, %v850, 0.0
    %883 = vadd.xlane.f32.xlu0 %v882
    %v884 = vpop.xlane.xlu0 %883
    %v885 = vsel %vm87, %v851, 0.0
    %886 = vadd.xlane.f32.xlu0 %v885
    %v887 = vpop.xlane.xlu0 %886
    %v888 = vsel %vm87, %v852, 0.0
    %889 = vadd.xlane.f32.xlu0 %v888
    %v890 = vpop.xlane.xlu0 %889
    %v891 = vsel %vm87, %v853, 0.0
    %892 = vadd.xlane.f32.xlu0 %v891
    %v893 = vpop.xlane.xlu0 %892
    %v894 = vadd.f32 %v862, %v872
    %v895 = vadd.f32 %v863, %v875
    %v896 = vadd.f32 %v864, %v878
    %v897 = vadd.f32 %v865, %v881
    %v898 = vadd.f32 %v866, %v884
    %v899 = vadd.f32 %v867, %v887
    %v900 = vadd.f32 %v868, %v890
    %v901 = vadd.f32 %v869, %v893
    %vm902 = vcmask 7168
    %903 = vst.msk [vmem:[#allocation3] sm:$0xff] %vm902, %v894
    %904 = vst.msk [vmem:[#allocation3 + $0x8] sm:$0xff] %vm902, %v895
    %905 = vst.msk [vmem:[#allocation3 + $0x10] sm:$0xff] %vm902, %v896
    %906 = vst.msk [vmem:[#allocation3 + $0x18] sm:$0xff] %vm902, %v897
    %907 = vst.msk [vmem:[#allocation3 + $0x20] sm:$0xff] %vm902, %v898
    %908 = vst.msk [vmem:[#allocation3 + $0x28] sm:$0xff] %vm902, %v899
    %909 = vst.msk [vmem:[#allocation3 + $0x30] sm:$0xff] %vm902, %v900
    %910 = vst.msk [vmem:[#allocation3 + $0x38] sm:$0xff] %vm902, %v901
    %v911 = vld [vmem:[#allocation4] sm:$0xff]
    %v912 = vld [vmem:[#allocation4 + $0x8] sm:$0xff]
    %v913 = vld [vmem:[#allocation4 + $0x10] sm:$0xff]
    %v914 = vld [vmem:[#allocation4 + $0x18] sm:$0xff]
    %v915 = vld [vmem:[#allocation4 + $0x20] sm:$0xff]
    %v916 = vld [vmem:[#allocation4 + $0x28] sm:$0xff]
    %v917 = vld [vmem:[#allocation4 + $0x30] sm:$0xff]
    %v918 = vld [vmem:[#allocation4 + $0x38] sm:$0xff]
    %920 = vset.pattern.permute.xlu0 0
    %921 = vperm.xlu0 %920, %v767
    %v922 = vpop.permute.xlu0 %921
    %925 = vset.pattern.permute.xlu0 0
    %926 = vperm.xlu0 %925, %v769
    %v927 = vpop.permute.xlu0 %926
    %930 = vset.pattern.permute.xlu0 0
    %931 = vperm.xlu0 %930, %v771
    %v932 = vpop.permute.xlu0 %931
    %935 = vset.pattern.permute.xlu0 0
    %936 = vperm.xlu0 %935, %v773
    %v937 = vpop.permute.xlu0 %936
    %940 = vset.pattern.permute.xlu0 0
    %941 = vperm.xlu0 %940, %v775
    %v942 = vpop.permute.xlu0 %941
    %945 = vset.pattern.permute.xlu0 0
    %946 = vperm.xlu0 %945, %v777
    %v947 = vpop.permute.xlu0 %946
    %950 = vset.pattern.permute.xlu0 0
    %951 = vperm.xlu0 %950, %v779
    %v952 = vpop.permute.xlu0 %951
    %955 = vset.pattern.permute.xlu0 0
    %956 = vperm.xlu0 %955, %v781
    %v957 = vpop.permute.xlu0 %956
    %v959 = vmul.f32 %v922, %v911
    %v960 = vmul.f32 %v927, %v912
    %v961 = vmul.f32 %v932, %v913
    %v962 = vmul.f32 %v937, %v914
    %v963 = vmul.f32 %v942, %v915
    %v964 = vmul.f32 %v947, %v916
    %v965 = vmul.f32 %v952, %v917
    %v966 = vmul.f32 %v957, %v918
    %v968 = vsel %vm87, %v846, 0
    %970 = vmatprep.subr.mxu0 0.0
    %971 = vmatpush1.msra.mxu0 %v79
    %972 = vmatprep.subr.mxu0 0.0
    %973 = vmatpush1.msra.mxu0 0.0
    %974 = vmatprep.subr.mxu0 0.0
    %975 = vmatpush1.msra.mxu0 0.0
    %976 = vmatprep.subr.mxu0 0.0
    %977 = vmatpush1.msra.mxu0 0.0
    %978 = vmatprep.subr.mxu0 0.0
    %979 = vmatpush1.msra.mxu0 0.0
    %980 = vmatprep.subr.mxu0 0.0
    %981 = vmatpush1.msra.mxu0 0.0
    %982 = vmatprep.subr.mxu0 0.0
    %983 = vmatpush1.msra.mxu0 0.0
    %984 = vmatprep.subr.mxu0 0.0
    %985 = vmatpush1.msra.mxu0 0.0
    %986 = vmatprep.subr.mxu0 0.0
    %987 = vmatpush1.msra.mxu0 0.0
    %988 = vmatprep.subr.mxu0 0.0
    %989 = vmatpush1.msra.mxu0 0.0
    %990 = vmatprep.subr.mxu0 0.0
    %991 = vmatpush1.msra.mxu0 0.0
    %992 = vmatprep.subr.mxu0 0.0
    %993 = vmatpush1.msra.mxu0 0.0
    %994 = vmatprep.subr.mxu0 0.0
    %995 = vmatpush1.msra.mxu0 0.0
    %996 = vmatprep.subr.mxu0 0.0
    %997 = vmatpush1.msra.mxu0 0.0
    %998 = vmatprep.subr.mxu0 0.0
    %999 = vmatpush1.msra.mxu0 0.0
    %1000 = vmatprep.subr.mxu0 0.0
    %1001 = vmatpush1.msra.mxu0 0.0
    %1002 = vmatprep.subr.mxu0 0.0
    %1003 = vmatpush1.msra.mxu0 0.0
    %1004 = vmatprep.subr.mxu0 0.0
    %1005 = vmatpush1.msra.mxu0 0.0
    %1006 = vmatprep.subr.mxu0 0.0
    %1007 = vmatpush1.msra.mxu0 0.0
    %1008 = vmatprep.subr.mxu0 0.0
    %1009 = vmatpush1.msra.mxu0 0.0
    %1010 = vmatprep.subr.mxu0 0.0
    %1011 = vmatpush1.msra.mxu0 0.0
    %1012 = vmatprep.subr.mxu0 0.0
    %1013 = vmatpush1.msra.mxu0 0.0
    %1014 = vmatprep.subr.mxu0 0.0
    %1015 = vmatpush1.msra.mxu0 0.0
    %1016 = vmatprep.subr.mxu0 0.0
    %1017 = vmatpush1.msra.mxu0 0.0
    %1018 = vmatprep.subr.mxu0 0.0
    %1019 = vmatpush1.msra.mxu0 0.0
    %1020 = vmatprep.subr.mxu0 0.0
    %1021 = vmatpush1.msra.mxu0 0.0
    %1022 = vmatprep.subr.mxu0 0.0
    %1023 = vmatpush1.msra.mxu0 0.0
    %1024 = vmatprep.subr.mxu0 0.0
    %1025 = vmatpush1.msra.mxu0 0.0
    %1026 = vmatprep.subr.mxu0 0.0
    %1027 = vmatpush1.msra.mxu0 0.0
    %1028 = vmatprep.subr.mxu0 0.0
    %1029 = vmatpush1.msra.mxu0 0.0
    %1030 = vmatprep.subr.mxu0 0.0
    %1031 = vmatpush1.msra.mxu0 0.0
    %1032 = vmatprep.subr.mxu0 0.0
    %1033 = vmatpush1.msra.mxu0 0.0
    %1034 = vmatprep.mubr.f32.mxu0 0.0
    %1035 = vmatmul.mubr.f32.gmra.mrb[0].mxu0 %v968
    %v1036 = vpop.f32.mrb[0].mxu0
    %v1037 = vadd.f32 0.0, %v1036
    %v1038 = vpop.f32.mrb[0].mxu0
    %1039 = vdwg.mxu0
    %v1041 = vsel %vm87, %v847, 0
    %1043 = vmatprep.subr.mxu0 0.0
    %1044 = vmatpush1.msra.mxu0 %v80
    %1045 = vmatprep.subr.mxu0 0.0
    %1046 = vmatpush1.msra.mxu0 0.0
    %1047 = vmatprep.subr.mxu0 0.0
    %1048 = vmatpush1.msra.mxu0 0.0
    %1049 = vmatprep.subr.mxu0 0.0
    %1050 = vmatpush1.msra.mxu0 0.0
    %1051 = vmatprep.subr.mxu0 0.0
    %1052 = vmatpush1.msra.mxu0 0.0
    %1053 = vmatprep.subr.mxu0 0.0
    %1054 = vmatpush1.msra.mxu0 0.0
    %1055 = vmatprep.subr.mxu0 0.0
    %1056 = vmatpush1.msra.mxu0 0.0
    %1057 = vmatprep.subr.mxu0 0.0
    %1058 = vmatpush1.msra.mxu0 0.0
    %1059 = vmatprep.subr.mxu0 0.0
    %1060 = vmatpush1.msra.mxu0 0.0
    %1061 = vmatprep.subr.mxu0 0.0
    %1062 = vmatpush1.msra.mxu0 0.0
    %1063 = vmatprep.subr.mxu0 0.0
    %1064 = vmatpush1.msra.mxu0 0.0
    %1065 = vmatprep.subr.mxu0 0.0
    %1066 = vmatpush1.msra.mxu0 0.0
    %1067 = vmatprep.subr.mxu0 0.0
    %1068 = vmatpush1.msra.mxu0 0.0
    %1069 = vmatprep.subr.mxu0 0.0
    %1070 = vmatpush1.msra.mxu0 0.0
    %1071 = vmatprep.subr.mxu0 0.0
    %1072 = vmatpush1.msra.mxu0 0.0
    %1073 = vmatprep.subr.mxu0 0.0
    %1074 = vmatpush1.msra.mxu0 0.0
    %1075 = vmatprep.subr.mxu0 0.0
    %1076 = vmatpush1.msra.mxu0 0.0
    %1077 = vmatprep.subr.mxu0 0.0
    %1078 = vmatpush1.msra.mxu0 0.0
    %1079 = vmatprep.subr.mxu0 0.0
    %1080 = vmatpush1.msra.mxu0 0.0
    %1081 = vmatprep.subr.mxu0 0.0
    %1082 = vmatpush1.msra.mxu0 0.0
    %1083 = vmatprep.subr.mxu0 0.0
    %1084 = vmatpush1.msra.mxu0 0.0
    %1085 = vmatprep.subr.mxu0 0.0
    %1086 = vmatpush1.msra.mxu0 0.0
    %1087 = vmatprep.subr.mxu0 0.0
    %1088 = vmatpush1.msra.mxu0 0.0
    %1089 = vmatprep.subr.mxu0 0.0
    %1090 = vmatpush1.msra.mxu0 0.0
    %1091 = vmatprep.subr.mxu0 0.0
    %1092 = vmatpush1.msra.mxu0 0.0
    %1093 = vmatprep.subr.mxu0 0.0
    %1094 = vmatpush1.msra.mxu0 0.0
    %1095 = vmatprep.subr.mxu0 0.0
    %1096 = vmatpush1.msra.mxu0 0.0
    %1097 = vmatprep.subr.mxu0 0.0
    %1098 = vmatpush1.msra.mxu0 0.0
    %1099 = vmatprep.subr.mxu0 0.0
    %1100 = vmatpush1.msra.mxu0 0.0
    %1101 = vmatprep.subr.mxu0 0.0
    %1102 = vmatpush1.msra.mxu0 0.0
    %1103 = vmatprep.subr.mxu0 0.0
    %1104 = vmatpush1.msra.mxu0 0.0
    %1105 = vmatprep.subr.mxu0 0.0
    %1106 = vmatpush1.msra.mxu0 0.0
    %1107 = vmatprep.mubr.f32.mxu0 0.0
    %1108 = vmatmul.mubr.f32.gmra.mrb[0].mxu0 %v1041
    %v1109 = vpop.f32.mrb[0].mxu0
    %v1110 = vadd.f32 0.0, %v1109
    %v1111 = vpop.f32.mrb[0].mxu0
    %1112 = vdwg.mxu0
    %v1114 = vsel %vm87, %v848, 0
    %1116 = vmatprep.subr.mxu0 0.0
    %1117 = vmatpush1.msra.mxu0 %v81
    %1118 = vmatprep.subr.mxu0 0.0
    %1119 = vmatpush1.msra.mxu0 0.0
    %1120 = vmatprep.subr.mxu0 0.0
    %1121 = vmatpush1.msra.mxu0 0.0
    %1122 = vmatprep.subr.mxu0 0.0
    %1123 = vmatpush1.msra.mxu0 0.0
    %1124 = vmatprep.subr.mxu0 0.0
    %1125 = vmatpush1.msra.mxu0 0.0
    %1126 = vmatprep.subr.mxu0 0.0
    %1127 = vmatpush1.msra.mxu0 0.0
    %1128 = vmatprep.subr.mxu0 0.0
    %1129 = vmatpush1.msra.mxu0 0.0
    %1130 = vmatprep.subr.mxu0 0.0
    %1131 = vmatpush1.msra.mxu0 0.0
    %1132 = vmatprep.subr.mxu0 0.0
    %1133 = vmatpush1.msra.mxu0 0.0
    %1134 = vmatprep.subr.mxu0 0.0
    %1135 = vmatpush1.msra.mxu0 0.0
    %1136 = vmatprep.subr.mxu0 0.0
    %1137 = vmatpush1.msra.mxu0 0.0
    %1138 = vmatprep.subr.mxu0 0.0
    %1139 = vmatpush1.msra.mxu0 0.0
    %1140 = vmatprep.subr.mxu0 0.0
    %1141 = vmatpush1.msra.mxu0 0.0
    %1142 = vmatprep.subr.mxu0 0.0
    %1143 = vmatpush1.msra.mxu0 0.0
    %1144 = vmatprep.subr.mxu0 0.0
    %1145 = vmatpush1.msra.mxu0 0.0
    %1146 = vmatprep.subr.mxu0 0.0
    %1147 = vmatpush1.msra.mxu0 0.0
    %1148 = vmatprep.subr.mxu0 0.0
    %1149 = vmatpush1.msra.mxu0 0.0
    %1150 = vmatprep.subr.mxu0 0.0
    %1151 = vmatpush1.msra.mxu0 0.0
    %1152 = vmatprep.subr.mxu0 0.0
    %1153 = vmatpush1.msra.mxu0 0.0
    %1154 = vmatprep.subr.mxu0 0.0
    %1155 = vmatpush1.msra.mxu0 0.0
    %1156 = vmatprep.subr.mxu0 0.0
    %1157 = vmatpush1.msra.mxu0 0.0
    %1158 = vmatprep.subr.mxu0 0.0
    %1159 = vmatpush1.msra.mxu0 0.0
    %1160 = vmatprep.subr.mxu0 0.0
    %1161 = vmatpush1.msra.mxu0 0.0
    %1162 = vmatprep.subr.mxu0 0.0
    %1163 = vmatpush1.msra.mxu0 0.0
    %1164 = vmatprep.subr.mxu0 0.0
    %1165 = vmatpush1.msra.mxu0 0.0
    %1166 = vmatprep.subr.mxu0 0.0
    %1167 = vmatpush1.msra.mxu0 0.0
    %1168 = vmatprep.subr.mxu0 0.0
    %1169 = vmatpush1.msra.mxu0 0.0
    %1170 = vmatprep.subr.mxu0 0.0
    %1171 = vmatpush1.msra.mxu0 0.0
    %1172 = vmatprep.subr.mxu0 0.0
    %1173 = vmatpush1.msra.mxu0 0.0
    %1174 = vmatprep.subr.mxu0 0.0
    %1175 = vmatpush1.msra.mxu0 0.0
    %1176 = vmatprep.subr.mxu0 0.0
    %1177 = vmatpush1.msra.mxu0 0.0
    %1178 = vmatprep.subr.mxu0 0.0
    %1179 = vmatpush1.msra.mxu0 0.0
    %1180 = vmatprep.mubr.f32.mxu0 0.0
    %1181 = vmatmul.mubr.f32.gmra.mrb[0].mxu0 %v1114
    %v1182 = vpop.f32.mrb[0].mxu0
    %v1183 = vadd.f32 0.0, %v1182
    %v1184 = vpop.f32.mrb[0].mxu0
    %1185 = vdwg.mxu0
    %v1187 = vsel %vm87, %v849, 0
    %1189 = vmatprep.subr.mxu0 0.0
    %1190 = vmatpush1.msra.mxu0 %v82
    %1191 = vmatprep.subr.mxu0 0.0
    %1192 = vmatpush1.msra.mxu0 0.0
    %1193 = vmatprep.subr.mxu0 0.0
    %1194 = vmatpush1.msra.mxu0 0.0
    %1195 = vmatprep.subr.mxu0 0.0
    %1196 = vmatpush1.msra.mxu0 0.0
    %1197 = vmatprep.subr.mxu0 0.0
    %1198 = vmatpush1.msra.mxu0 0.0
    %1199 = vmatprep.subr.mxu0 0.0
    %1200 = vmatpush1.msra.mxu0 0.0
    %1201 = vmatprep.subr.mxu0 0.0
    %1202 = vmatpush1.msra.mxu0 0.0
    %1203 = vmatprep.subr.mxu0 0.0
    %1204 = vmatpush1.msra.mxu0 0.0
    %1205 = vmatprep.subr.mxu0 0.0
    %1206 = vmatpush1.msra.mxu0 0.0
    %1207 = vmatprep.subr.mxu0 0.0
    %1208 = vmatpush1.msra.mxu0 0.0
    %1209 = vmatprep.subr.mxu0 0.0
    %1210 = vmatpush1.msra.mxu0 0.0
    %1211 = vmatprep.subr.mxu0 0.0
    %1212 = vmatpush1.msra.mxu0 0.0
    %1213 = vmatprep.subr.mxu0 0.0
    %1214 = vmatpush1.msra.mxu0 0.0
    %1215 = vmatprep.subr.mxu0 0.0
    %1216 = vmatpush1.msra.mxu0 0.0
    %1217 = vmatprep.subr.mxu0 0.0
    %1218 = vmatpush1.msra.mxu0 0.0
    %1219 = vmatprep.subr.mxu0 0.0
    %1220 = vmatpush1.msra.mxu0 0.0
    %1221 = vmatprep.subr.mxu0 0.0
    %1222 = vmatpush1.msra.mxu0 0.0
    %1223 = vmatprep.subr.mxu0 0.0
    %1224 = vmatpush1.msra.mxu0 0.0
    %1225 = vmatprep.subr.mxu0 0.0
    %1226 = vmatpush1.msra.mxu0 0.0
    %1227 = vmatprep.subr.mxu0 0.0
    %1228 = vmatpush1.msra.mxu0 0.0
    %1229 = vmatprep.subr.mxu0 0.0
    %1230 = vmatpush1.msra.mxu0 0.0
    %1231 = vmatprep.subr.mxu0 0.0
    %1232 = vmatpush1.msra.mxu0 0.0
    %1233 = vmatprep.subr.mxu0 0.0
    %1234 = vmatpush1.msra.mxu0 0.0
    %1235 = vmatprep.subr.mxu0 0.0
    %1236 = vmatpush1.msra.mxu0 0.0
    %1237 = vmatprep.subr.mxu0 0.0
    %1238 = vmatpush1.msra.mxu0 0.0
    %1239 = vmatprep.subr.mxu0 0.0
    %1240 = vmatpush1.msra.mxu0 0.0
    %1241 = vmatprep.subr.mxu0 0.0
    %1242 = vmatpush1.msra.mxu0 0.0
    %1243 = vmatprep.subr.mxu0 0.0
    %1244 = vmatpush1.msra.mxu0 0.0
    %1245 = vmatprep.subr.mxu0 0.0
    %1246 = vmatpush1.msra.mxu0 0.0
    %1247 = vmatprep.subr.mxu0 0.0
    %1248 = vmatpush1.msra.mxu0 0.0
    %1249 = vmatprep.subr.mxu0 0.0
    %1250 = vmatpush1.msra.mxu0 0.0
    %1251 = vmatprep.subr.mxu0 0.0
    %1252 = vmatpush1.msra.mxu0 0.0
    %1253 = vmatprep.mubr.f32.mxu0 0.0
    %1254 = vmatmul.mubr.f32.gmra.mrb[0].mxu0 %v1187
    %v1255 = vpop.f32.mrb[0].mxu0
    %v1256 = vadd.f32 0.0, %v1255
    %v1257 = vpop.f32.mrb[0].mxu0
    %1258 = vdwg.mxu0
    %v1260 = vsel %vm87, %v850, 0
    %1262 = vmatprep.subr.mxu0 0.0
    %1263 = vmatpush1.msra.mxu0 %v83
    %1264 = vmatprep.subr.mxu0 0.0
    %1265 = vmatpush1.msra.mxu0 0.0
    %1266 = vmatprep.subr.mxu0 0.0
    %1267 = vmatpush1.msra.mxu0 0.0
    %1268 = vmatprep.subr.mxu0 0.0
    %1269 = vmatpush1.msra.mxu0 0.0
    %1270 = vmatprep.subr.mxu0 0.0
    %1271 = vmatpush1.msra.mxu0 0.0
    %1272 = vmatprep.subr.mxu0 0.0
    %1273 = vmatpush1.msra.mxu0 0.0
    %1274 = vmatprep.subr.mxu0 0.0
    %1275 = vmatpush1.msra.mxu0 0.0
    %1276 = vmatprep.subr.mxu0 0.0
    %1277 = vmatpush1.msra.mxu0 0.0
    %1278 = vmatprep.subr.mxu0 0.0
    %1279 = vmatpush1.msra.mxu0 0.0
    %1280 = vmatprep.subr.mxu0 0.0
    %1281 = vmatpush1.msra.mxu0 0.0
    %1282 = vmatprep.subr.mxu0 0.0
    %1283 = vmatpush1.msra.mxu0 0.0
    %1284 = vmatprep.subr.mxu0 0.0
    %1285 = vmatpush1.msra.mxu0 0.0
    %1286 = vmatprep.subr.mxu0 0.0
    %1287 = vmatpush1.msra.mxu0 0.0
    %1288 = vmatprep.subr.mxu0 0.0
    %1289 = vmatpush1.msra.mxu0 0.0
    %1290 = vmatprep.subr.mxu0 0.0
    %1291 = vmatpush1.msra.mxu0 0.0
    %1292 = vmatprep.subr.mxu0 0.0
    %1293 = vmatpush1.msra.mxu0 0.0
    %1294 = vmatprep.subr.mxu0 0.0
    %1295 = vmatpush1.msra.mxu0 0.0
    %1296 = vmatprep.subr.mxu0 0.0
    %1297 = vmatpush1.msra.mxu0 0.0
    %1298 = vmatprep.subr.mxu0 0.0
    %1299 = vmatpush1.msra.mxu0 0.0
    %1300 = vmatprep.subr.mxu0 0.0
    %1301 = vmatpush1.msra.mxu0 0.0
    %1302 = vmatprep.subr.mxu0 0.0
    %1303 = vmatpush1.msra.mxu0 0.0
    %1304 = vmatprep.subr.mxu0 0.0
    %1305 = vmatpush1.msra.mxu0 0.0
    %1306 = vmatprep.subr.mxu0 0.0
    %1307 = vmatpush1.msra.mxu0 0.0
    %1308 = vmatprep.subr.mxu0 0.0
    %1309 = vmatpush1.msra.mxu0 0.0
    %1310 = vmatprep.subr.mxu0 0.0
    %1311 = vmatpush1.msra.mxu0 0.0
    %1312 = vmatprep.subr.mxu0 0.0
    %1313 = vmatpush1.msra.mxu0 0.0
    %1314 = vmatprep.subr.mxu0 0.0
    %1315 = vmatpush1.msra.mxu0 0.0
    %1316 = vmatprep.subr.mxu0 0.0
    %1317 = vmatpush1.msra.mxu0 0.0
    %1318 = vmatprep.subr.mxu0 0.0
    %1319 = vmatpush1.msra.mxu0 0.0
    %1320 = vmatprep.subr.mxu0 0.0
    %1321 = vmatpush1.msra.mxu0 0.0
    %1322 = vmatprep.subr.mxu0 0.0
    %1323 = vmatpush1.msra.mxu0 0.0
    %1324 = vmatprep.subr.mxu0 0.0
    %1325 = vmatpush1.msra.mxu0 0.0
    %1326 = vmatprep.mubr.f32.mxu0 0.0
    %1327 = vmatmul.mubr.f32.gmra.mrb[0].mxu0 %v1260
    %v1328 = vpop.f32.mrb[0].mxu0
    %v1329 = vadd.f32 0.0, %v1328
    %v1330 = vpop.f32.mrb[0].mxu0
    %1331 = vdwg.mxu0
    %v1333 = vsel %vm87, %v851, 0
    %1335 = vmatprep.subr.mxu0 0.0
    %1336 = vmatpush1.msra.mxu0 %v84
    %1337 = vmatprep.subr.mxu0 0.0
    %1338 = vmatpush1.msra.mxu0 0.0
    %1339 = vmatprep.subr.mxu0 0.0
    %1340 = vmatpush1.msra.mxu0 0.0
    %1341 = vmatprep.subr.mxu0 0.0
    %1342 = vmatpush1.msra.mxu0 0.0
    %1343 = vmatprep.subr.mxu0 0.0
    %1344 = vmatpush1.msra.mxu0 0.0
    %1345 = vmatprep.subr.mxu0 0.0
    %1346 = vmatpush1.msra.mxu0 0.0
    %1347 = vmatprep.subr.mxu0 0.0
    %1348 = vmatpush1.msra.mxu0 0.0
    %1349 = vmatprep.subr.mxu0 0.0
    %1350 = vmatpush1.msra.mxu0 0.0
    %1351 = vmatprep.subr.mxu0 0.0
    %1352 = vmatpush1.msra.mxu0 0.0
    %1353 = vmatprep.subr.mxu0 0.0
    %1354 = vmatpush1.msra.mxu0 0.0
    %1355 = vmatprep.subr.mxu0 0.0
    %1356 = vmatpush1.msra.mxu0 0.0
    %1357 = vmatprep.subr.mxu0 0.0
    %1358 = vmatpush1.msra.mxu0 0.0
    %1359 = vmatprep.subr.mxu0 0.0
    %1360 = vmatpush1.msra.mxu0 0.0
    %1361 = vmatprep.subr.mxu0 0.0
    %1362 = vmatpush1.msra.mxu0 0.0
    %1363 = vmatprep.subr.mxu0 0.0
    %1364 = vmatpush1.msra.mxu0 0.0
    %1365 = vmatprep.subr.mxu0 0.0
    %1366 = vmatpush1.msra.mxu0 0.0
    %1367 = vmatprep.subr.mxu0 0.0
    %1368 = vmatpush1.msra.mxu0 0.0
    %1369 = vmatprep.subr.mxu0 0.0
    %1370 = vmatpush1.msra.mxu0 0.0
    %1371 = vmatprep.subr.mxu0 0.0
    %1372 = vmatpush1.msra.mxu0 0.0
    %1373 = vmatprep.subr.mxu0 0.0
    %1374 = vmatpush1.msra.mxu0 0.0
    %1375 = vmatprep.subr.mxu0 0.0
    %1376 = vmatpush1.msra.mxu0 0.0
    %1377 = vmatprep.subr.mxu0 0.0
    %1378 = vmatpush1.msra.mxu0 0.0
    %1379 = vmatprep.subr.mxu0 0.0
    %1380 = vmatpush1.msra.mxu0 0.0
    %1381 = vmatprep.subr.mxu0 0.0
    %1382 = vmatpush1.msra.mxu0 0.0
    %1383 = vmatprep.subr.mxu0 0.0
    %1384 = vmatpush1.msra.mxu0 0.0
    %1385 = vmatprep.subr.mxu0 0.0
    %1386 = vmatpush1.msra.mxu0 0.0
    %1387 = vmatprep.subr.mxu0 0.0
    %1388 = vmatpush1.msra.mxu0 0.0
    %1389 = vmatprep.subr.mxu0 0.0
    %1390 = vmatpush1.msra.mxu0 0.0
    %1391 = vmatprep.subr.mxu0 0.0
    %1392 = vmatpush1.msra.mxu0 0.0
    %1393 = vmatprep.subr.mxu0 0.0
    %1394 = vmatpush1.msra.mxu0 0.0
    %1395 = vmatprep.subr.mxu0 0.0
    %1396 = vmatpush1.msra.mxu0 0.0
    %1397 = vmatprep.subr.mxu0 0.0
    %1398 = vmatpush1.msra.mxu0 0.0
    %1399 = vmatprep.mubr.f32.mxu0 0.0
    %1400 = vmatmul.mubr.f32.gmra.mrb[0].mxu0 %v1333
    %v1401 = vpop.f32.mrb[0].mxu0
    %v1402 = vadd.f32 0.0, %v1401
    %v1403 = vpop.f32.mrb[0].mxu0
    %1404 = vdwg.mxu0
    %v1406 = vsel %vm87, %v852, 0
    %1408 = vmatprep.subr.mxu0 0.0
    %1409 = vmatpush1.msra.mxu0 %v85
    %1410 = vmatprep.subr.mxu0 0.0
    %1411 = vmatpush1.msra.mxu0 0.0
    %1412 = vmatprep.subr.mxu0 0.0
    %1413 = vmatpush1.msra.mxu0 0.0
    %1414 = vmatprep.subr.mxu0 0.0
    %1415 = vmatpush1.msra.mxu0 0.0
    %1416 = vmatprep.subr.mxu0 0.0
    %1417 = vmatpush1.msra.mxu0 0.0
    %1418 = vmatprep.subr.mxu0 0.0
    %1419 = vmatpush1.msra.mxu0 0.0
    %1420 = vmatprep.subr.mxu0 0.0
    %1421 = vmatpush1.msra.mxu0 0.0
    %1422 = vmatprep.subr.mxu0 0.0
    %1423 = vmatpush1.msra.mxu0 0.0
    %1424 = vmatprep.subr.mxu0 0.0
    %1425 = vmatpush1.msra.mxu0 0.0
    %1426 = vmatprep.subr.mxu0 0.0
    %1427 = vmatpush1.msra.mxu0 0.0
    %1428 = vmatprep.subr.mxu0 0.0
    %1429 = vmatpush1.msra.mxu0 0.0
    %1430 = vmatprep.subr.mxu0 0.0
    %1431 = vmatpush1.msra.mxu0 0.0
    %1432 = vmatprep.subr.mxu0 0.0
    %1433 = vmatpush1.msra.mxu0 0.0
    %1434 = vmatprep.subr.mxu0 0.0
    %1435 = vmatpush1.msra.mxu0 0.0
    %1436 = vmatprep.subr.mxu0 0.0
    %1437 = vmatpush1.msra.mxu0 0.0
    %1438 = vmatprep.subr.mxu0 0.0
    %1439 = vmatpush1.msra.mxu0 0.0
    %1440 = vmatprep.subr.mxu0 0.0
    %1441 = vmatpush1.msra.mxu0 0.0
    %1442 = vmatprep.subr.mxu0 0.0
    %1443 = vmatpush1.msra.mxu0 0.0
    %1444 = vmatprep.subr.mxu0 0.0
    %1445 = vmatpush1.msra.mxu0 0.0
    %1446 = vmatprep.subr.mxu0 0.0
    %1447 = vmatpush1.msra.mxu0 0.0
    %1448 = vmatprep.subr.mxu0 0.0
    %1449 = vmatpush1.msra.mxu0 0.0
    %1450 = vmatprep.subr.mxu0 0.0
    %1451 = vmatpush1.msra.mxu0 0.0
    %1452 = vmatprep.subr.mxu0 0.0
    %1453 = vmatpush1.msra.mxu0 0.0
    %1454 = vmatprep.subr.mxu0 0.0
    %1455 = vmatpush1.msra.mxu0 0.0
    %1456 = vmatprep.subr.mxu0 0.0
    %1457 = vmatpush1.msra.mxu0 0.0
    %1458 = vmatprep.subr.mxu0 0.0
    %1459 = vmatpush1.msra.mxu0 0.0
    %1460 = vmatprep.subr.mxu0 0.0
    %1461 = vmatpush1.msra.mxu0 0.0
    %1462 = vmatprep.subr.mxu0 0.0
    %1463 = vmatpush1.msra.mxu0 0.0
    %1464 = vmatprep.subr.mxu0 0.0
    %1465 = vmatpush1.msra.mxu0 0.0
    %1466 = vmatprep.subr.mxu0 0.0
    %1467 = vmatpush1.msra.mxu0 0.0
    %1468 = vmatprep.subr.mxu0 0.0
    %1469 = vmatpush1.msra.mxu0 0.0
    %1470 = vmatprep.subr.mxu0 0.0
    %1471 = vmatpush1.msra.mxu0 0.0
    %1472 = vmatprep.mubr.f32.mxu0 0.0
    %1473 = vmatmul.mubr.f32.gmra.mrb[0].mxu0 %v1406
    %v1474 = vpop.f32.mrb[0].mxu0
    %v1475 = vadd.f32 0.0, %v1474
    %v1476 = vpop.f32.mrb[0].mxu0
    %1477 = vdwg.mxu0
    %v1479 = vsel %vm87, %v853, 0
    %1481 = vmatprep.subr.mxu0 0.0
    %1482 = vmatpush1.msra.mxu0 %v86
    %1483 = vmatprep.subr.mxu0 0.0
    %1484 = vmatpush1.msra.mxu0 0.0
    %1485 = vmatprep.subr.mxu0 0.0
    %1486 = vmatpush1.msra.mxu0 0.0
    %1487 = vmatprep.subr.mxu0 0.0
    %1488 = vmatpush1.msra.mxu0 0.0
    %1489 = vmatprep.subr.mxu0 0.0
    %1490 = vmatpush1.msra.mxu0 0.0
    %1491 = vmatprep.subr.mxu0 0.0
    %1492 = vmatpush1.msra.mxu0 0.0
    %1493 = vmatprep.subr.mxu0 0.0
    %1494 = vmatpush1.msra.mxu0 0.0
    %1495 = vmatprep.subr.mxu0 0.0
    %1496 = vmatpush1.msra.mxu0 0.0
    %1497 = vmatprep.subr.mxu0 0.0
    %1498 = vmatpush1.msra.mxu0 0.0
    %1499 = vmatprep.subr.mxu0 0.0
    %1500 = vmatpush1.msra.mxu0 0.0
    %1501 = vmatprep.subr.mxu0 0.0
    %1502 = vmatpush1.msra.mxu0 0.0
    %1503 = vmatprep.subr.mxu0 0.0
    %1504 = vmatpush1.msra.mxu0 0.0
    %1505 = vmatprep.subr.mxu0 0.0
    %1506 = vmatpush1.msra.mxu0 0.0
    %1507 = vmatprep.subr.mxu0 0.0
    %1508 = vmatpush1.msra.mxu0 0.0
    %1509 = vmatprep.subr.mxu0 0.0
    %1510 = vmatpush1.msra.mxu0 0.0
    %1511 = vmatprep.subr.mxu0 0.0
    %1512 = vmatpush1.msra.mxu0 0.0
    %1513 = vmatprep.subr.mxu0 0.0
    %1514 = vmatpush1.msra.mxu0 0.0
    %1515 = vmatprep.subr.mxu0 0.0
    %1516 = vmatpush1.msra.mxu0 0.0
    %1517 = vmatprep.subr.mxu0 0.0
    %1518 = vmatpush1.msra.mxu0 0.0
    %1519 = vmatprep.subr.mxu0 0.0
    %1520 = vmatpush1.msra.mxu0 0.0
    %1521 = vmatprep.subr.mxu0 0.0
    %1522 = vmatpush1.msra.mxu0 0.0
    %1523 = vmatprep.subr.mxu0 0.0
    %1524 = vmatpush1.msra.mxu0 0.0
    %1525 = vmatprep.subr.mxu0 0.0
    %1526 = vmatpush1.msra.mxu0 0.0
    %1527 = vmatprep.subr.mxu0 0.0
    %1528 = vmatpush1.msra.mxu0 0.0
    %1529 = vmatprep.subr.mxu0 0.0
    %1530 = vmatpush1.msra.mxu0 0.0
    %1531 = vmatprep.subr.mxu0 0.0
    %1532 = vmatpush1.msra.mxu0 0.0
    %1533 = vmatprep.subr.mxu0 0.0
    %1534 = vmatpush1.msra.mxu0 0.0
    %1535 = vmatprep.subr.mxu0 0.0
    %1536 = vmatpush1.msra.mxu0 0.0
    %1537 = vmatprep.subr.mxu0 0.0
    %1538 = vmatpush1.msra.mxu0 0.0
    %1539 = vmatprep.subr.mxu0 0.0
    %1540 = vmatpush1.msra.mxu0 0.0
    %1541 = vmatprep.subr.mxu0 0.0
    %1542 = vmatpush1.msra.mxu0 0.0
    %1543 = vmatprep.subr.mxu0 0.0
    %1544 = vmatpush1.msra.mxu0 0.0
    %1545 = vmatprep.mubr.f32.mxu0 0.0
    %1546 = vmatmul.mubr.f32.gmra.mrb[0].mxu0 %v1479
    %v1547 = vpop.f32.mrb[0].mxu0
    %v1548 = vadd.f32 0.0, %v1547
    %v1549 = vpop.f32.mrb[0].mxu0
    %1550 = vdwg.mxu0
    %v1551 = vadd.f32 %v959, %v1037
    %v1552 = vadd.f32 %v960, %v1110
    %v1553 = vadd.f32 %v961, %v1183
    %v1554 = vadd.f32 %v962, %v1256
    %v1555 = vadd.f32 %v963, %v1329
    %v1556 = vadd.f32 %v964, %v1402
    %v1557 = vadd.f32 %v965, %v1475
    %v1558 = vadd.f32 %v966, %v1548
    %1559 = vst.msk [vmem:[#allocation4] sm:$0xff] %vm87, %v1551
    %1560 = vst.msk [vmem:[#allocation4 + $0x8] sm:$0xff] %vm87, %v1552
    %1561 = vst.msk [vmem:[#allocation4 + $0x10] sm:$0xff] %vm87, %v1553
    %1562 = vst.msk [vmem:[#allocation4 + $0x18] sm:$0xff] %vm87, %v1554
    %1563 = vst.msk [vmem:[#allocation4 + $0x20] sm:$0xff] %vm87, %v1555
    %1564 = vst.msk [vmem:[#allocation4 + $0x28] sm:$0xff] %vm87, %v1556
    %1565 = vst.msk [vmem:[#allocation4 + $0x30] sm:$0xff] %vm87, %v1557
    %1566 = vst.msk [vmem:[#allocation4 + $0x38] sm:$0xff] %vm87, %v1558
    %1567 = vst.msk [vmem:[#allocation2] sm:$0xff] %vm902, %v750
    %1568 = vst.msk [vmem:[#allocation2 + $0x8] sm:$0xff] %vm902, %v751
    %1569 = vst.msk [vmem:[#allocation2 + $0x10] sm:$0xff] %vm902, %v752
    %1570 = vst.msk [vmem:[#allocation2 + $0x18] sm:$0xff] %vm902, %v753
    %1571 = vst.msk [vmem:[#allocation2 + $0x20] sm:$0xff] %vm902, %v754
    %1572 = vst.msk [vmem:[#allocation2 + $0x28] sm:$0xff] %vm902, %v755
    %1573 = vst.msk [vmem:[#allocation2 + $0x30] sm:$0xff] %vm902, %v756
    %1574 = vst.msk [vmem:[#allocation2 + $0x38] sm:$0xff] %vm902, %v757
  $region21: #{sparse_transformer_forward.48} parent=0 // pred_fallthru
    _
  // Predicated region
  $region22: #{sparse_transformer_forward.48} parent=0 // pred_check
    %p1575 = pneg %p14
  $region23: #{sparse_transformer_forward.48} parent=0 // pred_check_branch
    %1577 = sbr.rel (%p1575) target = $region25
  $region24: #{sparse_transformer_forward.48} parent=0 // pred_region
    %v1578 = vld [vmem:[#allocation3] sm:$0xff]
    %v1579 = vld [vmem:[#allocation3 + $0x8] sm:$0xff]
    %v1580 = vld [vmem:[#allocation3 + $0x10] sm:$0xff]
    %v1581 = vld [vmem:[#allocation3 + $0x18] sm:$0xff]
    %v1582 = vld [vmem:[#allocation3 + $0x20] sm:$0xff]
    %v1583 = vld [vmem:[#allocation3 + $0x28] sm:$0xff]
    %v1584 = vld [vmem:[#allocation3 + $0x30] sm:$0xff]
    %v1585 = vld [vmem:[#allocation3 + $0x38] sm:$0xff]
    %v1586 = vrcp.pop %v1578
    %v1587 = vrcp.pop %v1579
    %v1588 = vrcp.pop %v1580
    %v1589 = vrcp.pop %v1581
    %v1590 = vrcp.pop %v1582
    %v1591 = vrcp.pop %v1583
    %v1592 = vrcp.pop %v1584
    %v1593 = vrcp.pop %v1585
    %v1594 = vld [vmem:[#allocation4] sm:$0xff]
    %v1595 = vld [vmem:[#allocation4 + $0x8] sm:$0xff]
    %v1596 = vld [vmem:[#allocation4 + $0x10] sm:$0xff]
    %v1597 = vld [vmem:[#allocation4 + $0x18] sm:$0xff]
    %v1598 = vld [vmem:[#allocation4 + $0x20] sm:$0xff]
    %v1599 = vld [vmem:[#allocation4 + $0x28] sm:$0xff]
    %v1600 = vld [vmem:[#allocation4 + $0x30] sm:$0xff]
    %v1601 = vld [vmem:[#allocation4 + $0x38] sm:$0xff]
    %1603 = vset.pattern.permute.xlu0 0
    %1604 = vperm.xlu0 %1603, %v1586
    %v1605 = vpop.permute.xlu0 %1604
    %1608 = vset.pattern.permute.xlu0 0
    %1609 = vperm.xlu0 %1608, %v1587
    %v1610 = vpop.permute.xlu0 %1609
    %1613 = vset.pattern.permute.xlu0 0
    %1614 = vperm.xlu0 %1613, %v1588
    %v1615 = vpop.permute.xlu0 %1614
    %1618 = vset.pattern.permute.xlu0 0
    %1619 = vperm.xlu0 %1618, %v1589
    %v1620 = vpop.permute.xlu0 %1619
    %1623 = vset.pattern.permute.xlu0 0
    %1624 = vperm.xlu0 %1623, %v1590
    %v1625 = vpop.permute.xlu0 %1624
    %1628 = vset.pattern.permute.xlu0 0
    %1629 = vperm.xlu0 %1628, %v1591
    %v1630 = vpop.permute.xlu0 %1629
    %1633 = vset.pattern.permute.xlu0 0
    %1634 = vperm.xlu0 %1633, %v1592
    %v1635 = vpop.permute.xlu0 %1634
    %1638 = vset.pattern.permute.xlu0 0
    %1639 = vperm.xlu0 %1638, %v1593
    %v1640 = vpop.permute.xlu0 %1639
    %v1642 = vmul.f32 %v1594, %v1605
    %v1643 = vmul.f32 %v1595, %v1610
    %v1644 = vmul.f32 %v1596, %v1615
    %v1645 = vmul.f32 %v1597, %v1620
    %v1646 = vmul.f32 %v1598, %v1625
    %v1647 = vmul.f32 %v1599, %v1630
    %v1648 = vmul.f32 %v1600, %v1635
    %v1649 = vmul.f32 %v1601, %v1640
    %vm1650 = vcmask 64512
    %1651 = vst.msk [vmem:[%s3] sm:$0xff] %vm1650, %v1642
    %1652 = vst.msk [vmem:[%s3 + $0x8] sm:$0xff] %vm1650, %v1643
    %1653 = vst.msk [vmem:[%s3 + $0x10] sm:$0xff] %vm1650, %v1644
    %1654 = vst.msk [vmem:[%s3 + $0x18] sm:$0xff] %vm1650, %v1645
    %1655 = vst.msk [vmem:[%s3 + $0x20] sm:$0xff] %vm1650, %v1646
    %1656 = vst.msk [vmem:[%s3 + $0x28] sm:$0xff] %vm1650, %v1647
    %1657 = vst.msk [vmem:[%s3 + $0x30] sm:$0xff] %vm1650, %v1648
    %1658 = vst.msk [vmem:[%s3 + $0x38] sm:$0xff] %vm1650, %v1649
  $region25: #{sparse_transformer_forward.48} parent=0 // pred_fallthru
    _
  // Predicated region
  $region26: #{sparse_transformer_forward.48} parent=0 // pred_check
    _
  $region27: #{sparse_transformer_forward.48} parent=0 // pred_check_branch
    %1660 = sbr.rel (0) target = $region29
  $region28: #{sparse_transformer_forward.48} parent=0 // pred_region
    _
  $region29: #{sparse_transformer_forward.48} parent=0 // pred_fallthru
    _
  // Predicated region
  $region30: #{sparse_transformer_forward.48} parent=0 // pred_check
    _
  $region31: #{sparse_transformer_forward.48} parent=0 // pred_check_branch
    %1662 = sbr.rel (0) target = $region33
  $region32: #{sparse_transformer_forward.48} parent=0 // pred_region
    _
  $region33: #{sparse_transformer_forward.48} parent=0 // pred_fallthru
    _

// kernel: sparse_transformer_forward.52
$region0: #{sparse_transformer_forward.52}
  #allocation0 [shape = 'u32[]', space=smem, size = 0x4, offset = 0x4, fixed_abs, tag = 'smem constant byte address 0x4 - core index']
  #allocation1 [shape = 'u32[144,128]{1,0:T(1,128)}', space=vmem, size = 0x12000, scoped, tag = 'internal scratch']
  #allocation2 [shape = 'f32[16,64]{1,0:T(8,128)}', space=vmem, size = 0x2000, scoped, tag = 'scratch operand']
  %s0 = inlined_call_operand.vmem [shape: f32[16,32], index: 0, kind: input, shape index: {}]
  %s1 = inlined_call_operand.vmem [shape: f32[32,64], index: 1, kind: input, shape index: {}]
  %s2 = inlined_call_operand.vmem [shape: f32[1,64], index: 2, kind: input, shape index: {}]
  %s3 = inlined_call_operand.vmem [shape: f32[16,64], index: 3, kind: output, shape index: {}]
  %s4 = sld [smem:[#allocation0]]
  $region30: #{sparse_transformer_forward.52} parent=0
    _
  %s6 = ssub.s32 1, %s4
  %s7 = scalar_select 0, %s6, %s4
  // Predicated region
  $region2: #{sparse_transformer_forward.52} parent=0 // pred_check
    _
  $region3: #{sparse_transformer_forward.52} parent=0 // pred_check_branch
    %9 = sbr.rel (0) target = $region5
  $region4: #{sparse_transformer_forward.52} parent=0 // pred_region
    _
  $region5: #{sparse_transformer_forward.52} parent=0 // pred_fallthru
    _
  // Predicated region
  $region6: #{sparse_transformer_forward.52} parent=0 // pred_check
    _
  $region7: #{sparse_transformer_forward.52} parent=0 // pred_check_branch
    %11 = sbr.rel (0) target = $region9
  $region8: #{sparse_transformer_forward.52} parent=0 // pred_region
    _
  $region9: #{sparse_transformer_forward.52} parent=0 // pred_fallthru
    _
  // Predicated region
  $region10: #{sparse_transformer_forward.52} parent=0 // pred_check
    _
  $region11: #{sparse_transformer_forward.52} parent=0 // pred_check_branch
    %13 = sbr.rel (0) target = $region13
  $region12: #{sparse_transformer_forward.52} parent=0 // pred_region
    _
  $region13: #{sparse_transformer_forward.52} parent=0 // pred_fallthru
    _
  %p14 = scmp.eq.s32.totalorder 0, 0
  // Predicated region
  $region14: #{sparse_transformer_forward.52} parent=0 // pred_check
    %p15 = pneg %p14
  $region15: #{sparse_transformer_forward.52} parent=0 // pred_check_branch
    %17 = sbr.rel (%p15) target = $region17
  $region16: #{sparse_transformer_forward.52} parent=0 // pred_region
    %vm18 = vcmask 523264
    %19 = vst.msk [vmem:[#allocation2] sm:$0xff] %vm18, 0.0
    %20 = vst.msk [vmem:[#allocation2 + $0x8] sm:$0xff] %vm18, 0.0
  $region17: #{sparse_transformer_forward.52} parent=0 // pred_fallthru
    _
  %v21 = vld [vmem:[#allocation2] sm:$0xff]
  %v22 = vld [vmem:[#allocation2 + $0x8] sm:$0xff]
  %v23 = vld [vmem:[%s0] sm:$0xff]
  %v24 = vld [vmem:[%s0 + $0x8] sm:$0xff]
  %v25 = vld [vmem:[%s1] sm:$0xff]
  %v26 = vld [vmem:[%s1 + $0x8] sm:$0xff]
  %v27 = vld [vmem:[%s1 + $0x10] sm:$0xff]
  %v28 = vld [vmem:[%s1 + $0x18] sm:$0xff]
  %vm29 = vcmask 261120
  %v31 = vsel %vm29, %v23, 0
  %v34 = vsel %vm29, %v24, 0
  %36 = vmatprep.subr.mxu0 0.0
  %37 = vmatpush1.msra.mxu0 %v25
  %38 = vmatprep.subr.mxu0 0.0
  %39 = vmatpush1.msra.mxu0 %v26
  %40 = vmatprep.subr.mxu0 0.0
  %41 = vmatpush1.msra.mxu0 %v27
  %42 = vmatprep.subr.mxu0 0.0
  %43 = vmatpush1.msra.mxu0 %v28
  %44 = vmatprep.subr.mxu0 0.0
  %45 = vmatpush1.msra.mxu0 0.0
  %46 = vmatprep.subr.mxu0 0.0
  %47 = vmatpush1.msra.mxu0 0.0
  %48 = vmatprep.subr.mxu0 0.0
  %49 = vmatpush1.msra.mxu0 0.0
  %50 = vmatprep.subr.mxu0 0.0
  %51 = vmatpush1.msra.mxu0 0.0
  %52 = vmatprep.subr.mxu0 0.0
  %53 = vmatpush1.msra.mxu0 0.0
  %54 = vmatprep.subr.mxu0 0.0
  %55 = vmatpush1.msra.mxu0 0.0
  %56 = vmatprep.subr.mxu0 0.0
  %57 = vmatpush1.msra.mxu0 0.0
  %58 = vmatprep.subr.mxu0 0.0
  %59 = vmatpush1.msra.mxu0 0.0
  %60 = vmatprep.subr.mxu0 0.0
  %61 = vmatpush1.msra.mxu0 0.0
  %62 = vmatprep.subr.mxu0 0.0
  %63 = vmatpush1.msra.mxu0 0.0
  %64 = vmatprep.subr.mxu0 0.0
  %65 = vmatpush1.msra.mxu0 0.0
  %66 = vmatprep.subr.mxu0 0.0
  %67 = vmatpush1.msra.mxu0 0.0
  %68 = vmatprep.subr.mxu0 0.0
  %69 = vmatpush1.msra.mxu0 0.0
  %70 = vmatprep.subr.mxu0 0.0
  %71 = vmatpush1.msra.mxu0 0.0
  %72 = vmatprep.subr.mxu0 0.0
  %73 = vmatpush1.msra.mxu0 0.0
  %74 = vmatprep.subr.mxu0 0.0
  %75 = vmatpush1.msra.mxu0 0.0
  %76 = vmatprep.subr.mxu0 0.0
  %77 = vmatpush1.msra.mxu0 0.0
  %78 = vmatprep.subr.mxu0 0.0
  %79 = vmatpush1.msra.mxu0 0.0
  %80 = vmatprep.subr.mxu0 0.0
  %81 = vmatpush1.msra.mxu0 0.0
  %82 = vmatprep.subr.mxu0 0.0
  %83 = vmatpush1.msra.mxu0 0.0
  %84 = vmatprep.subr.mxu0 0.0
  %85 = vmatpush1.msra.mxu0 0.0
  %86 = vmatprep.subr.mxu0 0.0
  %87 = vmatpush1.msra.mxu0 0.0
  %88 = vmatprep.subr.mxu0 0.0
  %89 = vmatpush1.msra.mxu0 0.0
  %90 = vmatprep.subr.mxu0 0.0
  %91 = vmatpush1.msra.mxu0 0.0
  %92 = vmatprep.subr.mxu0 0.0
  %93 = vmatpush1.msra.mxu0 0.0
  %94 = vmatprep.subr.mxu0 0.0
  %95 = vmatpush1.msra.mxu0 0.0
  %96 = vmatprep.subr.mxu0 0.0
  %97 = vmatpush1.msra.mxu0 0.0
  %98 = vmatprep.subr.mxu0 0.0
  %99 = vmatpush1.msra.mxu0 0.0
  %100 = vmatprep.mubr.f32.mxu0 0.0
  %101 = vmatmul.mubr.f32.gmra.mrb[0].mxu0 %v31
  %v102 = vpop.f32.mrb[0].mxu0
  %v103 = vadd.f32 0.0, %v102
  %v104 = vpop.f32.mrb[0].mxu0
  %105 = vmatprep.mubr.f32.mxu0 0.0
  %106 = vmatmul.mubr.f32.gmra.mrb[0].mxu0 %v34
  %v107 = vpop.f32.mrb[0].mxu0
  %v108 = vadd.f32 0.0, %v107
  %v109 = vpop.f32.mrb[0].mxu0
  %110 = vdwg.mxu0
  %v111 = vadd.f32 %v21, %v103
  %v112 = vadd.f32 %v22, %v108
  %vm113 = vcmask 523264
  %114 = vst.msk [vmem:[#allocation2] sm:$0xff] %vm113, %v111
  %115 = vst.msk [vmem:[#allocation2 + $0x8] sm:$0xff] %vm113, %v112
  // Predicated region
  $region18: #{sparse_transformer_forward.52} parent=0 // pred_check
    %p116 = pneg %p14
  $region19: #{sparse_transformer_forward.52} parent=0 // pred_check_branch
    %118 = sbr.rel (%p116) target = $region21
  $region20: #{sparse_transformer_forward.52} parent=0 // pred_region
    %v119 = vld [vmem:[#allocation2] sm:$0xff]
    %v120 = vld [vmem:[#allocation2 + $0x8] sm:$0xff]
    %v121 = vld [vmem:[%s2] sm:$0x1]
    %v123 = vlaneseq
    %v124 = vshrl.u32 %v123, 7
    %v125 = vsub.s32 0, %v124
    %v126 = vrot.slane %v121, %v125
    %v128 = vadd.f32 %v119, %v126
    %v129 = vadd.f32 %v120, %v126
    %130 = vst.msk [vmem:[%s3] sm:$0xff] %vm113, %v128
    %131 = vst.msk [vmem:[%s3 + $0x8] sm:$0xff] %vm113, %v129
  $region21: #{sparse_transformer_forward.52} parent=0 // pred_fallthru
    _
  // Predicated region
  $region22: #{sparse_transformer_forward.52} parent=0 // pred_check
    _
  $region23: #{sparse_transformer_forward.52} parent=0 // pred_check_branch
    %133 = sbr.rel (0) target = $region25
  $region24: #{sparse_transformer_forward.52} parent=0 // pred_region
    _
  $region25: #{sparse_transformer_forward.52} parent=0 // pred_fallthru
    _
  // Predicated region
  $region26: #{sparse_transformer_forward.52} parent=0 // pred_check
    _
  $region27: #{sparse_transformer_forward.52} parent=0 // pred_check_branch
    %135 = sbr.rel (0) target = $region29
  $region28: #{sparse_transformer_forward.52} parent=0 // pred_region
    _
  $region29: #{sparse_transformer_forward.52} parent=0 // pred_fallthru
    _

// kernel: sparse_transformer_forward.39
$region0: #{sparse_transformer_forward.39}
  #allocation0 [shape = 'u32[]', space=smem, size = 0x4, offset = 0x4, fixed_abs, tag = 'smem constant byte address 0x4 - core index']
  #allocation1 [shape = 'u32[144,128]{1,0:T(1,128)}', space=vmem, size = 0x12000, scoped, tag = 'internal scratch']
  #allocation2 [shape = 'f32[16,64]{1,0:T(8,128)}', space=vmem, size = 0x2000, scoped, tag = 'scratch operand']
  %s0 = inlined_call_operand.vmem [shape: f32[16,32], index: 0, kind: input, shape index: {}]
  %s1 = inlined_call_operand.vmem [shape: f32[32,64], index: 1, kind: input, shape index: {}]
  %s2 = inlined_call_operand.vmem [shape: f32[1,64], index: 2, kind: input, shape index: {}]
  %s3 = inlined_call_operand.vmem [shape: f32[64,32], index: 3, kind: input, shape index: {}]
  %s4 = inlined_call_operand.vmem [shape: f32[1,32], index: 4, kind: input, shape index: {}]
  %s5 = inlined_call_operand.vmem [shape: f32[16,32], index: 5, kind: output, shape index: {}]
  %s6 = sld [smem:[#allocation0]]
  $region30: #{sparse_transformer_forward.39} parent=0
    _
  %s8 = ssub.s32 1, %s6
  %s9 = scalar_select 0, %s8, %s6
  // Predicated region
  $region2: #{sparse_transformer_forward.39} parent=0 // pred_check
    _
  $region3: #{sparse_transformer_forward.39} parent=0 // pred_check_branch
    %11 = sbr.rel (0) target = $region5
  $region4: #{sparse_transformer_forward.39} parent=0 // pred_region
    _
  $region5: #{sparse_transformer_forward.39} parent=0 // pred_fallthru
    _
  // Predicated region
  $region6: #{sparse_transformer_forward.39} parent=0 // pred_check
    _
  $region7: #{sparse_transformer_forward.39} parent=0 // pred_check_branch
    %13 = sbr.rel (0) target = $region9
  $region8: #{sparse_transformer_forward.39} parent=0 // pred_region
    _
  $region9: #{sparse_transformer_forward.39} parent=0 // pred_fallthru
    _
  // Predicated region
  $region10: #{sparse_transformer_forward.39} parent=0 // pred_check
    _
  $region11: #{sparse_transformer_forward.39} parent=0 // pred_check_branch
    %15 = sbr.rel (0) target = $region13
  $region12: #{sparse_transformer_forward.39} parent=0 // pred_region
    _
  $region13: #{sparse_transformer_forward.39} parent=0 // pred_fallthru
    _
  // Predicated region
  $region14: #{sparse_transformer_forward.39} parent=0 // pred_check
    _
  $region15: #{sparse_transformer_forward.39} parent=0 // pred_check_branch
    %17 = sbr.rel (0) target = $region17
  $region16: #{sparse_transformer_forward.39} parent=0 // pred_region
    _
  $region17: #{sparse_transformer_forward.39} parent=0 // pred_fallthru
    _
  // Predicated region
  $region18: #{sparse_transformer_forward.39} parent=0 // pred_check
    _
  $region19: #{sparse_transformer_forward.39} parent=0 // pred_check_branch
    %19 = sbr.rel (0) target = $region21
  $region20: #{sparse_transformer_forward.39} parent=0 // pred_region
    _
  $region21: #{sparse_transformer_forward.39} parent=0 // pred_fallthru
    _
  %v20 = vld [vmem:[%s0] sm:$0xff]
  %v21 = vld [vmem:[%s0 + $0x8] sm:$0xff]
  %v22 = vld [vmem:[%s1] sm:$0xff]
  %v23 = vld [vmem:[%s1 + $0x8] sm:$0xff]
  %v24 = vld [vmem:[%s1 + $0x10] sm:$0xff]
  %v25 = vld [vmem:[%s1 + $0x18] sm:$0xff]
  %v26 = vld [vmem:[%s2] sm:$0x1]
  %v28 = vlaneseq
  %v29 = vshrl.u32 %v28, 7
  %v30 = vsub.s32 0, %v29
  %v31 = vrot.slane %v26, %v30
  %vm33 = vcmask 261120
  %v35 = vsel %vm33, %v20, 0
  %v38 = vsel %vm33, %v21, 0
  %40 = vmatprep.subr.mxu0 0.0
  %41 = vmatpush1.msra.mxu0 %v22
  %42 = vmatprep.subr.mxu0 0.0
  %43 = vmatpush1.msra.mxu0 %v23
  %44 = vmatprep.subr.mxu0 0.0
  %45 = vmatpush1.msra.mxu0 %v24
  %46 = vmatprep.subr.mxu0 0.0
  %47 = vmatpush1.msra.mxu0 %v25
  %48 = vmatprep.subr.mxu0 0.0
  %49 = vmatpush1.msra.mxu0 0.0
  %50 = vmatprep.subr.mxu0 0.0
  %51 = vmatpush1.msra.mxu0 0.0
  %52 = vmatprep.subr.mxu0 0.0
  %53 = vmatpush1.msra.mxu0 0.0
  %54 = vmatprep.subr.mxu0 0.0
  %55 = vmatpush1.msra.mxu0 0.0
  %56 = vmatprep.subr.mxu0 0.0
  %57 = vmatpush1.msra.mxu0 0.0
  %58 = vmatprep.subr.mxu0 0.0
  %59 = vmatpush1.msra.mxu0 0.0
  %60 = vmatprep.subr.mxu0 0.0
  %61 = vmatpush1.msra.mxu0 0.0
  %62 = vmatprep.subr.mxu0 0.0
  %63 = vmatpush1.msra.mxu0 0.0
  %64 = vmatprep.subr.mxu0 0.0
  %65 = vmatpush1.msra.mxu0 0.0
  %66 = vmatprep.subr.mxu0 0.0
  %67 = vmatpush1.msra.mxu0 0.0
  %68 = vmatprep.subr.mxu0 0.0
  %69 = vmatpush1.msra.mxu0 0.0
  %70 = vmatprep.subr.mxu0 0.0
  %71 = vmatpush1.msra.mxu0 0.0
  %72 = vmatprep.subr.mxu0 0.0
  %73 = vmatpush1.msra.mxu0 0.0
  %74 = vmatprep.subr.mxu0 0.0
  %75 = vmatpush1.msra.mxu0 0.0
  %76 = vmatprep.subr.mxu0 0.0
  %77 = vmatpush1.msra.mxu0 0.0
  %78 = vmatprep.subr.mxu0 0.0
  %79 = vmatpush1.msra.mxu0 0.0
  %80 = vmatprep.subr.mxu0 0.0
  %81 = vmatpush1.msra.mxu0 0.0
  %82 = vmatprep.subr.mxu0 0.0
  %83 = vmatpush1.msra.mxu0 0.0
  %84 = vmatprep.subr.mxu0 0.0
  %85 = vmatpush1.msra.mxu0 0.0
  %86 = vmatprep.subr.mxu0 0.0
  %87 = vmatpush1.msra.mxu0 0.0
  %88 = vmatprep.subr.mxu0 0.0
  %89 = vmatpush1.msra.mxu0 0.0
  %90 = vmatprep.subr.mxu0 0.0
  %91 = vmatpush1.msra.mxu0 0.0
  %92 = vmatprep.subr.mxu0 0.0
  %93 = vmatpush1.msra.mxu0 0.0
  %94 = vmatprep.subr.mxu0 0.0
  %95 = vmatpush1.msra.mxu0 0.0
  %96 = vmatprep.subr.mxu0 0.0
  %97 = vmatpush1.msra.mxu0 0.0
  %98 = vmatprep.subr.mxu0 0.0
  %99 = vmatpush1.msra.mxu0 0.0
  %100 = vmatprep.subr.mxu0 0.0
  %101 = vmatpush1.msra.mxu0 0.0
  %102 = vmatprep.subr.mxu0 0.0
  %103 = vmatpush1.msra.mxu0 0.0
  %104 = vmatprep.mubr.f32.mxu0 0.0
  %105 = vmatmul.mubr.f32.gmra.mrb[0].mxu0 %v35
  %v106 = vpop.f32.mrb[0].mxu0
  %v107 = vadd.f32 %v31, %v106
  %v108 = vpop.f32.mrb[0].mxu0
  %109 = vmatprep.mubr.f32.mxu0 0.0
  %110 = vmatmul.mubr.f32.gmra.mrb[0].mxu0 %v38
  %v111 = vpop.f32.mrb[0].mxu0
  %v112 = vadd.f32 %v31, %v111
  %v113 = vpop.f32.mrb[0].mxu0
  %114 = vdwg.mxu0
  %v115 = vmax.f32 %v107, 0.0
  %v116 = vmax.f32 %v112, 0.0
  %vm117 = vcmask 523264
  %118 = vst.msk [vmem:[#allocation2] sm:$0xff] %vm117, %v115
  %119 = vst.msk [vmem:[#allocation2 + $0x8] sm:$0xff] %vm117, %v116
  %v120 = vld [vmem:[#allocation2] sm:$0xff]
  %v121 = vld [vmem:[#allocation2 + $0x8] sm:$0xff]
  %v122 = vld [vmem:[%s3] sm:$0xff]
  %v123 = vld [vmem:[%s3 + $0x8] sm:$0xff]
  %v124 = vld [vmem:[%s3 + $0x10] sm:$0xff]
  %v125 = vld [vmem:[%s3 + $0x18] sm:$0xff]
  %v126 = vld [vmem:[%s3 + $0x20] sm:$0xff]
  %v127 = vld [vmem:[%s3 + $0x28] sm:$0xff]
  %v128 = vld [vmem:[%s3 + $0x30] sm:$0xff]
  %v129 = vld [vmem:[%s3 + $0x38] sm:$0xff]
  %v130 = vld [vmem:[%s4] sm:$0x1]
  %v132 = vlaneseq
  %v133 = vshrl.u32 %v132, 7
  %v134 = vsub.s32 0, %v133
  %v135 = vrot.slane %v130, %v134
  %v138 = vsel %vm117, %v120, 0
  %v141 = vsel %vm117, %v121, 0
  %143 = vmatprep.subr.mxu0 0.0
  %144 = vmatpush1.msra.mxu0 %v122
  %145 = vmatprep.subr.mxu0 0.0
  %146 = vmatpush1.msra.mxu0 %v123
  %147 = vmatprep.subr.mxu0 0.0
  %148 = vmatpush1.msra.mxu0 %v124
  %149 = vmatprep.subr.mxu0 0.0
  %150 = vmatpush1.msra.mxu0 %v125
  %151 = vmatprep.subr.mxu0 0.0
  %152 = vmatpush1.msra.mxu0 %v126
  %153 = vmatprep.subr.mxu0 0.0
  %154 = vmatpush1.msra.mxu0 %v127
  %155 = vmatprep.subr.mxu0 0.0
  %156 = vmatpush1.msra.mxu0 %v128
  %157 = vmatprep.subr.mxu0 0.0
  %158 = vmatpush1.msra.mxu0 %v129
  %159 = vmatprep.subr.mxu0 0.0
  %160 = vmatpush1.msra.mxu0 0.0
  %161 = vmatprep.subr.mxu0 0.0
  %162 = vmatpush1.msra.mxu0 0.0
  %163 = vmatprep.subr.mxu0 0.0
  %164 = vmatpush1.msra.mxu0 0.0
  %165 = vmatprep.subr.mxu0 0.0
  %166 = vmatpush1.msra.mxu0 0.0
  %167 = vmatprep.subr.mxu0 0.0
  %168 = vmatpush1.msra.mxu0 0.0
  %169 = vmatprep.subr.mxu0 0.0
  %170 = vmatpush1.msra.mxu0 0.0
  %171 = vmatprep.subr.mxu0 0.0
  %172 = vmatpush1.msra.mxu0 0.0
  %173 = vmatprep.subr.mxu0 0.0
  %174 = vmatpush1.msra.mxu0 0.0
  %175 = vmatprep.subr.mxu0 0.0
  %176 = vmatpush1.msra.mxu0 0.0
  %177 = vmatprep.subr.mxu0 0.0
  %178 = vmatpush1.msra.mxu0 0.0
  %179 = vmatprep.subr.mxu0 0.0
  %180 = vmatpush1.msra.mxu0 0.0
  %181 = vmatprep.subr.mxu0 0.0
  %182 = vmatpush1.msra.mxu0 0.0
  %183 = vmatprep.subr.mxu0 0.0
  %184 = vmatpush1.msra.mxu0 0.0
  %185 = vmatprep.subr.mxu0 0.0
  %186 = vmatpush1.msra.mxu0 0.0
  %187 = vmatprep.subr.mxu0 0.0
  %188 = vmatpush1.msra.mxu0 0.0
  %189 = vmatprep.subr.mxu0 0.0
  %190 = vmatpush1.msra.mxu0 0.0
  %191 = vmatprep.subr.mxu0 0.0
  %192 = vmatpush1.msra.mxu0 0.0
  %193 = vmatprep.subr.mxu0 0.0
  %194 = vmatpush1.msra.mxu0 0.0
  %195 = vmatprep.subr.mxu0 0.0
  %196 = vmatpush1.msra.mxu0 0.0
  %197 = vmatprep.subr.mxu0 0.0
  %198 = vmatpush1.msra.mxu0 0.0
  %199 = vmatprep.subr.mxu0 0.0
  %200 = vmatpush1.msra.mxu0 0.0
  %201 = vmatprep.subr.mxu0 0.0
  %202 = vmatpush1.msra.mxu0 0.0
  %203 = vmatprep.subr.mxu0 0.0
  %204 = vmatpush1.msra.mxu0 0.0
  %205 = vmatprep.subr.mxu0 0.0
  %206 = vmatpush1.msra.mxu0 0.0
  %207 = vmatprep.mubr.f32.mxu0 0.0
  %208 = vmatmul.mubr.f32.gmra.mrb[0].mxu0 %v138
  %v209 = vpop.f32.mrb[0].mxu0
  %v210 = vadd.f32 %v135, %v209
  %v211 = vpop.f32.mrb[0].mxu0
  %212 = vmatprep.mubr.f32.mxu0 0.0
  %213 = vmatmul.mubr.f32.gmra.mrb[0].mxu0 %v141
  %v214 = vpop.f32.mrb[0].mxu0
  %v215 = vadd.f32 %v135, %v214
  %v216 = vpop.f32.mrb[0].mxu0
  %217 = vdwg.mxu0
  %218 = vst.msk [vmem:[%s5] sm:$0xff] %vm33, %v210
  %219 = vst.msk [vmem:[%s5 + $0x8] sm:$0xff] %vm33, %v215
  // Predicated region
  $region22: #{sparse_transformer_forward.39} parent=0 // pred_check
    _
  $region23: #{sparse_transformer_forward.39} parent=0 // pred_check_branch
    %221 = sbr.rel (0) target = $region25
  $region24: #{sparse_transformer_forward.39} parent=0 // pred_region
    _
  $region25: #{sparse_transformer_forward.39} parent=0 // pred_fallthru
    _
  // Predicated region
  $region26: #{sparse_transformer_forward.39} parent=0 // pred_check
    _
  $region27: #{sparse_transformer_forward.39} parent=0 // pred_check_branch
    %223 = sbr.rel (0) target = $region29
  $region28: #{sparse_transformer_forward.39} parent=0 // pred_region
    _
  $region29: #{sparse_transformer_forward.39} parent=0 // pred_fallthru
    _

// kernel: sparse_transformer_forward.36
$region0: #{sparse_transformer_forward.36}
  #allocation0 [shape = 'u32[]', space=smem, size = 0x4, offset = 0x4, fixed_abs, tag = 'smem constant byte address 0x4 - core index']
  #allocation1 [shape = 'u32[144,128]{1,0:T(1,128)}', space=vmem, size = 0x12000, scoped, tag = 'internal scratch']
  #allocation2 [shape = 'f32[8,8,1]{2,1,0:T(8,128)}', space=vmem, size = 0x8000, scoped, tag = 'scratch operand']
  #allocation3 [shape = 'f32[8,8,1]{2,1,0:T(8,128)}', space=vmem, size = 0x8000, scoped, tag = 'scratch operand']
  #allocation4 [shape = 'f32[8,8,8]{2,1,0:T(8,128)}', space=vmem, size = 0x8000, scoped, tag = 'scratch operand']
  %s0 = inlined_call_operand.vmem [shape: f32[8,8,8], index: 0, kind: input, shape index: {}]
  %s1 = inlined_call_operand.vmem [shape: f32[8,8,8], index: 1, kind: input, shape index: {}]
  %s2 = inlined_call_operand.vmem [shape: f32[8,8,8], index: 2, kind: input, shape index: {}]
  %s3 = inlined_call_operand.vmem [shape: f32[8,8,8], index: 3, kind: output, shape index: {}]
  %s4 = sld [smem:[#allocation0]]
  $region30: #{sparse_transformer_forward.36} parent=0
    _
  %s6 = ssub.s32 1, %s4
  %s7 = scalar_select 0, %s6, %s4
  // Predicated region
  $region2: #{sparse_transformer_forward.36} parent=0 // pred_check
    _
  $region3: #{sparse_transformer_forward.36} parent=0 // pred_check_branch
    %9 = sbr.rel (0) target = $region5
  $region4: #{sparse_transformer_forward.36} parent=0 // pred_region
    _
  $region5: #{sparse_transformer_forward.36} parent=0 // pred_fallthru
    _
  // Predicated region
  $region6: #{sparse_transformer_forward.36} parent=0 // pred_check
    _
  $region7: #{sparse_transformer_forward.36} parent=0 // pred_check_branch
    %11 = sbr.rel (0) target = $region9
  $region8: #{sparse_transformer_forward.36} parent=0 // pred_region
    _
  $region9: #{sparse_transformer_forward.36} parent=0 // pred_fallthru
    _
  // Predicated region
  $region10: #{sparse_transformer_forward.36} parent=0 // pred_check
    _
  $region11: #{sparse_transformer_forward.36} parent=0 // pred_check_branch
    %13 = sbr.rel (0) target = $region13
  $region12: #{sparse_transformer_forward.36} parent=0 // pred_region
    _
  $region13: #{sparse_transformer_forward.36} parent=0 // pred_fallthru
    _
  %p14 = scmp.eq.s32.totalorder 0, 0
  // Predicated region
  $region14: #{sparse_transformer_forward.36} parent=0 // pred_check
    %p15 = pneg %p14
  $region15: #{sparse_transformer_forward.36} parent=0 // pred_check_branch
    %17 = sbr.rel (%p15) target = $region17
  $region16: #{sparse_transformer_forward.36} parent=0 // pred_region
    %vm18 = vcmask 7168
    %19 = vst.msk [vmem:[#allocation2] sm:$0xff] %vm18, -inf
    %20 = vst.msk [vmem:[#allocation2 + $0x8] sm:$0xff] %vm18, -inf
    %21 = vst.msk [vmem:[#allocation2 + $0x10] sm:$0xff] %vm18, -inf
    %22 = vst.msk [vmem:[#allocation2 + $0x18] sm:$0xff] %vm18, -inf
    %23 = vst.msk [vmem:[#allocation2 + $0x20] sm:$0xff] %vm18, -inf
    %24 = vst.msk [vmem:[#allocation2 + $0x28] sm:$0xff] %vm18, -inf
    %25 = vst.msk [vmem:[#allocation2 + $0x30] sm:$0xff] %vm18, -inf
    %26 = vst.msk [vmem:[#allocation2 + $0x38] sm:$0xff] %vm18, -inf
    %27 = vst.msk [vmem:[#allocation3] sm:$0xff] %vm18, 0.0
    %28 = vst.msk [vmem:[#allocation3 + $0x8] sm:$0xff] %vm18, 0.0
    %29 = vst.msk [vmem:[#allocation3 + $0x10] sm:$0xff] %vm18, 0.0
    %30 = vst.msk [vmem:[#allocation3 + $0x18] sm:$0xff] %vm18, 0.0
    %31 = vst.msk [vmem:[#allocation3 + $0x20] sm:$0xff] %vm18, 0.0
    %32 = vst.msk [vmem:[#allocation3 + $0x28] sm:$0xff] %vm18, 0.0
    %33 = vst.msk [vmem:[#allocation3 + $0x30] sm:$0xff] %vm18, 0.0
    %34 = vst.msk [vmem:[#allocation3 + $0x38] sm:$0xff] %vm18, 0.0
    %vm35 = vcmask 64512
    %36 = vst.msk [vmem:[#allocation4] sm:$0xff] %vm35, 0.0
    %37 = vst.msk [vmem:[#allocation4 + $0x8] sm:$0xff] %vm35, 0.0
    %38 = vst.msk [vmem:[#allocation4 + $0x10] sm:$0xff] %vm35, 0.0
    %39 = vst.msk [vmem:[#allocation4 + $0x18] sm:$0xff] %vm35, 0.0
    %40 = vst.msk [vmem:[#allocation4 + $0x20] sm:$0xff] %vm35, 0.0
    %41 = vst.msk [vmem:[#allocation4 + $0x28] sm:$0xff] %vm35, 0.0
    %42 = vst.msk [vmem:[#allocation4 + $0x30] sm:$0xff] %vm35, 0.0
    %43 = vst.msk [vmem:[#allocation4 + $0x38] sm:$0xff] %vm35, 0.0
  $region17: #{sparse_transformer_forward.36} parent=0 // pred_fallthru
    _
  %v44 = vld [vmem:[%s0] sm:$0xff]
  %v45 = vld [vmem:[%s0 + $0x8] sm:$0xff]
  %v46 = vld [vmem:[%s0 + $0x10] sm:$0xff]
  %v47 = vld [vmem:[%s0 + $0x18] sm:$0xff]
  %v48 = vld [vmem:[%s0 + $0x20] sm:$0xff]
  %v49 = vld [vmem:[%s0 + $0x28] sm:$0xff]
  %v50 = vld [vmem:[%s0 + $0x30] sm:$0xff]
  %v51 = vld [vmem:[%s0 + $0x38] sm:$0xff]
  %v52 = vmul.f32 %v44, 0.35355338
  %v53 = vmul.f32 %v45, 0.35355338
  %v54 = vmul.f32 %v46, 0.35355338
  %v55 = vmul.f32 %v47, 0.35355338
  %v56 = vmul.f32 %v48, 0.35355338
  %v57 = vmul.f32 %v49, 0.35355338
  %v58 = vmul.f32 %v50, 0.35355338
  %v59 = vmul.f32 %v51, 0.35355338
  %v60 = vld [vmem:[%s1] sm:$0xff]
  %v61 = vld [vmem:[%s1 + $0x8] sm:$0xff]
  %v62 = vld [vmem:[%s1 + $0x10] sm:$0xff]
  %v63 = vld [vmem:[%s1 + $0x18] sm:$0xff]
  %v64 = vld [vmem:[%s1 + $0x20] sm:$0xff]
  %v65 = vld [vmem:[%s1 + $0x28] sm:$0xff]
  %v66 = vld [vmem:[%s1 + $0x30] sm:$0xff]
  %v67 = vld [vmem:[%s1 + $0x38] sm:$0xff]
  %v68 = vld [vmem:[%s2] sm:$0xff]
  %v69 = vld [vmem:[%s2 + $0x8] sm:$0xff]
  %v70 = vld [vmem:[%s2 + $0x10] sm:$0xff]
  %v71 = vld [vmem:[%s2 + $0x18] sm:$0xff]
  %v72 = vld [vmem:[%s2 + $0x20] sm:$0xff]
  %v73 = vld [vmem:[%s2 + $0x28] sm:$0xff]
  %v74 = vld [vmem:[%s2 + $0x30] sm:$0xff]
  %v75 = vld [vmem:[%s2 + $0x38] sm:$0xff]
  %vm76 = vcmask 64512
  %v78 = vsel %vm76, %v52, 0
  %v81 = vsel %vm76, %v60, 0
  %83 = vmatprep.subr.mxu0 0.0
  %84 = vmatpush1.xpose.msra.mxu0 %v81
  %85 = vmatprep.subr.mxu0 0.0
  %86 = vmatpush1.xpose.msra.mxu0 0.0
  %87 = vmatprep.subr.mxu0 0.0
  %88 = vmatpush1.xpose.msra.mxu0 0.0
  %89 = vmatprep.subr.mxu0 0.0
  %90 = vmatpush1.xpose.msra.mxu0 0.0
  %91 = vmatprep.subr.mxu0 0.0
  %92 = vmatpush1.xpose.msra.mxu0 0.0
  %93 = vmatprep.subr.mxu0 0.0
  %94 = vmatpush1.xpose.msra.mxu0 0.0
  %95 = vmatprep.subr.mxu0 0.0
  %96 = vmatpush1.xpose.msra.mxu0 0.0
  %97 = vmatprep.subr.mxu0 0.0
  %98 = vmatpush1.xpose.msra.mxu0 0.0
  %99 = vmatprep.subr.mxu0 0.0
  %100 = vmatpush1.xpose.msra.mxu0 0.0
  %101 = vmatprep.subr.mxu0 0.0
  %102 = vmatpush1.xpose.msra.mxu0 0.0
  %103 = vmatprep.subr.mxu0 0.0
  %104 = vmatpush1.xpose.msra.mxu0 0.0
  %105 = vmatprep.subr.mxu0 0.0
  %106 = vmatpush1.xpose.msra.mxu0 0.0
  %107 = vmatprep.subr.mxu0 0.0
  %108 = vmatpush1.xpose.msra.mxu0 0.0
  %109 = vmatprep.subr.mxu0 0.0
  %110 = vmatpush1.xpose.msra.mxu0 0.0
  %111 = vmatprep.subr.mxu0 0.0
  %112 = vmatpush1.xpose.msra.mxu0 0.0
  %113 = vmatprep.subr.mxu0 0.0
  %114 = vmatpush1.xpose.msra.mxu0 0.0
  %115 = vmatprep.subr.mxu0 0.0
  %116 = vmatpush1.xpose.msra.mxu0 0.0
  %117 = vmatprep.subr.mxu0 0.0
  %118 = vmatpush1.xpose.msra.mxu0 0.0
  %119 = vmatprep.subr.mxu0 0.0
  %120 = vmatpush1.xpose.msra.mxu0 0.0
  %121 = vmatprep.subr.mxu0 0.0
  %122 = vmatpush1.xpose.msra.mxu0 0.0
  %123 = vmatprep.subr.mxu0 0.0
  %124 = vmatpush1.xpose.msra.mxu0 0.0
  %125 = vmatprep.subr.mxu0 0.0
  %126 = vmatpush1.xpose.msra.mxu0 0.0
  %127 = vmatprep.subr.mxu0 0.0
  %128 = vmatpush1.xpose.msra.mxu0 0.0
  %129 = vmatprep.subr.mxu0 0.0
  %130 = vmatpush1.xpose.msra.mxu0 0.0
  %131 = vmatprep.subr.mxu0 0.0
  %132 = vmatpush1.xpose.msra.mxu0 0.0
  %133 = vmatprep.subr.mxu0 0.0
  %134 = vmatpush1.xpose.msra.mxu0 0.0
  %135 = vmatprep.subr.mxu0 0.0
  %136 = vmatpush1.xpose.msra.mxu0 0.0
  %137 = vmatprep.subr.mxu0 0.0
  %138 = vmatpush1.xpose.msra.mxu0 0.0
  %139 = vmatprep.subr.mxu0 0.0
  %140 = vmatpush1.xpose.msra.mxu0 0.0
  %141 = vmatprep.subr.mxu0 0.0
  %142 = vmatpush1.xpose.msra.mxu0 0.0
  %143 = vmatprep.subr.mxu0 0.0
  %144 = vmatpush1.xpose.msra.mxu0 0.0
  %145 = vmatprep.subr.mxu0 0.0
  %146 = vmatpush1.xpose.msra.mxu0 0.0
  %147 = vmatprep.mubr.f32.mxu0 0.0
  %148 = vmatmul.mubr.f32.gmra.mrb[0].mxu0 %v78
  %v149 = vpop.f32.mrb[0].mxu0
  %v150 = vadd.f32 0.0, %v149
  %v151 = vpop.f32.mrb[0].mxu0
  %152 = vdwg.mxu0
  %v154 = vsel %vm76, %v53, 0
  %v157 = vsel %vm76, %v61, 0
  %159 = vmatprep.subr.mxu0 0.0
  %160 = vmatpush1.xpose.msra.mxu0 %v157
  %161 = vmatprep.subr.mxu0 0.0
  %162 = vmatpush1.xpose.msra.mxu0 0.0
  %163 = vmatprep.subr.mxu0 0.0
  %164 = vmatpush1.xpose.msra.mxu0 0.0
  %165 = vmatprep.subr.mxu0 0.0
  %166 = vmatpush1.xpose.msra.mxu0 0.0
  %167 = vmatprep.subr.mxu0 0.0
  %168 = vmatpush1.xpose.msra.mxu0 0.0
  %169 = vmatprep.subr.mxu0 0.0
  %170 = vmatpush1.xpose.msra.mxu0 0.0
  %171 = vmatprep.subr.mxu0 0.0
  %172 = vmatpush1.xpose.msra.mxu0 0.0
  %173 = vmatprep.subr.mxu0 0.0
  %174 = vmatpush1.xpose.msra.mxu0 0.0
  %175 = vmatprep.subr.mxu0 0.0
  %176 = vmatpush1.xpose.msra.mxu0 0.0
  %177 = vmatprep.subr.mxu0 0.0
  %178 = vmatpush1.xpose.msra.mxu0 0.0
  %179 = vmatprep.subr.mxu0 0.0
  %180 = vmatpush1.xpose.msra.mxu0 0.0
  %181 = vmatprep.subr.mxu0 0.0
  %182 = vmatpush1.xpose.msra.mxu0 0.0
  %183 = vmatprep.subr.mxu0 0.0
  %184 = vmatpush1.xpose.msra.mxu0 0.0
  %185 = vmatprep.subr.mxu0 0.0
  %186 = vmatpush1.xpose.msra.mxu0 0.0
  %187 = vmatprep.subr.mxu0 0.0
  %188 = vmatpush1.xpose.msra.mxu0 0.0
  %189 = vmatprep.subr.mxu0 0.0
  %190 = vmatpush1.xpose.msra.mxu0 0.0
  %191 = vmatprep.subr.mxu0 0.0
  %192 = vmatpush1.xpose.msra.mxu0 0.0
  %193 = vmatprep.subr.mxu0 0.0
  %194 = vmatpush1.xpose.msra.mxu0 0.0
  %195 = vmatprep.subr.mxu0 0.0
  %196 = vmatpush1.xpose.msra.mxu0 0.0
  %197 = vmatprep.subr.mxu0 0.0
  %198 = vmatpush1.xpose.msra.mxu0 0.0
  %199 = vmatprep.subr.mxu0 0.0
  %200 = vmatpush1.xpose.msra.mxu0 0.0
  %201 = vmatprep.subr.mxu0 0.0
  %202 = vmatpush1.xpose.msra.mxu0 0.0
  %203 = vmatprep.subr.mxu0 0.0
  %204 = vmatpush1.xpose.msra.mxu0 0.0
  %205 = vmatprep.subr.mxu0 0.0
  %206 = vmatpush1.xpose.msra.mxu0 0.0
  %207 = vmatprep.subr.mxu0 0.0
  %208 = vmatpush1.xpose.msra.mxu0 0.0
  %209 = vmatprep.subr.mxu0 0.0
  %210 = vmatpush1.xpose.msra.mxu0 0.0
  %211 = vmatprep.subr.mxu0 0.0
  %212 = vmatpush1.xpose.msra.mxu0 0.0
  %213 = vmatprep.subr.mxu0 0.0
  %214 = vmatpush1.xpose.msra.mxu0 0.0
  %215 = vmatprep.subr.mxu0 0.0
  %216 = vmatpush1.xpose.msra.mxu0 0.0
  %217 = vmatprep.subr.mxu0 0.0
  %218 = vmatpush1.xpose.msra.mxu0 0.0
  %219 = vmatprep.subr.mxu0 0.0
  %220 = vmatpush1.xpose.msra.mxu0 0.0
  %221 = vmatprep.subr.mxu0 0.0
  %222 = vmatpush1.xpose.msra.mxu0 0.0
  %223 = vmatprep.mubr.f32.mxu0 0.0
  %224 = vmatmul.mubr.f32.gmra.mrb[0].mxu0 %v154
  %v225 = vpop.f32.mrb[0].mxu0
  %v226 = vadd.f32 0.0, %v225
  %v227 = vpop.f32.mrb[0].mxu0
  %228 = vdwg.mxu0
  %v230 = vsel %vm76, %v54, 0
  %v233 = vsel %vm76, %v62, 0
  %235 = vmatprep.subr.mxu0 0.0
  %236 = vmatpush1.xpose.msra.mxu0 %v233
  %237 = vmatprep.subr.mxu0 0.0
  %238 = vmatpush1.xpose.msra.mxu0 0.0
  %239 = vmatprep.subr.mxu0 0.0
  %240 = vmatpush1.xpose.msra.mxu0 0.0
  %241 = vmatprep.subr.mxu0 0.0
  %242 = vmatpush1.xpose.msra.mxu0 0.0
  %243 = vmatprep.subr.mxu0 0.0
  %244 = vmatpush1.xpose.msra.mxu0 0.0
  %245 = vmatprep.subr.mxu0 0.0
  %246 = vmatpush1.xpose.msra.mxu0 0.0
  %247 = vmatprep.subr.mxu0 0.0
  %248 = vmatpush1.xpose.msra.mxu0 0.0
  %249 = vmatprep.subr.mxu0 0.0
  %250 = vmatpush1.xpose.msra.mxu0 0.0
  %251 = vmatprep.subr.mxu0 0.0
  %252 = vmatpush1.xpose.msra.mxu0 0.0
  %253 = vmatprep.subr.mxu0 0.0
  %254 = vmatpush1.xpose.msra.mxu0 0.0
  %255 = vmatprep.subr.mxu0 0.0
  %256 = vmatpush1.xpose.msra.mxu0 0.0
  %257 = vmatprep.subr.mxu0 0.0
  %258 = vmatpush1.xpose.msra.mxu0 0.0
  %259 = vmatprep.subr.mxu0 0.0
  %260 = vmatpush1.xpose.msra.mxu0 0.0
  %261 = vmatprep.subr.mxu0 0.0
  %262 = vmatpush1.xpose.msra.mxu0 0.0
  %263 = vmatprep.subr.mxu0 0.0
  %264 = vmatpush1.xpose.msra.mxu0 0.0
  %265 = vmatprep.subr.mxu0 0.0
  %266 = vmatpush1.xpose.msra.mxu0 0.0
  %267 = vmatprep.subr.mxu0 0.0
  %268 = vmatpush1.xpose.msra.mxu0 0.0
  %269 = vmatprep.subr.mxu0 0.0
  %270 = vmatpush1.xpose.msra.mxu0 0.0
  %271 = vmatprep.subr.mxu0 0.0
  %272 = vmatpush1.xpose.msra.mxu0 0.0
  %273 = vmatprep.subr.mxu0 0.0
  %274 = vmatpush1.xpose.msra.mxu0 0.0
  %275 = vmatprep.subr.mxu0 0.0
  %276 = vmatpush1.xpose.msra.mxu0 0.0
  %277 = vmatprep.subr.mxu0 0.0
  %278 = vmatpush1.xpose.msra.mxu0 0.0
  %279 = vmatprep.subr.mxu0 0.0
  %280 = vmatpush1.xpose.msra.mxu0 0.0
  %281 = vmatprep.subr.mxu0 0.0
  %282 = vmatpush1.xpose.msra.mxu0 0.0
  %283 = vmatprep.subr.mxu0 0.0
  %284 = vmatpush1.xpose.msra.mxu0 0.0
  %285 = vmatprep.subr.mxu0 0.0
  %286 = vmatpush1.xpose.msra.mxu0 0.0
  %287 = vmatprep.subr.mxu0 0.0
  %288 = vmatpush1.xpose.msra.mxu0 0.0
  %289 = vmatprep.subr.mxu0 0.0
  %290 = vmatpush1.xpose.msra.mxu0 0.0
  %291 = vmatprep.subr.mxu0 0.0
  %292 = vmatpush1.xpose.msra.mxu0 0.0
  %293 = vmatprep.subr.mxu0 0.0
  %294 = vmatpush1.xpose.msra.mxu0 0.0
  %295 = vmatprep.subr.mxu0 0.0
  %296 = vmatpush1.xpose.msra.mxu0 0.0
  %297 = vmatprep.subr.mxu0 0.0
  %298 = vmatpush1.xpose.msra.mxu0 0.0
  %299 = vmatprep.mubr.f32.mxu0 0.0
  %300 = vmatmul.mubr.f32.gmra.mrb[0].mxu0 %v230
  %v301 = vpop.f32.mrb[0].mxu0
  %v302 = vadd.f32 0.0, %v301
  %v303 = vpop.f32.mrb[0].mxu0
  %304 = vdwg.mxu0
  %v306 = vsel %vm76, %v55, 0
  %v309 = vsel %vm76, %v63, 0
  %311 = vmatprep.subr.mxu0 0.0
  %312 = vmatpush1.xpose.msra.mxu0 %v309
  %313 = vmatprep.subr.mxu0 0.0
  %314 = vmatpush1.xpose.msra.mxu0 0.0
  %315 = vmatprep.subr.mxu0 0.0
  %316 = vmatpush1.xpose.msra.mxu0 0.0
  %317 = vmatprep.subr.mxu0 0.0
  %318 = vmatpush1.xpose.msra.mxu0 0.0
  %319 = vmatprep.subr.mxu0 0.0
  %320 = vmatpush1.xpose.msra.mxu0 0.0
  %321 = vmatprep.subr.mxu0 0.0
  %322 = vmatpush1.xpose.msra.mxu0 0.0
  %323 = vmatprep.subr.mxu0 0.0
  %324 = vmatpush1.xpose.msra.mxu0 0.0
  %325 = vmatprep.subr.mxu0 0.0
  %326 = vmatpush1.xpose.msra.mxu0 0.0
  %327 = vmatprep.subr.mxu0 0.0
  %328 = vmatpush1.xpose.msra.mxu0 0.0
  %329 = vmatprep.subr.mxu0 0.0
  %330 = vmatpush1.xpose.msra.mxu0 0.0
  %331 = vmatprep.subr.mxu0 0.0
  %332 = vmatpush1.xpose.msra.mxu0 0.0
  %333 = vmatprep.subr.mxu0 0.0
  %334 = vmatpush1.xpose.msra.mxu0 0.0
  %335 = vmatprep.subr.mxu0 0.0
  %336 = vmatpush1.xpose.msra.mxu0 0.0
  %337 = vmatprep.subr.mxu0 0.0
  %338 = vmatpush1.xpose.msra.mxu0 0.0
  %339 = vmatprep.subr.mxu0 0.0
  %340 = vmatpush1.xpose.msra.mxu0 0.0
  %341 = vmatprep.subr.mxu0 0.0
  %342 = vmatpush1.xpose.msra.mxu0 0.0
  %343 = vmatprep.subr.mxu0 0.0
  %344 = vmatpush1.xpose.msra.mxu0 0.0
  %345 = vmatprep.subr.mxu0 0.0
  %346 = vmatpush1.xpose.msra.mxu0 0.0
  %347 = vmatprep.subr.mxu0 0.0
  %348 = vmatpush1.xpose.msra.mxu0 0.0
  %349 = vmatprep.subr.mxu0 0.0
  %350 = vmatpush1.xpose.msra.mxu0 0.0
  %351 = vmatprep.subr.mxu0 0.0
  %352 = vmatpush1.xpose.msra.mxu0 0.0
  %353 = vmatprep.subr.mxu0 0.0
  %354 = vmatpush1.xpose.msra.mxu0 0.0
  %355 = vmatprep.subr.mxu0 0.0
  %356 = vmatpush1.xpose.msra.mxu0 0.0
  %357 = vmatprep.subr.mxu0 0.0
  %358 = vmatpush1.xpose.msra.mxu0 0.0
  %359 = vmatprep.subr.mxu0 0.0
  %360 = vmatpush1.xpose.msra.mxu0 0.0
  %361 = vmatprep.subr.mxu0 0.0
  %362 = vmatpush1.xpose.msra.mxu0 0.0
  %363 = vmatprep.subr.mxu0 0.0
  %364 = vmatpush1.xpose.msra.mxu0 0.0
  %365 = vmatprep.subr.mxu0 0.0
  %366 = vmatpush1.xpose.msra.mxu0 0.0
  %367 = vmatprep.subr.mxu0 0.0
  %368 = vmatpush1.xpose.msra.mxu0 0.0
  %369 = vmatprep.subr.mxu0 0.0
  %370 = vmatpush1.xpose.msra.mxu0 0.0
  %371 = vmatprep.subr.mxu0 0.0
  %372 = vmatpush1.xpose.msra.mxu0 0.0
  %373 = vmatprep.subr.mxu0 0.0
  %374 = vmatpush1.xpose.msra.mxu0 0.0
  %375 = vmatprep.mubr.f32.mxu0 0.0
  %376 = vmatmul.mubr.f32.gmra.mrb[0].mxu0 %v306
  %v377 = vpop.f32.mrb[0].mxu0
  %v378 = vadd.f32 0.0, %v377
  %v379 = vpop.f32.mrb[0].mxu0
  %380 = vdwg.mxu0
  %v382 = vsel %vm76, %v56, 0
  %v385 = vsel %vm76, %v64, 0
  %387 = vmatprep.subr.mxu0 0.0
  %388 = vmatpush1.xpose.msra.mxu0 %v385
  %389 = vmatprep.subr.mxu0 0.0
  %390 = vmatpush1.xpose.msra.mxu0 0.0
  %391 = vmatprep.subr.mxu0 0.0
  %392 = vmatpush1.xpose.msra.mxu0 0.0
  %393 = vmatprep.subr.mxu0 0.0
  %394 = vmatpush1.xpose.msra.mxu0 0.0
  %395 = vmatprep.subr.mxu0 0.0
  %396 = vmatpush1.xpose.msra.mxu0 0.0
  %397 = vmatprep.subr.mxu0 0.0
  %398 = vmatpush1.xpose.msra.mxu0 0.0
  %399 = vmatprep.subr.mxu0 0.0
  %400 = vmatpush1.xpose.msra.mxu0 0.0
  %401 = vmatprep.subr.mxu0 0.0
  %402 = vmatpush1.xpose.msra.mxu0 0.0
  %403 = vmatprep.subr.mxu0 0.0
  %404 = vmatpush1.xpose.msra.mxu0 0.0
  %405 = vmatprep.subr.mxu0 0.0
  %406 = vmatpush1.xpose.msra.mxu0 0.0
  %407 = vmatprep.subr.mxu0 0.0
  %408 = vmatpush1.xpose.msra.mxu0 0.0
  %409 = vmatprep.subr.mxu0 0.0
  %410 = vmatpush1.xpose.msra.mxu0 0.0
  %411 = vmatprep.subr.mxu0 0.0
  %412 = vmatpush1.xpose.msra.mxu0 0.0
  %413 = vmatprep.subr.mxu0 0.0
  %414 = vmatpush1.xpose.msra.mxu0 0.0
  %415 = vmatprep.subr.mxu0 0.0
  %416 = vmatpush1.xpose.msra.mxu0 0.0
  %417 = vmatprep.subr.mxu0 0.0
  %418 = vmatpush1.xpose.msra.mxu0 0.0
  %419 = vmatprep.subr.mxu0 0.0
  %420 = vmatpush1.xpose.msra.mxu0 0.0
  %421 = vmatprep.subr.mxu0 0.0
  %422 = vmatpush1.xpose.msra.mxu0 0.0
  %423 = vmatprep.subr.mxu0 0.0
  %424 = vmatpush1.xpose.msra.mxu0 0.0
  %425 = vmatprep.subr.mxu0 0.0
  %426 = vmatpush1.xpose.msra.mxu0 0.0
  %427 = vmatprep.subr.mxu0 0.0
  %428 = vmatpush1.xpose.msra.mxu0 0.0
  %429 = vmatprep.subr.mxu0 0.0
  %430 = vmatpush1.xpose.msra.mxu0 0.0
  %431 = vmatprep.subr.mxu0 0.0
  %432 = vmatpush1.xpose.msra.mxu0 0.0
  %433 = vmatprep.subr.mxu0 0.0
  %434 = vmatpush1.xpose.msra.mxu0 0.0
  %435 = vmatprep.subr.mxu0 0.0
  %436 = vmatpush1.xpose.msra.mxu0 0.0
  %437 = vmatprep.subr.mxu0 0.0
  %438 = vmatpush1.xpose.msra.mxu0 0.0
  %439 = vmatprep.subr.mxu0 0.0
  %440 = vmatpush1.xpose.msra.mxu0 0.0
  %441 = vmatprep.subr.mxu0 0.0
  %442 = vmatpush1.xpose.msra.mxu0 0.0
  %443 = vmatprep.subr.mxu0 0.0
  %444 = vmatpush1.xpose.msra.mxu0 0.0
  %445 = vmatprep.subr.mxu0 0.0
  %446 = vmatpush1.xpose.msra.mxu0 0.0
  %447 = vmatprep.subr.mxu0 0.0
  %448 = vmatpush1.xpose.msra.mxu0 0.0
  %449 = vmatprep.subr.mxu0 0.0
  %450 = vmatpush1.xpose.msra.mxu0 0.0
  %451 = vmatprep.mubr.f32.mxu0 0.0
  %452 = vmatmul.mubr.f32.gmra.mrb[0].mxu0 %v382
  %v453 = vpop.f32.mrb[0].mxu0
  %v454 = vadd.f32 0.0, %v453
  %v455 = vpop.f32.mrb[0].mxu0
  %456 = vdwg.mxu0
  %v458 = vsel %vm76, %v57, 0
  %v461 = vsel %vm76, %v65, 0
  %463 = vmatprep.subr.mxu0 0.0
  %464 = vmatpush1.xpose.msra.mxu0 %v461
  %465 = vmatprep.subr.mxu0 0.0
  %466 = vmatpush1.xpose.msra.mxu0 0.0
  %467 = vmatprep.subr.mxu0 0.0
  %468 = vmatpush1.xpose.msra.mxu0 0.0
  %469 = vmatprep.subr.mxu0 0.0
  %470 = vmatpush1.xpose.msra.mxu0 0.0
  %471 = vmatprep.subr.mxu0 0.0
  %472 = vmatpush1.xpose.msra.mxu0 0.0
  %473 = vmatprep.subr.mxu0 0.0
  %474 = vmatpush1.xpose.msra.mxu0 0.0
  %475 = vmatprep.subr.mxu0 0.0
  %476 = vmatpush1.xpose.msra.mxu0 0.0
  %477 = vmatprep.subr.mxu0 0.0
  %478 = vmatpush1.xpose.msra.mxu0 0.0
  %479 = vmatprep.subr.mxu0 0.0
  %480 = vmatpush1.xpose.msra.mxu0 0.0
  %481 = vmatprep.subr.mxu0 0.0
  %482 = vmatpush1.xpose.msra.mxu0 0.0
  %483 = vmatprep.subr.mxu0 0.0
  %484 = vmatpush1.xpose.msra.mxu0 0.0
  %485 = vmatprep.subr.mxu0 0.0
  %486 = vmatpush1.xpose.msra.mxu0 0.0
  %487 = vmatprep.subr.mxu0 0.0
  %488 = vmatpush1.xpose.msra.mxu0 0.0
  %489 = vmatprep.subr.mxu0 0.0
  %490 = vmatpush1.xpose.msra.mxu0 0.0
  %491 = vmatprep.subr.mxu0 0.0
  %492 = vmatpush1.xpose.msra.mxu0 0.0
  %493 = vmatprep.subr.mxu0 0.0
  %494 = vmatpush1.xpose.msra.mxu0 0.0
  %495 = vmatprep.subr.mxu0 0.0
  %496 = vmatpush1.xpose.msra.mxu0 0.0
  %497 = vmatprep.subr.mxu0 0.0
  %498 = vmatpush1.xpose.msra.mxu0 0.0
  %499 = vmatprep.subr.mxu0 0.0
  %500 = vmatpush1.xpose.msra.mxu0 0.0
  %501 = vmatprep.subr.mxu0 0.0
  %502 = vmatpush1.xpose.msra.mxu0 0.0
  %503 = vmatprep.subr.mxu0 0.0
  %504 = vmatpush1.xpose.msra.mxu0 0.0
  %505 = vmatprep.subr.mxu0 0.0
  %506 = vmatpush1.xpose.msra.mxu0 0.0
  %507 = vmatprep.subr.mxu0 0.0
  %508 = vmatpush1.xpose.msra.mxu0 0.0
  %509 = vmatprep.subr.mxu0 0.0
  %510 = vmatpush1.xpose.msra.mxu0 0.0
  %511 = vmatprep.subr.mxu0 0.0
  %512 = vmatpush1.xpose.msra.mxu0 0.0
  %513 = vmatprep.subr.mxu0 0.0
  %514 = vmatpush1.xpose.msra.mxu0 0.0
  %515 = vmatprep.subr.mxu0 0.0
  %516 = vmatpush1.xpose.msra.mxu0 0.0
  %517 = vmatprep.subr.mxu0 0.0
  %518 = vmatpush1.xpose.msra.mxu0 0.0
  %519 = vmatprep.subr.mxu0 0.0
  %520 = vmatpush1.xpose.msra.mxu0 0.0
  %521 = vmatprep.subr.mxu0 0.0
  %522 = vmatpush1.xpose.msra.mxu0 0.0
  %523 = vmatprep.subr.mxu0 0.0
  %524 = vmatpush1.xpose.msra.mxu0 0.0
  %525 = vmatprep.subr.mxu0 0.0
  %526 = vmatpush1.xpose.msra.mxu0 0.0
  %527 = vmatprep.mubr.f32.mxu0 0.0
  %528 = vmatmul.mubr.f32.gmra.mrb[0].mxu0 %v458
  %v529 = vpop.f32.mrb[0].mxu0
  %v530 = vadd.f32 0.0, %v529
  %v531 = vpop.f32.mrb[0].mxu0
  %532 = vdwg.mxu0
  %v534 = vsel %vm76, %v58, 0
  %v537 = vsel %vm76, %v66, 0
  %539 = vmatprep.subr.mxu0 0.0
  %540 = vmatpush1.xpose.msra.mxu0 %v537
  %541 = vmatprep.subr.mxu0 0.0
  %542 = vmatpush1.xpose.msra.mxu0 0.0
  %543 = vmatprep.subr.mxu0 0.0
  %544 = vmatpush1.xpose.msra.mxu0 0.0
  %545 = vmatprep.subr.mxu0 0.0
  %546 = vmatpush1.xpose.msra.mxu0 0.0
  %547 = vmatprep.subr.mxu0 0.0
  %548 = vmatpush1.xpose.msra.mxu0 0.0
  %549 = vmatprep.subr.mxu0 0.0
  %550 = vmatpush1.xpose.msra.mxu0 0.0
  %551 = vmatprep.subr.mxu0 0.0
  %552 = vmatpush1.xpose.msra.mxu0 0.0
  %553 = vmatprep.subr.mxu0 0.0
  %554 = vmatpush1.xpose.msra.mxu0 0.0
  %555 = vmatprep.subr.mxu0 0.0
  %556 = vmatpush1.xpose.msra.mxu0 0.0
  %557 = vmatprep.subr.mxu0 0.0
  %558 = vmatpush1.xpose.msra.mxu0 0.0
  %559 = vmatprep.subr.mxu0 0.0
  %560 = vmatpush1.xpose.msra.mxu0 0.0
  %561 = vmatprep.subr.mxu0 0.0
  %562 = vmatpush1.xpose.msra.mxu0 0.0
  %563 = vmatprep.subr.mxu0 0.0
  %564 = vmatpush1.xpose.msra.mxu0 0.0
  %565 = vmatprep.subr.mxu0 0.0
  %566 = vmatpush1.xpose.msra.mxu0 0.0
  %567 = vmatprep.subr.mxu0 0.0
  %568 = vmatpush1.xpose.msra.mxu0 0.0
  %569 = vmatprep.subr.mxu0 0.0
  %570 = vmatpush1.xpose.msra.mxu0 0.0
  %571 = vmatprep.subr.mxu0 0.0
  %572 = vmatpush1.xpose.msra.mxu0 0.0
  %573 = vmatprep.subr.mxu0 0.0
  %574 = vmatpush1.xpose.msra.mxu0 0.0
  %575 = vmatprep.subr.mxu0 0.0
  %576 = vmatpush1.xpose.msra.mxu0 0.0
  %577 = vmatprep.subr.mxu0 0.0
  %578 = vmatpush1.xpose.msra.mxu0 0.0
  %579 = vmatprep.subr.mxu0 0.0
  %580 = vmatpush1.xpose.msra.mxu0 0.0
  %581 = vmatprep.subr.mxu0 0.0
  %582 = vmatpush1.xpose.msra.mxu0 0.0
  %583 = vmatprep.subr.mxu0 0.0
  %584 = vmatpush1.xpose.msra.mxu0 0.0
  %585 = vmatprep.subr.mxu0 0.0
  %586 = vmatpush1.xpose.msra.mxu0 0.0
  %587 = vmatprep.subr.mxu0 0.0
  %588 = vmatpush1.xpose.msra.mxu0 0.0
  %589 = vmatprep.subr.mxu0 0.0
  %590 = vmatpush1.xpose.msra.mxu0 0.0
  %591 = vmatprep.subr.mxu0 0.0
  %592 = vmatpush1.xpose.msra.mxu0 0.0
  %593 = vmatprep.subr.mxu0 0.0
  %594 = vmatpush1.xpose.msra.mxu0 0.0
  %595 = vmatprep.subr.mxu0 0.0
  %596 = vmatpush1.xpose.msra.mxu0 0.0
  %597 = vmatprep.subr.mxu0 0.0
  %598 = vmatpush1.xpose.msra.mxu0 0.0
  %599 = vmatprep.subr.mxu0 0.0
  %600 = vmatpush1.xpose.msra.mxu0 0.0
  %601 = vmatprep.subr.mxu0 0.0
  %602 = vmatpush1.xpose.msra.mxu0 0.0
  %603 = vmatprep.mubr.f32.mxu0 0.0
  %604 = vmatmul.mubr.f32.gmra.mrb[0].mxu0 %v534
  %v605 = vpop.f32.mrb[0].mxu0
  %v606 = vadd.f32 0.0, %v605
  %v607 = vpop.f32.mrb[0].mxu0
  %608 = vdwg.mxu0
  %v610 = vsel %vm76, %v59, 0
  %v613 = vsel %vm76, %v67, 0
  %615 = vmatprep.subr.mxu0 0.0
  %616 = vmatpush1.xpose.msra.mxu0 %v613
  %617 = vmatprep.subr.mxu0 0.0
  %618 = vmatpush1.xpose.msra.mxu0 0.0
  %619 = vmatprep.subr.mxu0 0.0
  %620 = vmatpush1.xpose.msra.mxu0 0.0
  %621 = vmatprep.subr.mxu0 0.0
  %622 = vmatpush1.xpose.msra.mxu0 0.0
  %623 = vmatprep.subr.mxu0 0.0
  %624 = vmatpush1.xpose.msra.mxu0 0.0
  %625 = vmatprep.subr.mxu0 0.0
  %626 = vmatpush1.xpose.msra.mxu0 0.0
  %627 = vmatprep.subr.mxu0 0.0
  %628 = vmatpush1.xpose.msra.mxu0 0.0
  %629 = vmatprep.subr.mxu0 0.0
  %630 = vmatpush1.xpose.msra.mxu0 0.0
  %631 = vmatprep.subr.mxu0 0.0
  %632 = vmatpush1.xpose.msra.mxu0 0.0
  %633 = vmatprep.subr.mxu0 0.0
  %634 = vmatpush1.xpose.msra.mxu0 0.0
  %635 = vmatprep.subr.mxu0 0.0
  %636 = vmatpush1.xpose.msra.mxu0 0.0
  %637 = vmatprep.subr.mxu0 0.0
  %638 = vmatpush1.xpose.msra.mxu0 0.0
  %639 = vmatprep.subr.mxu0 0.0
  %640 = vmatpush1.xpose.msra.mxu0 0.0
  %641 = vmatprep.subr.mxu0 0.0
  %642 = vmatpush1.xpose.msra.mxu0 0.0
  %643 = vmatprep.subr.mxu0 0.0
  %644 = vmatpush1.xpose.msra.mxu0 0.0
  %645 = vmatprep.subr.mxu0 0.0
  %646 = vmatpush1.xpose.msra.mxu0 0.0
  %647 = vmatprep.subr.mxu0 0.0
  %648 = vmatpush1.xpose.msra.mxu0 0.0
  %649 = vmatprep.subr.mxu0 0.0
  %650 = vmatpush1.xpose.msra.mxu0 0.0
  %651 = vmatprep.subr.mxu0 0.0
  %652 = vmatpush1.xpose.msra.mxu0 0.0
  %653 = vmatprep.subr.mxu0 0.0
  %654 = vmatpush1.xpose.msra.mxu0 0.0
  %655 = vmatprep.subr.mxu0 0.0
  %656 = vmatpush1.xpose.msra.mxu0 0.0
  %657 = vmatprep.subr.mxu0 0.0
  %658 = vmatpush1.xpose.msra.mxu0 0.0
  %659 = vmatprep.subr.mxu0 0.0
  %660 = vmatpush1.xpose.msra.mxu0 0.0
  %661 = vmatprep.subr.mxu0 0.0
  %662 = vmatpush1.xpose.msra.mxu0 0.0
  %663 = vmatprep.subr.mxu0 0.0
  %664 = vmatpush1.xpose.msra.mxu0 0.0
  %665 = vmatprep.subr.mxu0 0.0
  %666 = vmatpush1.xpose.msra.mxu0 0.0
  %667 = vmatprep.subr.mxu0 0.0
  %668 = vmatpush1.xpose.msra.mxu0 0.0
  %669 = vmatprep.subr.mxu0 0.0
  %670 = vmatpush1.xpose.msra.mxu0 0.0
  %671 = vmatprep.subr.mxu0 0.0
  %672 = vmatpush1.xpose.msra.mxu0 0.0
  %673 = vmatprep.subr.mxu0 0.0
  %674 = vmatpush1.xpose.msra.mxu0 0.0
  %675 = vmatprep.subr.mxu0 0.0
  %676 = vmatpush1.xpose.msra.mxu0 0.0
  %677 = vmatprep.subr.mxu0 0.0
  %678 = vmatpush1.xpose.msra.mxu0 0.0
  %679 = vmatprep.mubr.f32.mxu0 0.0
  %680 = vmatmul.mubr.f32.gmra.mrb[0].mxu0 %v610
  %v681 = vpop.f32.mrb[0].mxu0
  %v682 = vadd.f32 0.0, %v681
  %v683 = vpop.f32.mrb[0].mxu0
  %684 = vdwg.mxu0
  %v685 = vld [vmem:[#allocation2] sm:$0xff]
  %v686 = vld [vmem:[#allocation2 + $0x8] sm:$0xff]
  %v687 = vld [vmem:[#allocation2 + $0x10] sm:$0xff]
  %v688 = vld [vmem:[#allocation2 + $0x18] sm:$0xff]
  %v689 = vld [vmem:[#allocation2 + $0x20] sm:$0xff]
  %v690 = vld [vmem:[#allocation2 + $0x28] sm:$0xff]
  %v691 = vld [vmem:[#allocation2 + $0x30] sm:$0xff]
  %v692 = vld [vmem:[#allocation2 + $0x38] sm:$0xff]
  %v693 = vsel %vm76, %v150, -inf
  %694 = vmax.xlane.f32.xlu0 %v693
  %v695 = vpop.xlane.xlu0 %694
  %v696 = vsel %vm76, %v226, -inf
  %697 = vmax.xlane.f32.xlu0 %v696
  %v698 = vpop.xlane.xlu0 %697
  %v699 = vsel %vm76, %v302, -inf
  %700 = vmax.xlane.f32.xlu0 %v699
  %v701 = vpop.xlane.xlu0 %700
  %v702 = vsel %vm76, %v378, -inf
  %703 = vmax.xlane.f32.xlu0 %v702
  %v704 = vpop.xlane.xlu0 %703
  %v705 = vsel %vm76, %v454, -inf
  %706 = vmax.xlane.f32.xlu0 %v705
  %v707 = vpop.xlane.xlu0 %706
  %v708 = vsel %vm76, %v530, -inf
  %709 = vmax.xlane.f32.xlu0 %v708
  %v710 = vpop.xlane.xlu0 %709
  %v711 = vsel %vm76, %v606, -inf
  %712 = vmax.xlane.f32.xlu0 %v711
  %v713 = vpop.xlane.xlu0 %712
  %v714 = vsel %vm76, %v682, -inf
  %715 = vmax.xlane.f32.xlu0 %v714
  %v716 = vpop.xlane.xlu0 %715
  %v717 = vmax.f32 %v685, %v695
  %v718 = vmax.f32 %v686, %v698
  %v719 = vmax.f32 %v687, %v701
  %v720 = vmax.f32 %v688, %v704
  %v721 = vmax.f32 %v689, %v707
  %v722 = vmax.f32 %v690, %v710
  %v723 = vmax.f32 %v691, %v713
  %v724 = vmax.f32 %v692, %v716
  %v725 = vsub.f32 %v685, %v717
  %v726 = vsub.f32 %v686, %v718
  %v727 = vsub.f32 %v687, %v719
  %v728 = vsub.f32 %v688, %v720
  %v729 = vsub.f32 %v689, %v721
  %v730 = vsub.f32 %v690, %v722
  %v731 = vsub.f32 %v691, %v723
  %v732 = vsub.f32 %v692, %v724
  %v733 = vmul.f32 %v725, 1.442695
  %v734 = vpow.pop %v733
  %v735 = vmul.f32 %v726, 1.442695
  %v736 = vpow.pop %v735
  %v737 = vmul.f32 %v727, 1.442695
  %v738 = vpow.pop %v737
  %v739 = vmul.f32 %v728, 1.442695
  %v740 = vpow.pop %v739
  %v741 = vmul.f32 %v729, 1.442695
  %v742 = vpow.pop %v741
  %v743 = vmul.f32 %v730, 1.442695
  %v744 = vpow.pop %v743
  %v745 = vmul.f32 %v731, 1.442695
  %v746 = vpow.pop %v745
  %v747 = vmul.f32 %v732, 1.442695
  %v748 = vpow.pop %v747
  %750 = vset.pattern.permute.xlu0 0
  %751 = vperm.xlu0 %750, %v717
  %v752 = vpop.permute.xlu0 %751
  %755 = vset.pattern.permute.xlu0 0
  %756 = vperm.xlu0 %755, %v718
  %v757 = vpop.permute.xlu0 %756
  %760 = vset.pattern.permute.xlu0 0
  %761 = vperm.xlu0 %760, %v719
  %v762 = vpop.permute.xlu0 %761
  %765 = vset.pattern.permute.xlu0 0
  %766 = vperm.xlu0 %765, %v720
  %v767 = vpop.permute.xlu0 %766
  %770 = vset.pattern.permute.xlu0 0
  %771 = vperm.xlu0 %770, %v721
  %v772 = vpop.permute.xlu0 %771
  %775 = vset.pattern.permute.xlu0 0
  %776 = vperm.xlu0 %775, %v722
  %v777 = vpop.permute.xlu0 %776
  %780 = vset.pattern.permute.xlu0 0
  %781 = vperm.xlu0 %780, %v723
  %v782 = vpop.permute.xlu0 %781
  %785 = vset.pattern.permute.xlu0 0
  %786 = vperm.xlu0 %785, %v724
  %v787 = vpop.permute.xlu0 %786
  %v789 = vsub.f32 %v150, %v752
  %v790 = vsub.f32 %v226, %v757
  %v791 = vsub.f32 %v302, %v762
  %v792 = vsub.f32 %v378, %v767
  %v793 = vsub.f32 %v454, %v772
  %v794 = vsub.f32 %v530, %v777
  %v795 = vsub.f32 %v606, %v782
  %v796 = vsub.f32 %v682, %v787
  %v797 = vmul.f32 %v789, 1.442695
  %v798 = vpow.pop %v797
  %v799 = vmul.f32 %v790, 1.442695
  %v800 = vpow.pop %v799
  %v801 = vmul.f32 %v791, 1.442695
  %v802 = vpow.pop %v801
  %v803 = vmul.f32 %v792, 1.442695
  %v804 = vpow.pop %v803
  %v805 = vmul.f32 %v793, 1.442695
  %v806 = vpow.pop %v805
  %v807 = vmul.f32 %v794, 1.442695
  %v808 = vpow.pop %v807
  %v809 = vmul.f32 %v795, 1.442695
  %v810 = vpow.pop %v809
  %v811 = vmul.f32 %v796, 1.442695
  %v812 = vpow.pop %v811
  %v813 = vld [vmem:[#allocation3] sm:$0xff]
  %v814 = vld [vmem:[#allocation3 + $0x8] sm:$0xff]
  %v815 = vld [vmem:[#allocation3 + $0x10] sm:$0xff]
  %v816 = vld [vmem:[#allocation3 + $0x18] sm:$0xff]
  %v817 = vld [vmem:[#allocation3 + $0x20] sm:$0xff]
  %v818 = vld [vmem:[#allocation3 + $0x28] sm:$0xff]
  %v819 = vld [vmem:[#allocation3 + $0x30] sm:$0xff]
  %v820 = vld [vmem:[#allocation3 + $0x38] sm:$0xff]
  %v821 = vmul.f32 %v734, %v813
  %v822 = vmul.f32 %v736, %v814
  %v823 = vmul.f32 %v738, %v815
  %v824 = vmul.f32 %v740, %v816
  %v825 = vmul.f32 %v742, %v817
  %v826 = vmul.f32 %v744, %v818
  %v827 = vmul.f32 %v746, %v819
  %v828 = vmul.f32 %v748, %v820
  %v829 = vsel %vm76, %v798, 0.0
  %830 = vadd.xlane.f32.xlu0 %v829
  %v831 = vpop.xlane.xlu0 %830
  %v832 = vsel %vm76, %v800, 0.0
  %833 = vadd.xlane.f32.xlu0 %v832
  %v834 = vpop.xlane.xlu0 %833
  %v835 = vsel %vm76, %v802, 0.0
  %836 = vadd.xlane.f32.xlu0 %v835
  %v837 = vpop.xlane.xlu0 %836
  %v838 = vsel %vm76, %v804, 0.0
  %839 = vadd.xlane.f32.xlu0 %v838
  %v840 = vpop.xlane.xlu0 %839
  %v841 = vsel %vm76, %v806, 0.0
  %842 = vadd.xlane.f32.xlu0 %v841
  %v843 = vpop.xlane.xlu0 %842
  %v844 = vsel %vm76, %v808, 0.0
  %845 = vadd.xlane.f32.xlu0 %v844
  %v846 = vpop.xlane.xlu0 %845
  %v847 = vsel %vm76, %v810, 0.0
  %848 = vadd.xlane.f32.xlu0 %v847
  %v849 = vpop.xlane.xlu0 %848
  %v850 = vsel %vm76, %v812, 0.0
  %851 = vadd.xlane.f32.xlu0 %v850
  %v852 = vpop.xlane.xlu0 %851
  %v853 = vadd.f32 %v821, %v831
  %v854 = vadd.f32 %v822, %v834
  %v855 = vadd.f32 %v823, %v837
  %v856 = vadd.f32 %v824, %v840
  %v857 = vadd.f32 %v825, %v843
  %v858 = vadd.f32 %v826, %v846
  %v859 = vadd.f32 %v827, %v849
  %v860 = vadd.f32 %v828, %v852
  %vm861 = vcmask 7168
  %862 = vst.msk [vmem:[#allocation3] sm:$0xff] %vm861, %v853
  %863 = vst.msk [vmem:[#allocation3 + $0x8] sm:$0xff] %vm861, %v854
  %864 = vst.msk [vmem:[#allocation3 + $0x10] sm:$0xff] %vm861, %v855
  %865 = vst.msk [vmem:[#allocation3 + $0x18] sm:$0xff] %vm861, %v856
  %866 = vst.msk [vmem:[#allocation3 + $0x20] sm:$0xff] %vm861, %v857
  %867 = vst.msk [vmem:[#allocation3 + $0x28] sm:$0xff] %vm861, %v858
  %868 = vst.msk [vmem:[#allocation3 + $0x30] sm:$0xff] %vm861, %v859
  %869 = vst.msk [vmem:[#allocation3 + $0x38] sm:$0xff] %vm861, %v860
  %v870 = vld [vmem:[#allocation4] sm:$0xff]
  %v871 = vld [vmem:[#allocation4 + $0x8] sm:$0xff]
  %v872 = vld [vmem:[#allocation4 + $0x10] sm:$0xff]
  %v873 = vld [vmem:[#allocation4 + $0x18] sm:$0xff]
  %v874 = vld [vmem:[#allocation4 + $0x20] sm:$0xff]
  %v875 = vld [vmem:[#allocation4 + $0x28] sm:$0xff]
  %v876 = vld [vmem:[#allocation4 + $0x30] sm:$0xff]
  %v877 = vld [vmem:[#allocation4 + $0x38] sm:$0xff]
  %879 = vset.pattern.permute.xlu0 0
  %880 = vperm.xlu0 %879, %v734
  %v881 = vpop.permute.xlu0 %880
  %884 = vset.pattern.permute.xlu0 0
  %885 = vperm.xlu0 %884, %v736
  %v886 = vpop.permute.xlu0 %885
  %889 = vset.pattern.permute.xlu0 0
  %890 = vperm.xlu0 %889, %v738
  %v891 = vpop.permute.xlu0 %890
  %894 = vset.pattern.permute.xlu0 0
  %895 = vperm.xlu0 %894, %v740
  %v896 = vpop.permute.xlu0 %895
  %899 = vset.pattern.permute.xlu0 0
  %900 = vperm.xlu0 %899, %v742
  %v901 = vpop.permute.xlu0 %900
  %904 = vset.pattern.permute.xlu0 0
  %905 = vperm.xlu0 %904, %v744
  %v906 = vpop.permute.xlu0 %905
  %909 = vset.pattern.permute.xlu0 0
  %910 = vperm.xlu0 %909, %v746
  %v911 = vpop.permute.xlu0 %910
  %914 = vset.pattern.permute.xlu0 0
  %915 = vperm.xlu0 %914, %v748
  %v916 = vpop.permute.xlu0 %915
  %v918 = vmul.f32 %v881, %v870
  %v919 = vmul.f32 %v886, %v871
  %v920 = vmul.f32 %v891, %v872
  %v921 = vmul.f32 %v896, %v873
  %v922 = vmul.f32 %v901, %v874
  %v923 = vmul.f32 %v906, %v875
  %v924 = vmul.f32 %v911, %v876
  %v925 = vmul.f32 %v916, %v877
  %v927 = vsel %vm76, %v798, 0
  %929 = vmatprep.subr.mxu0 0.0
  %930 = vmatpush1.msra.mxu0 %v68
  %931 = vmatprep.subr.mxu0 0.0
  %932 = vmatpush1.msra.mxu0 0.0
  %933 = vmatprep.subr.mxu0 0.0
  %934 = vmatpush1.msra.mxu0 0.0
  %935 = vmatprep.subr.mxu0 0.0
  %936 = vmatpush1.msra.mxu0 0.0
  %937 = vmatprep.subr.mxu0 0.0
  %938 = vmatpush1.msra.mxu0 0.0
  %939 = vmatprep.subr.mxu0 0.0
  %940 = vmatpush1.msra.mxu0 0.0
  %941 = vmatprep.subr.mxu0 0.0
  %942 = vmatpush1.msra.mxu0 0.0
  %943 = vmatprep.subr.mxu0 0.0
  %944 = vmatpush1.msra.mxu0 0.0
  %945 = vmatprep.subr.mxu0 0.0
  %946 = vmatpush1.msra.mxu0 0.0
  %947 = vmatprep.subr.mxu0 0.0
  %948 = vmatpush1.msra.mxu0 0.0
  %949 = vmatprep.subr.mxu0 0.0
  %950 = vmatpush1.msra.mxu0 0.0
  %951 = vmatprep.subr.mxu0 0.0
  %952 = vmatpush1.msra.mxu0 0.0
  %953 = vmatprep.subr.mxu0 0.0
  %954 = vmatpush1.msra.mxu0 0.0
  %955 = vmatprep.subr.mxu0 0.0
  %956 = vmatpush1.msra.mxu0 0.0
  %957 = vmatprep.subr.mxu0 0.0
  %958 = vmatpush1.msra.mxu0 0.0
  %959 = vmatprep.subr.mxu0 0.0
  %960 = vmatpush1.msra.mxu0 0.0
  %961 = vmatprep.subr.mxu0 0.0
  %962 = vmatpush1.msra.mxu0 0.0
  %963 = vmatprep.subr.mxu0 0.0
  %964 = vmatpush1.msra.mxu0 0.0
  %965 = vmatprep.subr.mxu0 0.0
  %966 = vmatpush1.msra.mxu0 0.0
  %967 = vmatprep.subr.mxu0 0.0
  %968 = vmatpush1.msra.mxu0 0.0
  %969 = vmatprep.subr.mxu0 0.0
  %970 = vmatpush1.msra.mxu0 0.0
  %971 = vmatprep.subr.mxu0 0.0
  %972 = vmatpush1.msra.mxu0 0.0
  %973 = vmatprep.subr.mxu0 0.0
  %974 = vmatpush1.msra.mxu0 0.0
  %975 = vmatprep.subr.mxu0 0.0
  %976 = vmatpush1.msra.mxu0 0.0
  %977 = vmatprep.subr.mxu0 0.0
  %978 = vmatpush1.msra.mxu0 0.0
  %979 = vmatprep.subr.mxu0 0.0
  %980 = vmatpush1.msra.mxu0 0.0
  %981 = vmatprep.subr.mxu0 0.0
  %982 = vmatpush1.msra.mxu0 0.0
  %983 = vmatprep.subr.mxu0 0.0
  %984 = vmatpush1.msra.mxu0 0.0
  %985 = vmatprep.subr.mxu0 0.0
  %986 = vmatpush1.msra.mxu0 0.0
  %987 = vmatprep.subr.mxu0 0.0
  %988 = vmatpush1.msra.mxu0 0.0
  %989 = vmatprep.subr.mxu0 0.0
  %990 = vmatpush1.msra.mxu0 0.0
  %991 = vmatprep.subr.mxu0 0.0
  %992 = vmatpush1.msra.mxu0 0.0
  %993 = vmatprep.mubr.f32.mxu0 0.0
  %994 = vmatmul.mubr.f32.gmra.mrb[0].mxu0 %v927
  %v995 = vpop.f32.mrb[0].mxu0
  %v996 = vadd.f32 0.0, %v995
  %v997 = vpop.f32.mrb[0].mxu0
  %998 = vdwg.mxu0
  %v1000 = vsel %vm76, %v800, 0
  %1002 = vmatprep.subr.mxu0 0.0
  %1003 = vmatpush1.msra.mxu0 %v69
  %1004 = vmatprep.subr.mxu0 0.0
  %1005 = vmatpush1.msra.mxu0 0.0
  %1006 = vmatprep.subr.mxu0 0.0
  %1007 = vmatpush1.msra.mxu0 0.0
  %1008 = vmatprep.subr.mxu0 0.0
  %1009 = vmatpush1.msra.mxu0 0.0
  %1010 = vmatprep.subr.mxu0 0.0
  %1011 = vmatpush1.msra.mxu0 0.0
  %1012 = vmatprep.subr.mxu0 0.0
  %1013 = vmatpush1.msra.mxu0 0.0
  %1014 = vmatprep.subr.mxu0 0.0
  %1015 = vmatpush1.msra.mxu0 0.0
  %1016 = vmatprep.subr.mxu0 0.0
  %1017 = vmatpush1.msra.mxu0 0.0
  %1018 = vmatprep.subr.mxu0 0.0
  %1019 = vmatpush1.msra.mxu0 0.0
  %1020 = vmatprep.subr.mxu0 0.0
  %1021 = vmatpush1.msra.mxu0 0.0
  %1022 = vmatprep.subr.mxu0 0.0
  %1023 = vmatpush1.msra.mxu0 0.0
  %1024 = vmatprep.subr.mxu0 0.0
  %1025 = vmatpush1.msra.mxu0 0.0
  %1026 = vmatprep.subr.mxu0 0.0
  %1027 = vmatpush1.msra.mxu0 0.0
  %1028 = vmatprep.subr.mxu0 0.0
  %1029 = vmatpush1.msra.mxu0 0.0
  %1030 = vmatprep.subr.mxu0 0.0
  %1031 = vmatpush1.msra.mxu0 0.0
  %1032 = vmatprep.subr.mxu0 0.0
  %1033 = vmatpush1.msra.mxu0 0.0
  %1034 = vmatprep.subr.mxu0 0.0
  %1035 = vmatpush1.msra.mxu0 0.0
  %1036 = vmatprep.subr.mxu0 0.0
  %1037 = vmatpush1.msra.mxu0 0.0
  %1038 = vmatprep.subr.mxu0 0.0
  %1039 = vmatpush1.msra.mxu0 0.0
  %1040 = vmatprep.subr.mxu0 0.0
  %1041 = vmatpush1.msra.mxu0 0.0
  %1042 = vmatprep.subr.mxu0 0.0
  %1043 = vmatpush1.msra.mxu0 0.0
  %1044 = vmatprep.subr.mxu0 0.0
  %1045 = vmatpush1.msra.mxu0 0.0
  %1046 = vmatprep.subr.mxu0 0.0
  %1047 = vmatpush1.msra.mxu0 0.0
  %1048 = vmatprep.subr.mxu0 0.0
  %1049 = vmatpush1.msra.mxu0 0.0
  %1050 = vmatprep.subr.mxu0 0.0
  %1051 = vmatpush1.msra.mxu0 0.0
  %1052 = vmatprep.subr.mxu0 0.0
  %1053 = vmatpush1.msra.mxu0 0.0
  %1054 = vmatprep.subr.mxu0 0.0
  %1055 = vmatpush1.msra.mxu0 0.0
  %1056 = vmatprep.subr.mxu0 0.0
  %1057 = vmatpush1.msra.mxu0 0.0
  %1058 = vmatprep.subr.mxu0 0.0
  %1059 = vmatpush1.msra.mxu0 0.0
  %1060 = vmatprep.subr.mxu0 0.0
  %1061 = vmatpush1.msra.mxu0 0.0
  %1062 = vmatprep.subr.mxu0 0.0
  %1063 = vmatpush1.msra.mxu0 0.0
  %1064 = vmatprep.subr.mxu0 0.0
  %1065 = vmatpush1.msra.mxu0 0.0
  %1066 = vmatprep.mubr.f32.mxu0 0.0
  %1067 = vmatmul.mubr.f32.gmra.mrb[0].mxu0 %v1000
  %v1068 = vpop.f32.mrb[0].mxu0
  %v1069 = vadd.f32 0.0, %v1068
  %v1070 = vpop.f32.mrb[0].mxu0
  %1071 = vdwg.mxu0
  %v1073 = vsel %vm76, %v802, 0
  %1075 = vmatprep.subr.mxu0 0.0
  %1076 = vmatpush1.msra.mxu0 %v70
  %1077 = vmatprep.subr.mxu0 0.0
  %1078 = vmatpush1.msra.mxu0 0.0
  %1079 = vmatprep.subr.mxu0 0.0
  %1080 = vmatpush1.msra.mxu0 0.0
  %1081 = vmatprep.subr.mxu0 0.0
  %1082 = vmatpush1.msra.mxu0 0.0
  %1083 = vmatprep.subr.mxu0 0.0
  %1084 = vmatpush1.msra.mxu0 0.0
  %1085 = vmatprep.subr.mxu0 0.0
  %1086 = vmatpush1.msra.mxu0 0.0
  %1087 = vmatprep.subr.mxu0 0.0
  %1088 = vmatpush1.msra.mxu0 0.0
  %1089 = vmatprep.subr.mxu0 0.0
  %1090 = vmatpush1.msra.mxu0 0.0
  %1091 = vmatprep.subr.mxu0 0.0
  %1092 = vmatpush1.msra.mxu0 0.0
  %1093 = vmatprep.subr.mxu0 0.0
  %1094 = vmatpush1.msra.mxu0 0.0
  %1095 = vmatprep.subr.mxu0 0.0
  %1096 = vmatpush1.msra.mxu0 0.0
  %1097 = vmatprep.subr.mxu0 0.0
  %1098 = vmatpush1.msra.mxu0 0.0
  %1099 = vmatprep.subr.mxu0 0.0
  %1100 = vmatpush1.msra.mxu0 0.0
  %1101 = vmatprep.subr.mxu0 0.0
  %1102 = vmatpush1.msra.mxu0 0.0
  %1103 = vmatprep.subr.mxu0 0.0
  %1104 = vmatpush1.msra.mxu0 0.0
  %1105 = vmatprep.subr.mxu0 0.0
  %1106 = vmatpush1.msra.mxu0 0.0
  %1107 = vmatprep.subr.mxu0 0.0
  %1108 = vmatpush1.msra.mxu0 0.0
  %1109 = vmatprep.subr.mxu0 0.0
  %1110 = vmatpush1.msra.mxu0 0.0
  %1111 = vmatprep.subr.mxu0 0.0
  %1112 = vmatpush1.msra.mxu0 0.0
  %1113 = vmatprep.subr.mxu0 0.0
  %1114 = vmatpush1.msra.mxu0 0.0
  %1115 = vmatprep.subr.mxu0 0.0
  %1116 = vmatpush1.msra.mxu0 0.0
  %1117 = vmatprep.subr.mxu0 0.0
  %1118 = vmatpush1.msra.mxu0 0.0
  %1119 = vmatprep.subr.mxu0 0.0
  %1120 = vmatpush1.msra.mxu0 0.0
  %1121 = vmatprep.subr.mxu0 0.0
  %1122 = vmatpush1.msra.mxu0 0.0
  %1123 = vmatprep.subr.mxu0 0.0
  %1124 = vmatpush1.msra.mxu0 0.0
  %1125 = vmatprep.subr.mxu0 0.0
  %1126 = vmatpush1.msra.mxu0 0.0
  %1127 = vmatprep.subr.mxu0 0.0
  %1128 = vmatpush1.msra.mxu0 0.0
  %1129 = vmatprep.subr.mxu0 0.0
  %1130 = vmatpush1.msra.mxu0 0.0
  %1131 = vmatprep.subr.mxu0 0.0
  %1132 = vmatpush1.msra.mxu0 0.0
  %1133 = vmatprep.subr.mxu0 0.0
  %1134 = vmatpush1.msra.mxu0 0.0
  %1135 = vmatprep.subr.mxu0 0.0
  %1136 = vmatpush1.msra.mxu0 0.0
  %1137 = vmatprep.subr.mxu0 0.0
  %1138 = vmatpush1.msra.mxu0 0.0
  %1139 = vmatprep.mubr.f32.mxu0 0.0
  %1140 = vmatmul.mubr.f32.gmra.mrb[0].mxu0 %v1073
  %v1141 = vpop.f32.mrb[0].mxu0
  %v1142 = vadd.f32 0.0, %v1141
  %v1143 = vpop.f32.mrb[0].mxu0
  %1144 = vdwg.mxu0
  %v1146 = vsel %vm76, %v804, 0
  %1148 = vmatprep.subr.mxu0 0.0
  %1149 = vmatpush1.msra.mxu0 %v71
  %1150 = vmatprep.subr.mxu0 0.0
  %1151 = vmatpush1.msra.mxu0 0.0
  %1152 = vmatprep.subr.mxu0 0.0
  %1153 = vmatpush1.msra.mxu0 0.0
  %1154 = vmatprep.subr.mxu0 0.0
  %1155 = vmatpush1.msra.mxu0 0.0
  %1156 = vmatprep.subr.mxu0 0.0
  %1157 = vmatpush1.msra.mxu0 0.0
  %1158 = vmatprep.subr.mxu0 0.0
  %1159 = vmatpush1.msra.mxu0 0.0
  %1160 = vmatprep.subr.mxu0 0.0
  %1161 = vmatpush1.msra.mxu0 0.0
  %1162 = vmatprep.subr.mxu0 0.0
  %1163 = vmatpush1.msra.mxu0 0.0
  %1164 = vmatprep.subr.mxu0 0.0
  %1165 = vmatpush1.msra.mxu0 0.0
  %1166 = vmatprep.subr.mxu0 0.0
  %1167 = vmatpush1.msra.mxu0 0.0
  %1168 = vmatprep.subr.mxu0 0.0
  %1169 = vmatpush1.msra.mxu0 0.0
  %1170 = vmatprep.subr.mxu0 0.0
  %1171 = vmatpush1.msra.mxu0 0.0
  %1172 = vmatprep.subr.mxu0 0.0
  %1173 = vmatpush1.msra.mxu0 0.0
  %1174 = vmatprep.subr.mxu0 0.0
  %1175 = vmatpush1.msra.mxu0 0.0
  %1176 = vmatprep.subr.mxu0 0.0
  %1177 = vmatpush1.msra.mxu0 0.0
  %1178 = vmatprep.subr.mxu0 0.0
  %1179 = vmatpush1.msra.mxu0 0.0
  %1180 = vmatprep.subr.mxu0 0.0
  %1181 = vmatpush1.msra.mxu0 0.0
  %1182 = vmatprep.subr.mxu0 0.0
  %1183 = vmatpush1.msra.mxu0 0.0
  %1184 = vmatprep.subr.mxu0 0.0
  %1185 = vmatpush1.msra.mxu0 0.0
  %1186 = vmatprep.subr.mxu0 0.0
  %1187 = vmatpush1.msra.mxu0 0.0
  %1188 = vmatprep.subr.mxu0 0.0
  %1189 = vmatpush1.msra.mxu0 0.0
  %1190 = vmatprep.subr.mxu0 0.0
  %1191 = vmatpush1.msra.mxu0 0.0
  %1192 = vmatprep.subr.mxu0 0.0
  %1193 = vmatpush1.msra.mxu0 0.0
  %1194 = vmatprep.subr.mxu0 0.0
  %1195 = vmatpush1.msra.mxu0 0.0
  %1196 = vmatprep.subr.mxu0 0.0
  %1197 = vmatpush1.msra.mxu0 0.0
  %1198 = vmatprep.subr.mxu0 0.0
  %1199 = vmatpush1.msra.mxu0 0.0
  %1200 = vmatprep.subr.mxu0 0.0
  %1201 = vmatpush1.msra.mxu0 0.0
  %1202 = vmatprep.subr.mxu0 0.0
  %1203 = vmatpush1.msra.mxu0 0.0
  %1204 = vmatprep.subr.mxu0 0.0
  %1205 = vmatpush1.msra.mxu0 0.0
  %1206 = vmatprep.subr.mxu0 0.0
  %1207 = vmatpush1.msra.mxu0 0.0
  %1208 = vmatprep.subr.mxu0 0.0
  %1209 = vmatpush1.msra.mxu0 0.0
  %1210 = vmatprep.subr.mxu0 0.0
  %1211 = vmatpush1.msra.mxu0 0.0
  %1212 = vmatprep.mubr.f32.mxu0 0.0
  %1213 = vmatmul.mubr.f32.gmra.mrb[0].mxu0 %v1146
  %v1214 = vpop.f32.mrb[0].mxu0
  %v1215 = vadd.f32 0.0, %v1214
  %v1216 = vpop.f32.mrb[0].mxu0
  %1217 = vdwg.mxu0
  %v1219 = vsel %vm76, %v806, 0
  %1221 = vmatprep.subr.mxu0 0.0
  %1222 = vmatpush1.msra.mxu0 %v72
  %1223 = vmatprep.subr.mxu0 0.0
  %1224 = vmatpush1.msra.mxu0 0.0
  %1225 = vmatprep.subr.mxu0 0.0
  %1226 = vmatpush1.msra.mxu0 0.0
  %1227 = vmatprep.subr.mxu0 0.0
  %1228 = vmatpush1.msra.mxu0 0.0
  %1229 = vmatprep.subr.mxu0 0.0
  %1230 = vmatpush1.msra.mxu0 0.0
  %1231 = vmatprep.subr.mxu0 0.0
  %1232 = vmatpush1.msra.mxu0 0.0
  %1233 = vmatprep.subr.mxu0 0.0
  %1234 = vmatpush1.msra.mxu0 0.0
  %1235 = vmatprep.subr.mxu0 0.0
  %1236 = vmatpush1.msra.mxu0 0.0
  %1237 = vmatprep.subr.mxu0 0.0
  %1238 = vmatpush1.msra.mxu0 0.0
  %1239 = vmatprep.subr.mxu0 0.0
  %1240 = vmatpush1.msra.mxu0 0.0
  %1241 = vmatprep.subr.mxu0 0.0
  %1242 = vmatpush1.msra.mxu0 0.0
  %1243 = vmatprep.subr.mxu0 0.0
  %1244 = vmatpush1.msra.mxu0 0.0
  %1245 = vmatprep.subr.mxu0 0.0
  %1246 = vmatpush1.msra.mxu0 0.0
  %1247 = vmatprep.subr.mxu0 0.0
  %1248 = vmatpush1.msra.mxu0 0.0
  %1249 = vmatprep.subr.mxu0 0.0
  %1250 = vmatpush1.msra.mxu0 0.0
  %1251 = vmatprep.subr.mxu0 0.0
  %1252 = vmatpush1.msra.mxu0 0.0
  %1253 = vmatprep.subr.mxu0 0.0
  %1254 = vmatpush1.msra.mxu0 0.0
  %1255 = vmatprep.subr.mxu0 0.0
  %1256 = vmatpush1.msra.mxu0 0.0
  %1257 = vmatprep.subr.mxu0 0.0
  %1258 = vmatpush1.msra.mxu0 0.0
  %1259 = vmatprep.subr.mxu0 0.0
  %1260 = vmatpush1.msra.mxu0 0.0
  %1261 = vmatprep.subr.mxu0 0.0
  %1262 = vmatpush1.msra.mxu0 0.0
  %1263 = vmatprep.subr.mxu0 0.0
  %1264 = vmatpush1.msra.mxu0 0.0
  %1265 = vmatprep.subr.mxu0 0.0
  %1266 = vmatpush1.msra.mxu0 0.0
  %1267 = vmatprep.subr.mxu0 0.0
  %1268 = vmatpush1.msra.mxu0 0.0
  %1269 = vmatprep.subr.mxu0 0.0
  %1270 = vmatpush1.msra.mxu0 0.0
  %1271 = vmatprep.subr.mxu0 0.0
  %1272 = vmatpush1.msra.mxu0 0.0
  %1273 = vmatprep.subr.mxu0 0.0
  %1274 = vmatpush1.msra.mxu0 0.0
  %1275 = vmatprep.subr.mxu0 0.0
  %1276 = vmatpush1.msra.mxu0 0.0
  %1277 = vmatprep.subr.mxu0 0.0
  %1278 = vmatpush1.msra.mxu0 0.0
  %1279 = vmatprep.subr.mxu0 0.0
  %1280 = vmatpush1.msra.mxu0 0.0
  %1281 = vmatprep.subr.mxu0 0.0
  %1282 = vmatpush1.msra.mxu0 0.0
  %1283 = vmatprep.subr.mxu0 0.0
  %1284 = vmatpush1.msra.mxu0 0.0
  %1285 = vmatprep.mubr.f32.mxu0 0.0
  %1286 = vmatmul.mubr.f32.gmra.mrb[0].mxu0 %v1219
  %v1287 = vpop.f32.mrb[0].mxu0
  %v1288 = vadd.f32 0.0, %v1287
  %v1289 = vpop.f32.mrb[0].mxu0
  %1290 = vdwg.mxu0
  %v1292 = vsel %vm76, %v808, 0
  %1294 = vmatprep.subr.mxu0 0.0
  %1295 = vmatpush1.msra.mxu0 %v73
  %1296 = vmatprep.subr.mxu0 0.0
  %1297 = vmatpush1.msra.mxu0 0.0
  %1298 = vmatprep.subr.mxu0 0.0
  %1299 = vmatpush1.msra.mxu0 0.0
  %1300 = vmatprep.subr.mxu0 0.0
  %1301 = vmatpush1.msra.mxu0 0.0
  %1302 = vmatprep.subr.mxu0 0.0
  %1303 = vmatpush1.msra.mxu0 0.0
  %1304 = vmatprep.subr.mxu0 0.0
  %1305 = vmatpush1.msra.mxu0 0.0
  %1306 = vmatprep.subr.mxu0 0.0
  %1307 = vmatpush1.msra.mxu0 0.0
  %1308 = vmatprep.subr.mxu0 0.0
  %1309 = vmatpush1.msra.mxu0 0.0
  %1310 = vmatprep.subr.mxu0 0.0
  %1311 = vmatpush1.msra.mxu0 0.0
  %1312 = vmatprep.subr.mxu0 0.0
  %1313 = vmatpush1.msra.mxu0 0.0
  %1314 = vmatprep.subr.mxu0 0.0
  %1315 = vmatpush1.msra.mxu0 0.0
  %1316 = vmatprep.subr.mxu0 0.0
  %1317 = vmatpush1.msra.mxu0 0.0
  %1318 = vmatprep.subr.mxu0 0.0
  %1319 = vmatpush1.msra.mxu0 0.0
  %1320 = vmatprep.subr.mxu0 0.0
  %1321 = vmatpush1.msra.mxu0 0.0
  %1322 = vmatprep.subr.mxu0 0.0
  %1323 = vmatpush1.msra.mxu0 0.0
  %1324 = vmatprep.subr.mxu0 0.0
  %1325 = vmatpush1.msra.mxu0 0.0
  %1326 = vmatprep.subr.mxu0 0.0
  %1327 = vmatpush1.msra.mxu0 0.0
  %1328 = vmatprep.subr.mxu0 0.0
  %1329 = vmatpush1.msra.mxu0 0.0
  %1330 = vmatprep.subr.mxu0 0.0
  %1331 = vmatpush1.msra.mxu0 0.0
  %1332 = vmatprep.subr.mxu0 0.0
  %1333 = vmatpush1.msra.mxu0 0.0
  %1334 = vmatprep.subr.mxu0 0.0
  %1335 = vmatpush1.msra.mxu0 0.0
  %1336 = vmatprep.subr.mxu0 0.0
  %1337 = vmatpush1.msra.mxu0 0.0
  %1338 = vmatprep.subr.mxu0 0.0
  %1339 = vmatpush1.msra.mxu0 0.0
  %1340 = vmatprep.subr.mxu0 0.0
  %1341 = vmatpush1.msra.mxu0 0.0
  %1342 = vmatprep.subr.mxu0 0.0
  %1343 = vmatpush1.msra.mxu0 0.0
  %1344 = vmatprep.subr.mxu0 0.0
  %1345 = vmatpush1.msra.mxu0 0.0
  %1346 = vmatprep.subr.mxu0 0.0
  %1347 = vmatpush1.msra.mxu0 0.0
  %1348 = vmatprep.subr.mxu0 0.0
  %1349 = vmatpush1.msra.mxu0 0.0
  %1350 = vmatprep.subr.mxu0 0.0
  %1351 = vmatpush1.msra.mxu0 0.0
  %1352 = vmatprep.subr.mxu0 0.0
  %1353 = vmatpush1.msra.mxu0 0.0
  %1354 = vmatprep.subr.mxu0 0.0
  %1355 = vmatpush1.msra.mxu0 0.0
  %1356 = vmatprep.subr.mxu0 0.0
  %1357 = vmatpush1.msra.mxu0 0.0
  %1358 = vmatprep.mubr.f32.mxu0 0.0
  %1359 = vmatmul.mubr.f32.gmra.mrb[0].mxu0 %v1292
  %v1360 = vpop.f32.mrb[0].mxu0
  %v1361 = vadd.f32 0.0, %v1360
  %v1362 = vpop.f32.mrb[0].mxu0
  %1363 = vdwg.mxu0
  %v1365 = vsel %vm76, %v810, 0
  %1367 = vmatprep.subr.mxu0 0.0
  %1368 = vmatpush1.msra.mxu0 %v74
  %1369 = vmatprep.subr.mxu0 0.0
  %1370 = vmatpush1.msra.mxu0 0.0
  %1371 = vmatprep.subr.mxu0 0.0
  %1372 = vmatpush1.msra.mxu0 0.0
  %1373 = vmatprep.subr.mxu0 0.0
  %1374 = vmatpush1.msra.mxu0 0.0
  %1375 = vmatprep.subr.mxu0 0.0
  %1376 = vmatpush1.msra.mxu0 0.0
  %1377 = vmatprep.subr.mxu0 0.0
  %1378 = vmatpush1.msra.mxu0 0.0
  %1379 = vmatprep.subr.mxu0 0.0
  %1380 = vmatpush1.msra.mxu0 0.0
  %1381 = vmatprep.subr.mxu0 0.0
  %1382 = vmatpush1.msra.mxu0 0.0
  %1383 = vmatprep.subr.mxu0 0.0
  %1384 = vmatpush1.msra.mxu0 0.0
  %1385 = vmatprep.subr.mxu0 0.0
  %1386 = vmatpush1.msra.mxu0 0.0
  %1387 = vmatprep.subr.mxu0 0.0
  %1388 = vmatpush1.msra.mxu0 0.0
  %1389 = vmatprep.subr.mxu0 0.0
  %1390 = vmatpush1.msra.mxu0 0.0
  %1391 = vmatprep.subr.mxu0 0.0
  %1392 = vmatpush1.msra.mxu0 0.0
  %1393 = vmatprep.subr.mxu0 0.0
  %1394 = vmatpush1.msra.mxu0 0.0
  %1395 = vmatprep.subr.mxu0 0.0
  %1396 = vmatpush1.msra.mxu0 0.0
  %1397 = vmatprep.subr.mxu0 0.0
  %1398 = vmatpush1.msra.mxu0 0.0
  %1399 = vmatprep.subr.mxu0 0.0
  %1400 = vmatpush1.msra.mxu0 0.0
  %1401 = vmatprep.subr.mxu0 0.0
  %1402 = vmatpush1.msra.mxu0 0.0
  %1403 = vmatprep.subr.mxu0 0.0
  %1404 = vmatpush1.msra.mxu0 0.0
  %1405 = vmatprep.subr.mxu0 0.0
  %1406 = vmatpush1.msra.mxu0 0.0
  %1407 = vmatprep.subr.mxu0 0.0
  %1408 = vmatpush1.msra.mxu0 0.0
  %1409 = vmatprep.subr.mxu0 0.0
  %1410 = vmatpush1.msra.mxu0 0.0
  %1411 = vmatprep.subr.mxu0 0.0
  %1412 = vmatpush1.msra.mxu0 0.0
  %1413 = vmatprep.subr.mxu0 0.0
  %1414 = vmatpush1.msra.mxu0 0.0
  %1415 = vmatprep.subr.mxu0 0.0
  %1416 = vmatpush1.msra.mxu0 0.0
  %1417 = vmatprep.subr.mxu0 0.0
  %1418 = vmatpush1.msra.mxu0 0.0
  %1419 = vmatprep.subr.mxu0 0.0
  %1420 = vmatpush1.msra.mxu0 0.0
  %1421 = vmatprep.subr.mxu0 0.0
  %1422 = vmatpush1.msra.mxu0 0.0
  %1423 = vmatprep.subr.mxu0 0.0
  %1424 = vmatpush1.msra.mxu0 0.0
  %1425 = vmatprep.subr.mxu0 0.0
  %1426 = vmatpush1.msra.mxu0 0.0
  %1427 = vmatprep.subr.mxu0 0.0
  %1428 = vmatpush1.msra.mxu0 0.0
  %1429 = vmatprep.subr.mxu0 0.0
  %1430 = vmatpush1.msra.mxu0 0.0
  %1431 = vmatprep.mubr.f32.mxu0 0.0
  %1432 = vmatmul.mubr.f32.gmra.mrb[0].mxu0 %v1365
  %v1433 = vpop.f32.mrb[0].mxu0
  %v1434 = vadd.f32 0.0, %v1433
  %v1435 = vpop.f32.mrb[0].mxu0
  %1436 = vdwg.mxu0
  %v1438 = vsel %vm76, %v812, 0
  %1440 = vmatprep.subr.mxu0 0.0
  %1441 = vmatpush1.msra.mxu0 %v75
  %1442 = vmatprep.subr.mxu0 0.0
  %1443 = vmatpush1.msra.mxu0 0.0
  %1444 = vmatprep.subr.mxu0 0.0
  %1445 = vmatpush1.msra.mxu0 0.0
  %1446 = vmatprep.subr.mxu0 0.0
  %1447 = vmatpush1.msra.mxu0 0.0
  %1448 = vmatprep.subr.mxu0 0.0
  %1449 = vmatpush1.msra.mxu0 0.0
  %1450 = vmatprep.subr.mxu0 0.0
  %1451 = vmatpush1.msra.mxu0 0.0
  %1452 = vmatprep.subr.mxu0 0.0
  %1453 = vmatpush1.msra.mxu0 0.0
  %1454 = vmatprep.subr.mxu0 0.0
  %1455 = vmatpush1.msra.mxu0 0.0
  %1456 = vmatprep.subr.mxu0 0.0
  %1457 = vmatpush1.msra.mxu0 0.0
  %1458 = vmatprep.subr.mxu0 0.0
  %1459 = vmatpush1.msra.mxu0 0.0
  %1460 = vmatprep.subr.mxu0 0.0
  %1461 = vmatpush1.msra.mxu0 0.0
  %1462 = vmatprep.subr.mxu0 0.0
  %1463 = vmatpush1.msra.mxu0 0.0
  %1464 = vmatprep.subr.mxu0 0.0
  %1465 = vmatpush1.msra.mxu0 0.0
  %1466 = vmatprep.subr.mxu0 0.0
  %1467 = vmatpush1.msra.mxu0 0.0
  %1468 = vmatprep.subr.mxu0 0.0
  %1469 = vmatpush1.msra.mxu0 0.0
  %1470 = vmatprep.subr.mxu0 0.0
  %1471 = vmatpush1.msra.mxu0 0.0
  %1472 = vmatprep.subr.mxu0 0.0
  %1473 = vmatpush1.msra.mxu0 0.0
  %1474 = vmatprep.subr.mxu0 0.0
  %1475 = vmatpush1.msra.mxu0 0.0
  %1476 = vmatprep.subr.mxu0 0.0
  %1477 = vmatpush1.msra.mxu0 0.0
  %1478 = vmatprep.subr.mxu0 0.0
  %1479 = vmatpush1.msra.mxu0 0.0
  %1480 = vmatprep.subr.mxu0 0.0
  %1481 = vmatpush1.msra.mxu0 0.0
  %1482 = vmatprep.subr.mxu0 0.0
  %1483 = vmatpush1.msra.mxu0 0.0
  %1484 = vmatprep.subr.mxu0 0.0
  %1485 = vmatpush1.msra.mxu0 0.0
  %1486 = vmatprep.subr.mxu0 0.0
  %1487 = vmatpush1.msra.mxu0 0.0
  %1488 = vmatprep.subr.mxu0 0.0
  %1489 = vmatpush1.msra.mxu0 0.0
  %1490 = vmatprep.subr.mxu0 0.0
  %1491 = vmatpush1.msra.mxu0 0.0
  %1492 = vmatprep.subr.mxu0 0.0
  %1493 = vmatpush1.msra.mxu0 0.0
  %1494 = vmatprep.subr.mxu0 0.0
  %1495 = vmatpush1.msra.mxu0 0.0
  %1496 = vmatprep.subr.mxu0 0.0
  %1497 = vmatpush1.msra.mxu0 0.0
  %1498 = vmatprep.subr.mxu0 0.0
  %1499 = vmatpush1.msra.mxu0 0.0
  %1500 = vmatprep.subr.mxu0 0.0
  %1501 = vmatpush1.msra.mxu0 0.0
  %1502 = vmatprep.subr.mxu0 0.0
  %1503 = vmatpush1.msra.mxu0 0.0
  %1504 = vmatprep.mubr.f32.mxu0 0.0
  %1505 = vmatmul.mubr.f32.gmra.mrb[0].mxu0 %v1438
  %v1506 = vpop.f32.mrb[0].mxu0
  %v1507 = vadd.f32 0.0, %v1506
  %v1508 = vpop.f32.mrb[0].mxu0
  %1509 = vdwg.mxu0
  %v1510 = vadd.f32 %v918, %v996
  %v1511 = vadd.f32 %v919, %v1069
  %v1512 = vadd.f32 %v920, %v1142
  %v1513 = vadd.f32 %v921, %v1215
  %v1514 = vadd.f32 %v922, %v1288
  %v1515 = vadd.f32 %v923, %v1361
  %v1516 = vadd.f32 %v924, %v1434
  %v1517 = vadd.f32 %v925, %v1507
  %1518 = vst.msk [vmem:[#allocation4] sm:$0xff] %vm76, %v1510
  %1519 = vst.msk [vmem:[#allocation4 + $0x8] sm:$0xff] %vm76, %v1511
  %1520 = vst.msk [vmem:[#allocation4 + $0x10] sm:$0xff] %vm76, %v1512
  %1521 = vst.msk [vmem:[#allocation4 + $0x18] sm:$0xff] %vm76, %v1513
  %1522 = vst.msk [vmem:[#allocation4 + $0x20] sm:$0xff] %vm76, %v1514
  %1523 = vst.msk [vmem:[#allocation4 + $0x28] sm:$0xff] %vm76, %v1515
  %1524 = vst.msk [vmem:[#allocation4 + $0x30] sm:$0xff] %vm76, %v1516
  %1525 = vst.msk [vmem:[#allocation4 + $0x38] sm:$0xff] %vm76, %v1517
  %1526 = vst.msk [vmem:[#allocation2] sm:$0xff] %vm861, %v717
  %1527 = vst.msk [vmem:[#allocation2 + $0x8] sm:$0xff] %vm861, %v718
  %1528 = vst.msk [vmem:[#allocation2 + $0x10] sm:$0xff] %vm861, %v719
  %1529 = vst.msk [vmem:[#allocation2 + $0x18] sm:$0xff] %vm861, %v720
  %1530 = vst.msk [vmem:[#allocation2 + $0x20] sm:$0xff] %vm861, %v721
  %1531 = vst.msk [vmem:[#allocation2 + $0x28] sm:$0xff] %vm861, %v722
  %1532 = vst.msk [vmem:[#allocation2 + $0x30] sm:$0xff] %vm861, %v723
  %1533 = vst.msk [vmem:[#allocation2 + $0x38] sm:$0xff] %vm861, %v724
  // Predicated region
  $region18: #{sparse_transformer_forward.36} parent=0 // pred_check
    %p1534 = pneg %p14
  $region19: #{sparse_transformer_forward.36} parent=0 // pred_check_branch
    %1536 = sbr.rel (%p1534) target = $region21
  $region20: #{sparse_transformer_forward.36} parent=0 // pred_region
    %v1537 = vld [vmem:[#allocation3] sm:$0xff]
    %v1538 = vld [vmem:[#allocation3 + $0x8] sm:$0xff]
    %v1539 = vld [vmem:[#allocation3 + $0x10] sm:$0xff]
    %v1540 = vld [vmem:[#allocation3 + $0x18] sm:$0xff]
    %v1541 = vld [vmem:[#allocation3 + $0x20] sm:$0xff]
    %v1542 = vld [vmem:[#allocation3 + $0x28] sm:$0xff]
    %v1543 = vld [vmem:[#allocation3 + $0x30] sm:$0xff]
    %v1544 = vld [vmem:[#allocation3 + $0x38] sm:$0xff]
    %v1545 = vrcp.pop %v1537
    %v1546 = vrcp.pop %v1538
    %v1547 = vrcp.pop %v1539
    %v1548 = vrcp.pop %v1540
    %v1549 = vrcp.pop %v1541
    %v1550 = vrcp.pop %v1542
    %v1551 = vrcp.pop %v1543
    %v1552 = vrcp.pop %v1544
    %v1553 = vld [vmem:[#allocation4] sm:$0xff]
    %v1554 = vld [vmem:[#allocation4 + $0x8] sm:$0xff]
    %v1555 = vld [vmem:[#allocation4 + $0x10] sm:$0xff]
    %v1556 = vld [vmem:[#allocation4 + $0x18] sm:$0xff]
    %v1557 = vld [vmem:[#allocation4 + $0x20] sm:$0xff]
    %v1558 = vld [vmem:[#allocation4 + $0x28] sm:$0xff]
    %v1559 = vld [vmem:[#allocation4 + $0x30] sm:$0xff]
    %v1560 = vld [vmem:[#allocation4 + $0x38] sm:$0xff]
    %1562 = vset.pattern.permute.xlu0 0
    %1563 = vperm.xlu0 %1562, %v1545
    %v1564 = vpop.permute.xlu0 %1563
    %1567 = vset.pattern.permute.xlu0 0
    %1568 = vperm.xlu0 %1567, %v1546
    %v1569 = vpop.permute.xlu0 %1568
    %1572 = vset.pattern.permute.xlu0 0
    %1573 = vperm.xlu0 %1572, %v1547
    %v1574 = vpop.permute.xlu0 %1573
    %1577 = vset.pattern.permute.xlu0 0
    %1578 = vperm.xlu0 %1577, %v1548
    %v1579 = vpop.permute.xlu0 %1578
    %1582 = vset.pattern.permute.xlu0 0
    %1583 = vperm.xlu0 %1582, %v1549
    %v1584 = vpop.permute.xlu0 %1583
    %1587 = vset.pattern.permute.xlu0 0
    %1588 = vperm.xlu0 %1587, %v1550
    %v1589 = vpop.permute.xlu0 %1588
    %1592 = vset.pattern.permute.xlu0 0
    %1593 = vperm.xlu0 %1592, %v1551
    %v1594 = vpop.permute.xlu0 %1593
    %1597 = vset.pattern.permute.xlu0 0
    %1598 = vperm.xlu0 %1597, %v1552
    %v1599 = vpop.permute.xlu0 %1598
    %v1601 = vmul.f32 %v1553, %v1564
    %v1602 = vmul.f32 %v1554, %v1569
    %v1603 = vmul.f32 %v1555, %v1574
    %v1604 = vmul.f32 %v1556, %v1579
    %v1605 = vmul.f32 %v1557, %v1584
    %v1606 = vmul.f32 %v1558, %v1589
    %v1607 = vmul.f32 %v1559, %v1594
    %v1608 = vmul.f32 %v1560, %v1599
    %1609 = vst.msk [vmem:[%s3] sm:$0xff] %vm76, %v1601
    %1610 = vst.msk [vmem:[%s3 + $0x8] sm:$0xff] %vm76, %v1602
    %1611 = vst.msk [vmem:[%s3 + $0x10] sm:$0xff] %vm76, %v1603
    %1612 = vst.msk [vmem:[%s3 + $0x18] sm:$0xff] %vm76, %v1604
    %1613 = vst.msk [vmem:[%s3 + $0x20] sm:$0xff] %vm76, %v1605
    %1614 = vst.msk [vmem:[%s3 + $0x28] sm:$0xff] %vm76, %v1606
    %1615 = vst.msk [vmem:[%s3 + $0x30] sm:$0xff] %vm76, %v1607
    %1616 = vst.msk [vmem:[%s3 + $0x38] sm:$0xff] %vm76, %v1608
  $region21: #{sparse_transformer_forward.36} parent=0 // pred_fallthru
    _
  // Predicated region
  $region22: #{sparse_transformer_forward.36} parent=0 // pred_check
    _
  $region23: #{sparse_transformer_forward.36} parent=0 // pred_check_branch
    %1618 = sbr.rel (0) target = $region25
  $region24: #{sparse_transformer_forward.36} parent=0 // pred_region
    _
  $region25: #{sparse_transformer_forward.36} parent=0 // pred_fallthru
    _
  // Predicated region
  $region26: #{sparse_transformer_forward.36} parent=0 // pred_check
    _
  $region27: #{sparse_transformer_forward.36} parent=0 // pred_check_branch
    %1620 = sbr.rel (0) target = $region29
  $region28: #{sparse_transformer_forward.36} parent=0 // pred_region
    _
  $region29: #{sparse_transformer_forward.36} parent=0 // pred_fallthru
    _

// kernel: sparse_transformer_forward.69
$region0: #{sparse_transformer_forward.69}
  #allocation0 [shape = 'u32[]', space=smem, size = 0x4, offset = 0x4, fixed_abs, tag = 'smem constant byte address 0x4 - core index']
  #allocation1 [shape = 'u32[144,128]{1,0:T(1,128)}', space=vmem, size = 0x12000, scoped, tag = 'internal scratch']
  #allocation2 [shape = 'f32[16,32]{1,0:T(8,128)}', space=vmem, size = 0x2000, scoped, tag = 'scratch operand']
  %s0 = inlined_call_operand.vmem [shape: f32[16,32], index: 0, kind: input, shape index: {}]
  %s1 = inlined_call_operand.vmem [shape: f32[32,32], index: 1, kind: input, shape index: {}]
  %s2 = inlined_call_operand.vmem [shape: f32[1,32], index: 2, kind: input, shape index: {}]
  %s3 = inlined_call_operand.vmem [shape: f32[32,32], index: 3, kind: input, shape index: {}]
  %s4 = inlined_call_operand.vmem [shape: f32[1,32], index: 4, kind: input, shape index: {}]
  %s5 = inlined_call_operand.hbm [shape: f32[16,32], index: 5, kind: output, shape index: {}]
  %s6 = sld [smem:[#allocation0]]
  $region30: #{sparse_transformer_forward.69} parent=0
    _
  %s8 = ssub.s32 1, %s6
  %s9 = scalar_select 0, %s8, %s6
  $region1: #{sparse_transformer_forward.69} parent=0
    #allocation3 [shape = 'u8[8192]{0}', space=vmem, size = 0x2000, scoped, tag = 'output window, operand 0, single buffered']
    #allocation4 [shape = 's32[1]{0}', space=sflag, size = 0x4, scoped, tag = 'scoped memory for sparse_transformer_forward.69']
    %10 = vsyncpa [#allocation4], 0
    // Predicated region
    $region2: #{sparse_transformer_forward.69} parent=1 // pred_check
      _
    $region3: #{sparse_transformer_forward.69} parent=1 // pred_check_branch
      %12 = sbr.rel (0) target = $region5
    $region4: #{sparse_transformer_forward.69} parent=1 // pred_region
      _
    $region5: #{sparse_transformer_forward.69} parent=1 // pred_fallthru
      _
    // Predicated region
    $region6: #{sparse_transformer_forward.69} parent=1 // pred_check
      _
    $region7: #{sparse_transformer_forward.69} parent=1 // pred_check_branch
      %14 = sbr.rel (0) target = $region9
    $region8: #{sparse_transformer_forward.69} parent=1 // pred_region
      _
    $region9: #{sparse_transformer_forward.69} parent=1 // pred_fallthru
      _
    // Predicated region
    $region10: #{sparse_transformer_forward.69} parent=1 // pred_check
      _
    $region11: #{sparse_transformer_forward.69} parent=1 // pred_check_branch
      %16 = sbr.rel (0) target = $region13
    $region12: #{sparse_transformer_forward.69} parent=1 // pred_region
      _
    $region13: #{sparse_transformer_forward.69} parent=1 // pred_fallthru
      _
    // Predicated region
    $region14: #{sparse_transformer_forward.69} parent=1 // pred_check
      _
    $region15: #{sparse_transformer_forward.69} parent=1 // pred_check_branch
      %18 = sbr.rel (0) target = $region17
    $region16: #{sparse_transformer_forward.69} parent=1 // pred_region
      _
    $region17: #{sparse_transformer_forward.69} parent=1 // pred_fallthru
      _
    // Predicated region
    $region18: #{sparse_transformer_forward.69} parent=1 // pred_check
      _
    $region19: #{sparse_transformer_forward.69} parent=1 // pred_check_branch
      %20 = sbr.rel (0) target = $region21
    $region20: #{sparse_transformer_forward.69} parent=1 // pred_region
      _
    $region21: #{sparse_transformer_forward.69} parent=1 // pred_fallthru
      _
    %v21 = vld [vmem:[%s0] sm:$0xff]
    %v22 = vld [vmem:[%s0 + $0x8] sm:$0xff]
    %v23 = vld [vmem:[%s1] sm:$0xff]
    %v24 = vld [vmem:[%s1 + $0x8] sm:$0xff]
    %v25 = vld [vmem:[%s1 + $0x10] sm:$0xff]
    %v26 = vld [vmem:[%s1 + $0x18] sm:$0xff]
    %v27 = vld [vmem:[%s2] sm:$0x1]
    %v29 = vlaneseq
    %v30 = vshrl.u32 %v29, 7
    %v31 = vsub.s32 0, %v30
    %v32 = vrot.slane %v27, %v31
    %vm34 = vcmask 261120
    %v36 = vsel %vm34, %v21, 0
    %v39 = vsel %vm34, %v22, 0
    %41 = vmatprep.subr.mxu0 0.0
    %42 = vmatpush1.msra.mxu0 %v23
    %43 = vmatprep.subr.mxu0 0.0
    %44 = vmatpush1.msra.mxu0 %v24
    %45 = vmatprep.subr.mxu0 0.0
    %46 = vmatpush1.msra.mxu0 %v25
    %47 = vmatprep.subr.mxu0 0.0
    %48 = vmatpush1.msra.mxu0 %v26
    %49 = vmatprep.subr.mxu0 0.0
    %50 = vmatpush1.msra.mxu0 0.0
    %51 = vmatprep.subr.mxu0 0.0
    %52 = vmatpush1.msra.mxu0 0.0
    %53 = vmatprep.subr.mxu0 0.0
    %54 = vmatpush1.msra.mxu0 0.0
    %55 = vmatprep.subr.mxu0 0.0
    %56 = vmatpush1.msra.mxu0 0.0
    %57 = vmatprep.subr.mxu0 0.0
    %58 = vmatpush1.msra.mxu0 0.0
    %59 = vmatprep.subr.mxu0 0.0
    %60 = vmatpush1.msra.mxu0 0.0
    %61 = vmatprep.subr.mxu0 0.0
    %62 = vmatpush1.msra.mxu0 0.0
    %63 = vmatprep.subr.mxu0 0.0
    %64 = vmatpush1.msra.mxu0 0.0
    %65 = vmatprep.subr.mxu0 0.0
    %66 = vmatpush1.msra.mxu0 0.0
    %67 = vmatprep.subr.mxu0 0.0
    %68 = vmatpush1.msra.mxu0 0.0
    %69 = vmatprep.subr.mxu0 0.0
    %70 = vmatpush1.msra.mxu0 0.0
    %71 = vmatprep.subr.mxu0 0.0
    %72 = vmatpush1.msra.mxu0 0.0
    %73 = vmatprep.subr.mxu0 0.0
    %74 = vmatpush1.msra.mxu0 0.0
    %75 = vmatprep.subr.mxu0 0.0
    %76 = vmatpush1.msra.mxu0 0.0
    %77 = vmatprep.subr.mxu0 0.0
    %78 = vmatpush1.msra.mxu0 0.0
    %79 = vmatprep.subr.mxu0 0.0
    %80 = vmatpush1.msra.mxu0 0.0
    %81 = vmatprep.subr.mxu0 0.0
    %82 = vmatpush1.msra.mxu0 0.0
    %83 = vmatprep.subr.mxu0 0.0
    %84 = vmatpush1.msra.mxu0 0.0
    %85 = vmatprep.subr.mxu0 0.0
    %86 = vmatpush1.msra.mxu0 0.0
    %87 = vmatprep.subr.mxu0 0.0
    %88 = vmatpush1.msra.mxu0 0.0
    %89 = vmatprep.subr.mxu0 0.0
    %90 = vmatpush1.msra.mxu0 0.0
    %91 = vmatprep.subr.mxu0 0.0
    %92 = vmatpush1.msra.mxu0 0.0
    %93 = vmatprep.subr.mxu0 0.0
    %94 = vmatpush1.msra.mxu0 0.0
    %95 = vmatprep.subr.mxu0 0.0
    %96 = vmatpush1.msra.mxu0 0.0
    %97 = vmatprep.subr.mxu0 0.0
    %98 = vmatpush1.msra.mxu0 0.0
    %99 = vmatprep.subr.mxu0 0.0
    %100 = vmatpush1.msra.mxu0 0.0
    %101 = vmatprep.subr.mxu0 0.0
    %102 = vmatpush1.msra.mxu0 0.0
    %103 = vmatprep.subr.mxu0 0.0
    %104 = vmatpush1.msra.mxu0 0.0
    %105 = vmatprep.mubr.f32.mxu0 0.0
    %106 = vmatmul.mubr.f32.gmra.mrb[0].mxu0 %v36
    %v107 = vpop.f32.mrb[0].mxu0
    %v108 = vadd.f32 %v32, %v107
    %v109 = vpop.f32.mrb[0].mxu0
    %110 = vmatprep.mubr.f32.mxu0 0.0
    %111 = vmatmul.mubr.f32.gmra.mrb[0].mxu0 %v39
    %v112 = vpop.f32.mrb[0].mxu0
    %v113 = vadd.f32 %v32, %v112
    %v114 = vpop.f32.mrb[0].mxu0
    %115 = vdwg.mxu0
    %v116 = vmax.f32 %v108, 0.0
    %v117 = vmax.f32 %v113, 0.0
    %118 = vst.msk [vmem:[#allocation2] sm:$0xff] %vm34, %v116
    %119 = vst.msk [vmem:[#allocation2 + $0x8] sm:$0xff] %vm34, %v117
    %v120 = vld [vmem:[#allocation2] sm:$0xff]
    %v121 = vld [vmem:[#allocation2 + $0x8] sm:$0xff]
    %v122 = vld [vmem:[%s3] sm:$0xff]
    %v123 = vld [vmem:[%s3 + $0x8] sm:$0xff]
    %v124 = vld [vmem:[%s3 + $0x10] sm:$0xff]
    %v125 = vld [vmem:[%s3 + $0x18] sm:$0xff]
    %v126 = vld [vmem:[%s4] sm:$0x1]
    %v128 = vlaneseq
    %v129 = vshrl.u32 %v128, 7
    %v130 = vsub.s32 0, %v129
    %v131 = vrot.slane %v126, %v130
    %v134 = vsel %vm34, %v120, 0
    %v137 = vsel %vm34, %v121, 0
    %139 = vmatprep.subr.mxu0 0.0
    %140 = vmatpush1.msra.mxu0 %v122
    %141 = vmatprep.subr.mxu0 0.0
    %142 = vmatpush1.msra.mxu0 %v123
    %143 = vmatprep.subr.mxu0 0.0
    %144 = vmatpush1.msra.mxu0 %v124
    %145 = vmatprep.subr.mxu0 0.0
    %146 = vmatpush1.msra.mxu0 %v125
    %147 = vmatprep.subr.mxu0 0.0
    %148 = vmatpush1.msra.mxu0 0.0
    %149 = vmatprep.subr.mxu0 0.0
    %150 = vmatpush1.msra.mxu0 0.0
    %151 = vmatprep.subr.mxu0 0.0
    %152 = vmatpush1.msra.mxu0 0.0
    %153 = vmatprep.subr.mxu0 0.0
    %154 = vmatpush1.msra.mxu0 0.0
    %155 = vmatprep.subr.mxu0 0.0
    %156 = vmatpush1.msra.mxu0 0.0
    %157 = vmatprep.subr.mxu0 0.0
    %158 = vmatpush1.msra.mxu0 0.0
    %159 = vmatprep.subr.mxu0 0.0
    %160 = vmatpush1.msra.mxu0 0.0
    %161 = vmatprep.subr.mxu0 0.0
    %162 = vmatpush1.msra.mxu0 0.0
    %163 = vmatprep.subr.mxu0 0.0
    %164 = vmatpush1.msra.mxu0 0.0
    %165 = vmatprep.subr.mxu0 0.0
    %166 = vmatpush1.msra.mxu0 0.0
    %167 = vmatprep.subr.mxu0 0.0
    %168 = vmatpush1.msra.mxu0 0.0
    %169 = vmatprep.subr.mxu0 0.0
    %170 = vmatpush1.msra.mxu0 0.0
    %171 = vmatprep.subr.mxu0 0.0
    %172 = vmatpush1.msra.mxu0 0.0
    %173 = vmatprep.subr.mxu0 0.0
    %174 = vmatpush1.msra.mxu0 0.0
    %175 = vmatprep.subr.mxu0 0.0
    %176 = vmatpush1.msra.mxu0 0.0
    %177 = vmatprep.subr.mxu0 0.0
    %178 = vmatpush1.msra.mxu0 0.0
    %179 = vmatprep.subr.mxu0 0.0
    %180 = vmatpush1.msra.mxu0 0.0
    %181 = vmatprep.subr.mxu0 0.0
    %182 = vmatpush1.msra.mxu0 0.0
    %183 = vmatprep.subr.mxu0 0.0
    %184 = vmatpush1.msra.mxu0 0.0
    %185 = vmatprep.subr.mxu0 0.0
    %186 = vmatpush1.msra.mxu0 0.0
    %187 = vmatprep.subr.mxu0 0.0
    %188 = vmatpush1.msra.mxu0 0.0
    %189 = vmatprep.subr.mxu0 0.0
    %190 = vmatpush1.msra.mxu0 0.0
    %191 = vmatprep.subr.mxu0 0.0
    %192 = vmatpush1.msra.mxu0 0.0
    %193 = vmatprep.subr.mxu0 0.0
    %194 = vmatpush1.msra.mxu0 0.0
    %195 = vmatprep.subr.mxu0 0.0
    %196 = vmatpush1.msra.mxu0 0.0
    %197 = vmatprep.subr.mxu0 0.0
    %198 = vmatpush1.msra.mxu0 0.0
    %199 = vmatprep.subr.mxu0 0.0
    %200 = vmatpush1.msra.mxu0 0.0
    %201 = vmatprep.subr.mxu0 0.0
    %202 = vmatpush1.msra.mxu0 0.0
    %203 = vmatprep.mubr.f32.mxu0 0.0
    %204 = vmatmul.mubr.f32.gmra.mrb[0].mxu0 %v134
    %v205 = vpop.f32.mrb[0].mxu0
    %v206 = vadd.f32 %v131, %v205
    %v207 = vpop.f32.mrb[0].mxu0
    %208 = vmatprep.mubr.f32.mxu0 0.0
    %209 = vmatmul.mubr.f32.gmra.mrb[0].mxu0 %v137
    %v210 = vpop.f32.mrb[0].mxu0
    %v211 = vadd.f32 %v131, %v210
    %v212 = vpop.f32.mrb[0].mxu0
    %213 = vdwg.mxu0
    %214 = vst.msk [vmem:[#allocation3] sm:$0xff] %vm34, %v206
    %215 = vst.msk [vmem:[#allocation3 + $0x8] sm:$0xff] %vm34, %v211
    // Predicated region
    $region22: #{sparse_transformer_forward.69} parent=1 // pred_check
      _
    $region23: #{sparse_transformer_forward.69} parent=1 // pred_check_branch
      %217 = sbr.rel (0) target = $region25
    $region24: #{sparse_transformer_forward.69} parent=1 // pred_region
      %s219 = ssub.s32 256, 256
      %220 = vsyncadd [#allocation4], %s219
      %s221 = sshll.u32 [#allocation3], 4
      %s222 = int_to_ptr.vmem [resolvable:$true] %s221
      %227 = dma.vmem_to_hbm [thread:$0]  %s222, 256, %s5, [#allocation4], 128, 128, 8
    $region25: #{sparse_transformer_forward.69} parent=1 // pred_fallthru
      _
    // Predicated region
    $region26: #{sparse_transformer_forward.69} parent=1 // pred_check
      _
    $region27: #{sparse_transformer_forward.69} parent=1 // pred_check_branch
      %229 = sbr.rel (0) target = $region29
    $region28: #{sparse_transformer_forward.69} parent=1 // pred_region
      %230 = dma.done [#allocation4], 256
    $region29: #{sparse_transformer_forward.69} parent=1 // pred_fallthru
      _
    %231 = vsyncpa [#allocation4], 1

</llo_original>
